<compile_context>
chip_gen: v6e
topology: v6e:2x2x1
jax: 0.10.0
libtpu: 0.0.40
codegen_flags: <defaults>
</compile_context>

<pallas_src>
import functools
import math

import jax
import jax.numpy as jnp
from jax import lax
from jax.experimental import pallas as pl
from jax.experimental.pallas import tpu as pltpu


# contract last dims of both operands: q @ k^T without materializing the transpose
_TRANS_B = (((1,), (1,)), ((), ()))


# ----------------------------------------------------------------------------
# In-kernel helpers (operate on values already loaded into vregs)
# ----------------------------------------------------------------------------
def _layernorm(x, ab):
    """x: (S, D) f32; ab: (2, D) packed [alpha; bias]. Unbiased std, eps=1e-6."""
    d = x.shape[-1]
    mean = jnp.mean(x, axis=-1, keepdims=True)
    diff = x - mean
    var = jnp.sum(diff * diff, axis=-1, keepdims=True) * (1.0 / (d - 1))
    inv = pl.reciprocal(jnp.sqrt(var) + 1e-6)        # one reciprocal, then multiply
    return ab[0:1, :] * (diff * inv) + ab[1:2, :]


def _mha(q, k, v, mask, wo, bo, n_heads):
    """q: (Sq, D), k/v: (Sk, D), mask: (Sq, Sk) (1=attend, 0=masked),
    wo: (D, D), bo: (1, D).  Returns (Sq, D) = concat_heads(attn) @ Wo + bo."""
    _, d = q.shape
    dh = d // n_heads
    scale = 1.0 / math.sqrt(dh)
    acc = None
    for h in range(n_heads):                                 # unrolled, H is small
        sl = slice(h * dh, (h + 1) * dh)
        qh, kh, vh = q[:, sl], k[:, sl], v[:, sl]
        s = lax.dot_general(qh, kh, _TRANS_B,
                            preferred_element_type=jnp.float32) * scale
        s = jnp.where(mask == 0.0, -1e9, s)
        s = s - jnp.max(s, axis=-1, keepdims=True)
        p = jnp.exp(s)
        p = p * pl.reciprocal(jnp.sum(p, axis=-1, keepdims=True), approx=True)
        oh = jnp.dot(p, vh, preferred_element_type=jnp.float32)        # (Sq, dh)
        # fold concat + output projection:  sum_h  oh @ Wo[h*dh:(h+1)*dh, :]
        ch = jnp.dot(oh, wo[sl, :], preferred_element_type=jnp.float32)  # (Sq, D)
        acc = ch if acc is None else acc + ch
    return acc + bo


# ----------------------------------------------------------------------------
# Fused decoder-block kernel (one grid step per batch element)
# ----------------------------------------------------------------------------
def _decoder_block_kernel(
    x_ref, enc_ref, mself_ref, mcross_ref,
    ln1_ref, wqkv1_ref, bqkv1_ref, wo1_ref, bo1_ref,
    ln2_ref, wq2_ref, bq2_ref, wkv2_ref, bkv2_ref, wo2_ref, bo2_ref,
    ln3_ref, w1_ref, b1_ref, w2_ref, b2_ref,
    o_ref, *, n_heads):
    d = x_ref.shape[-1]

    x = x_ref[0].astype(jnp.float32)          # (Sq, D)
    enc = enc_ref[0].astype(jnp.float32)      # (Sk, D)
    m_self = mself_ref[0]                     # (Sq, Sq)
    m_cross = mcross_ref[0]                   # (Sq, Sk)

    # ---- residual 1: masked self-attention (pre-norm), fused QKV matmul ----
    h = _layernorm(x, ln1_ref[...])
    qkv = jnp.dot(h, wqkv1_ref[...], preferred_element_type=jnp.float32) + bqkv1_ref[...]
    q, k, v = qkv[:, 0:d], qkv[:, d:2 * d], qkv[:, 2 * d:3 * d]
    x = x + _mha(q, k, v, m_self, wo1_ref[...], bo1_ref[...], n_heads)

    # ---- residual 2: cross-attention over (un-normalized) encoder output ----
    h = _layernorm(x, ln2_ref[...])
    q = jnp.dot(h, wq2_ref[...], preferred_element_type=jnp.float32) + bq2_ref[...]
    kv = jnp.dot(enc, wkv2_ref[...], preferred_element_type=jnp.float32) + bkv2_ref[...]
    k, v = kv[:, 0:d], kv[:, d:2 * d]
    x = x + _mha(q, k, v, m_cross, wo2_ref[...], bo2_ref[...], n_heads)

    # ---- residual 3: feed-forward ----
    h = _layernorm(x, ln3_ref[...])
    a = jnp.maximum(
        jnp.dot(h, w1_ref[...], preferred_element_type=jnp.float32) + b1_ref[...], 0.0)
    f = jnp.dot(a, w2_ref[...], preferred_element_type=jnp.float32) + b2_ref[...]
    x = x + f

    o_ref[0] = x.astype(o_ref.dtype)


# ----------------------------------------------------------------------------
# Wrapper: mask normalization + pallas_call with per-batch grid
# ----------------------------------------------------------------------------
def _prep_mask(mask, b, sq, sk):
    """Accepts the usual broadcastable 4-D mask (head-independent) and returns (B, Sq, Sk) f32."""
    m = jnp.asarray(mask, jnp.float32)
    while m.ndim < 4:
        m = m[None]
    m = jnp.broadcast_to(m, (b, 1, sq, sk))
    return m.reshape(b, sq, sk)


def _bcast_spec(shape):
    nd = len(shape)
    return pl.BlockSpec(shape, lambda b, _nd=nd: (0,) * _nd)


def decoder_block(x, encoder_out, src_mask, tgt_mask, params, n_heads):
    B, Sq, D = x.shape
    Sk = encoder_out.shape[1]
    Dff = params["w1"].shape[1]

    m_self = _prep_mask(tgt_mask, B, Sq, Sq)
    m_cross = _prep_mask(src_mask, B, Sq, Sk)

    in_specs = [
        pl.BlockSpec((1, Sq, D), lambda b: (b, 0, 0)),      # x
        pl.BlockSpec((1, Sk, D), lambda b: (b, 0, 0)),      # encoder_out
        pl.BlockSpec((1, Sq, Sq), lambda b: (b, 0, 0)),     # self-attn mask
        pl.BlockSpec((1, Sq, Sk), lambda b: (b, 0, 0)),     # cross-attn mask
        _bcast_spec((2, D)),                                # ln1 [alpha;bias]
        _bcast_spec((D, 3 * D)), _bcast_spec((1, 3 * D)),   # wqkv1, bqkv1
        _bcast_spec((D, D)), _bcast_spec((1, D)),           # wo1, bo1
        _bcast_spec((2, D)),                                # ln2
        _bcast_spec((D, D)), _bcast_spec((1, D)),           # wq2, bq2
        _bcast_spec((D, 2 * D)), _bcast_spec((1, 2 * D)),   # wkv2, bkv2
        _bcast_spec((D, D)), _bcast_spec((1, D)),           # wo2, bo2
        _bcast_spec((2, D)),                                # ln3
        _bcast_spec((D, Dff)), _bcast_spec((1, Dff)),       # w1, b1
        _bcast_spec((Dff, D)), _bcast_spec((1, D)),         # w2, b2
    ]

    p = params
    return pl.pallas_call(
        functools.partial(_decoder_block_kernel, n_heads=n_heads),
        out_shape=jax.ShapeDtypeStruct((B, Sq, D), x.dtype),
        grid=(B,),
        in_specs=in_specs,
        out_specs=pl.BlockSpec((1, Sq, D), lambda b: (b, 0, 0)),
        compiler_params=pltpu.CompilerParams(
            dimension_semantics=("parallel",)),
    )(x, encoder_out, m_self, m_cross,
      p["ln1"], p["wqkv1"], p["bqkv1"], p["wo1"], p["bo1"],
      p["ln2"], p["wq2"], p["bq2"], p["wkv2"], p["bkv2"], p["wo2"], p["bo2"],
      p["ln3"], p["w1"], p["b1"], p["w2"], p["b2"])


# ----------------------------------------------------------------------------
# Deterministic parameter construction (packed layout expected by the kernel)
# ----------------------------------------------------------------------------
def make_params(key, d_model, d_ff):
    ks = jax.random.split(key, 10)
    s = 0.02

    def rand(k, shape):
        return s * jax.random.normal(k, shape, jnp.float32)

    wq1, wk1, wv1, wo1 = (rand(ks[i], (d_model, d_model)) for i in range(4))
    wq2, wk2, wv2, wo2 = (rand(ks[i], (d_model, d_model)) for i in range(4, 8))
    w1 = rand(ks[8], (d_model, d_ff))
    w2 = rand(ks[9], (d_ff, d_model))

    ln = jnp.stack([jnp.ones((d_model,), jnp.float32),
                    jnp.zeros((d_model,), jnp.float32)], axis=0)        # (2, D)

    return {
        "ln1": ln, "ln2": ln, "ln3": ln,
        "wqkv1": jnp.concatenate([wq1, wk1, wv1], axis=1),              # (D, 3D)
        "bqkv1": jnp.zeros((1, 3 * d_model), jnp.float32),
        "wo1": wo1, "bo1": jnp.zeros((1, d_model), jnp.float32),
        "wq2": wq2, "bq2": jnp.zeros((1, d_model), jnp.float32),
        "wkv2": jnp.concatenate([wk2, wv2], axis=1),                    # (D, 2D)
        "bkv2": jnp.zeros((1, 2 * d_model), jnp.float32),
        "wo2": wo2, "bo2": jnp.zeros((1, d_model), jnp.float32),
        "w1": w1, "b1": jnp.zeros((1, d_ff), jnp.float32),
        "w2": w2, "b2": jnp.zeros((1, d_model), jnp.float32),
    }


# ----------------------------------------------------------------------------
# Driver
# ----------------------------------------------------------------------------
if __name__ == "__main__":
    B, S_TGT, S_SRC = 2, 8, 8
    D_MODEL, D_FF, N_HEADS = 32, 64, 4

    key = jax.random.PRNGKey(0)
    k_x, k_enc, k_par = jax.random.split(key, 3)

    x = jax.random.normal(k_x, (B, S_TGT, D_MODEL), jnp.float32)
    encoder_out = jax.random.normal(k_enc, (B, S_SRC, D_MODEL), jnp.float32)

    # masks follow the usual convention: 1 = attend, 0 = masked
    tgt_mask = jnp.tril(jnp.ones((S_TGT, S_TGT), jnp.float32))[None, None]  # (1,1,S,S)
    src_mask = jnp.ones((B, 1, 1, S_SRC), jnp.float32)                      # (B,1,1,Sk)

    params = make_params(k_par, D_MODEL, D_FF)

    fwd = jax.jit(functools.partial(decoder_block, n_heads=N_HEADS))
    out = fwd(x, encoder_out, src_mask, tgt_mask, params)
    out = jax.block_until_ready(out)

    assert out.shape == (B, S_TGT, D_MODEL)
    assert bool(jnp.all(jnp.isfinite(out)))
    print("KERNEL_OK")
</pallas_src>

<mosaic_0001>
module attributes {stable_mosaic.version = 11 : i64} {
  func.func @_decoder_block_kernel(%arg0: i32, %arg1: memref<1x8x32xf32, #tpu.memory_space<vmem>>, %arg2: memref<1x8x32xf32, #tpu.memory_space<vmem>>, %arg3: memref<1x8x8xf32, #tpu.memory_space<vmem>>, %arg4: memref<1x8x8xf32, #tpu.memory_space<vmem>>, %arg5: memref<2x32xf32, #tpu.memory_space<vmem>>, %arg6: memref<32x96xf32, #tpu.memory_space<vmem>>, %arg7: memref<1x96xf32, #tpu.memory_space<vmem>>, %arg8: memref<32x32xf32, #tpu.memory_space<vmem>>, %arg9: memref<1x32xf32, #tpu.memory_space<vmem>>, %arg10: memref<2x32xf32, #tpu.memory_space<vmem>>, %arg11: memref<32x32xf32, #tpu.memory_space<vmem>>, %arg12: memref<1x32xf32, #tpu.memory_space<vmem>>, %arg13: memref<32x64xf32, #tpu.memory_space<vmem>>, %arg14: memref<1x64xf32, #tpu.memory_space<vmem>>, %arg15: memref<32x32xf32, #tpu.memory_space<vmem>>, %arg16: memref<1x32xf32, #tpu.memory_space<vmem>>, %arg17: memref<2x32xf32, #tpu.memory_space<vmem>>, %arg18: memref<32x64xf32, #tpu.memory_space<vmem>>, %arg19: memref<1x64xf32, #tpu.memory_space<vmem>>, %arg20: memref<64x32xf32, #tpu.memory_space<vmem>>, %arg21: memref<1x32xf32, #tpu.memory_space<vmem>>, %arg22: memref<1x8x32xf32, #tpu.memory_space<vmem>>) attributes {dimension_semantics = [#tpu.dimension_semantics<parallel>], iteration_bounds = array<i64: 2>, scalar_prefetch = 0 : i64, scratch_operands = 0 : i64, tpu.core_type = #tpu.core_type<tc>, window_params = [{transform_indices = @transform_0, window_bounds = array<i64: 1, 8, 32>}, {transform_indices = @transform_1, window_bounds = array<i64: 1, 8, 32>}, {transform_indices = @transform_2, window_bounds = array<i64: 1, 8, 8>}, {transform_indices = @transform_3, window_bounds = array<i64: 1, 8, 8>}, {pipeline_mode = #tpu.pipeline_mode<synchronous>, transform_indices = @transform_4, window_bounds = array<i64: 2, 32>}, {pipeline_mode = #tpu.pipeline_mode<synchronous>, transform_indices = @transform_5, window_bounds = array<i64: 32, 96>}, {pipeline_mode = #tpu.pipeline_mode<synchronous>, transform_indices = @transform_6, window_bounds = array<i64: 1, 96>}, {pipeline_mode = #tpu.pipeline_mode<synchronous>, transform_indices = @transform_7, window_bounds = array<i64: 32, 32>}, {pipeline_mode = #tpu.pipeline_mode<synchronous>, transform_indices = @transform_8, window_bounds = array<i64: 1, 32>}, {pipeline_mode = #tpu.pipeline_mode<synchronous>, transform_indices = @transform_9, window_bounds = array<i64: 2, 32>}, {pipeline_mode = #tpu.pipeline_mode<synchronous>, transform_indices = @transform_10, window_bounds = array<i64: 32, 32>}, {pipeline_mode = #tpu.pipeline_mode<synchronous>, transform_indices = @transform_11, window_bounds = array<i64: 1, 32>}, {pipeline_mode = #tpu.pipeline_mode<synchronous>, transform_indices = @transform_12, window_bounds = array<i64: 32, 64>}, {pipeline_mode = #tpu.pipeline_mode<synchronous>, transform_indices = @transform_13, window_bounds = array<i64: 1, 64>}, {pipeline_mode = #tpu.pipeline_mode<synchronous>, transform_indices = @transform_14, window_bounds = array<i64: 32, 32>}, {pipeline_mode = #tpu.pipeline_mode<synchronous>, transform_indices = @transform_15, window_bounds = array<i64: 1, 32>}, {pipeline_mode = #tpu.pipeline_mode<synchronous>, transform_indices = @transform_16, window_bounds = array<i64: 2, 32>}, {pipeline_mode = #tpu.pipeline_mode<synchronous>, transform_indices = @transform_17, window_bounds = array<i64: 32, 64>}, {pipeline_mode = #tpu.pipeline_mode<synchronous>, transform_indices = @transform_18, window_bounds = array<i64: 1, 64>}, {pipeline_mode = #tpu.pipeline_mode<synchronous>, transform_indices = @transform_19, window_bounds = array<i64: 64, 32>}, {pipeline_mode = #tpu.pipeline_mode<synchronous>, transform_indices = @transform_20, window_bounds = array<i64: 1, 32>}, {transform_indices = @transform_21, window_bounds = array<i64: 1, 8, 32>}]} {
    %c0 = arith.constant 0 : index
    %c0_0 = arith.constant 0 : index
    %c0_1 = arith.constant 0 : index
    %0 = vector.load %arg1[%c0, %c0_0, %c0_1] : memref<1x8x32xf32, #tpu.memory_space<vmem>>, vector<1x8x32xf32>
    %1 = vector.shape_cast %0 : vector<1x8x32xf32> to vector<8x32xf32>
    %c0_2 = arith.constant 0 : index
    %c0_3 = arith.constant 0 : index
    %c0_4 = arith.constant 0 : index
    %2 = vector.load %arg2[%c0_2, %c0_3, %c0_4] : memref<1x8x32xf32, #tpu.memory_space<vmem>>, vector<1x8x32xf32>
    %3 = vector.shape_cast %2 : vector<1x8x32xf32> to vector<8x32xf32>
    %c0_5 = arith.constant 0 : index
    %c0_6 = arith.constant 0 : index
    %c0_7 = arith.constant 0 : index
    %4 = vector.load %arg3[%c0_5, %c0_6, %c0_7] : memref<1x8x8xf32, #tpu.memory_space<vmem>>, vector<1x8x8xf32>
    %5 = vector.shape_cast %4 : vector<1x8x8xf32> to vector<8x8xf32>
    %c0_8 = arith.constant 0 : index
    %c0_9 = arith.constant 0 : index
    %c0_10 = arith.constant 0 : index
    %6 = vector.load %arg4[%c0_8, %c0_9, %c0_10] : memref<1x8x8xf32, #tpu.memory_space<vmem>>, vector<1x8x8xf32>
    %7 = vector.shape_cast %6 : vector<1x8x8xf32> to vector<8x8xf32>
    %c0_11 = arith.constant 0 : index
    %c0_12 = arith.constant 0 : index
    %8 = vector.load %arg5[%c0_11, %c0_12] : memref<2x32xf32, #tpu.memory_space<vmem>>, vector<2x32xf32>
    %cst = arith.constant dense<0.000000e+00> : vector<8xf32>
    %9 = vector.multi_reduction <add>, %1, %cst [1] : vector<8x32xf32> to vector<8xf32>
    %10 = vector.shape_cast %9 : vector<8xf32> to vector<8x1xf32>
    %cst_13 = arith.constant 3.200000e+01 : f32
    %11 = vector.broadcast %cst_13 : f32 to vector<8x1xf32>
    %12 = arith.divf %10, %11 : vector<8x1xf32>
    %13 = vector.broadcast %12 : vector<8x1xf32> to vector<8x32xf32>
    %14 = arith.subf %1, %13 : vector<8x32xf32>
    %15 = arith.mulf %14, %14 : vector<8x32xf32>
    %cst_14 = arith.constant dense<0.000000e+00> : vector<8xf32>
    %16 = vector.multi_reduction <add>, %15, %cst_14 [1] : vector<8x32xf32> to vector<8xf32>
    %17 = vector.shape_cast %16 : vector<8xf32> to vector<8x1xf32>
    %cst_15 = arith.constant 0.0322580636 : f32
    %18 = vector.broadcast %cst_15 : f32 to vector<8x1xf32>
    %19 = arith.mulf %17, %18 : vector<8x1xf32>
    %20 = math.sqrt %19 : vector<8x1xf32>
    %cst_16 = arith.constant 9.99999997E-7 : f32
    %21 = vector.broadcast %cst_16 : f32 to vector<8x1xf32>
    %22 = arith.addf %20, %21 : vector<8x1xf32>
    %23 = tpu.reciprocal %22 : vector<8x1xf32> -> vector<8x1xf32>
    %24 = vector.extract_strided_slice %8 {offsets = [0, 0], sizes = [1, 32], strides = [1, 1]} : vector<2x32xf32> to vector<1x32xf32>
    %25 = vector.broadcast %23 : vector<8x1xf32> to vector<8x32xf32>
    %26 = arith.mulf %14, %25 : vector<8x32xf32>
    %27 = vector.broadcast %24 : vector<1x32xf32> to vector<8x32xf32>
    %28 = arith.mulf %27, %26 : vector<8x32xf32>
    %29 = vector.extract_strided_slice %8 {offsets = [1, 0], sizes = [1, 32], strides = [1, 1]} : vector<2x32xf32> to vector<1x32xf32>
    %30 = vector.broadcast %29 : vector<1x32xf32> to vector<8x32xf32>
    %31 = arith.addf %28, %30 : vector<8x32xf32>
    %c0_17 = arith.constant 0 : index
    %c0_18 = arith.constant 0 : index
    %32 = vector.load %arg6[%c0_17, %c0_18] : memref<32x96xf32, #tpu.memory_space<vmem>>, vector<32x96xf32>
    %cst_19 = arith.constant dense<0.000000e+00> : vector<8x96xf32>
    %33 = tpu.matmul %31, %32, %cst_19 {dimension_numbers = #tpu.dot_dimension_numbers<[1], [0], [0], [1], [0, 0, 1, 1], [], []>} : vector<8x32xf32>, vector<32x96xf32>, vector<8x96xf32> -> vector<8x96xf32>
    %c0_20 = arith.constant 0 : index
    %c0_21 = arith.constant 0 : index
    %34 = vector.load %arg7[%c0_20, %c0_21] : memref<1x96xf32, #tpu.memory_space<vmem>>, vector<1x96xf32>
    %35 = vector.broadcast %34 : vector<1x96xf32> to vector<8x96xf32>
    %36 = arith.addf %33, %35 : vector<8x96xf32>
    %37 = vector.extract_strided_slice %36 {offsets = [0, 0], sizes = [8, 32], strides = [1, 1]} : vector<8x96xf32> to vector<8x32xf32>
    %38 = vector.extract_strided_slice %36 {offsets = [0, 32], sizes = [8, 32], strides = [1, 1]} : vector<8x96xf32> to vector<8x32xf32>
    %39 = vector.extract_strided_slice %36 {offsets = [0, 64], sizes = [8, 32], strides = [1, 1]} : vector<8x96xf32> to vector<8x32xf32>
    %c0_22 = arith.constant 0 : index
    %c0_23 = arith.constant 0 : index
    %40 = vector.load %arg8[%c0_22, %c0_23] : memref<32x32xf32, #tpu.memory_space<vmem>>, vector<32x32xf32>
    %c0_24 = arith.constant 0 : index
    %c0_25 = arith.constant 0 : index
    %41 = vector.load %arg9[%c0_24, %c0_25] : memref<1x32xf32, #tpu.memory_space<vmem>>, vector<1x32xf32>
    %42 = vector.extract_strided_slice %37 {offsets = [0, 0], sizes = [8, 8], strides = [1, 1]} : vector<8x32xf32> to vector<8x8xf32>
    %43 = vector.extract_strided_slice %38 {offsets = [0, 0], sizes = [8, 8], strides = [1, 1]} : vector<8x32xf32> to vector<8x8xf32>
    %44 = vector.extract_strided_slice %39 {offsets = [0, 0], sizes = [8, 8], strides = [1, 1]} : vector<8x32xf32> to vector<8x8xf32>
    %cst_26 = arith.constant dense<0.000000e+00> : vector<8x8xf32>
    %45 = tpu.matmul %42, %43, %cst_26 {dimension_numbers = #tpu.dot_dimension_numbers<[1], [1], [0], [0], [0, 0, 1, 0], [], []>} : vector<8x8xf32>, vector<8x8xf32>, vector<8x8xf32> -> vector<8x8xf32>
    %cst_27 = arith.constant 0.353553385 : f32
    %46 = vector.broadcast %cst_27 : f32 to vector<8x8xf32>
    %47 = arith.mulf %45, %46 : vector<8x8xf32>
    %cst_28 = arith.constant 0.000000e+00 : f32
    %48 = vector.broadcast %cst_28 : f32 to vector<8x8xf32>
    %49 = arith.cmpf oeq, %5, %48 : vector<8x8xf32>
    %cst_29 = arith.constant -1.000000e+09 : f32
    %50 = vector.broadcast %cst_29 : f32 to vector<8x8xf32>
    %51 = arith.select %49, %50, %47 : vector<8x8xi1>, vector<8x8xf32>
    %cst_30 = arith.constant dense<0xFF800000> : vector<8xf32>
    %52 = vector.multi_reduction <maximumf>, %51, %cst_30 [1] : vector<8x8xf32> to vector<8xf32>
    %53 = vector.shape_cast %52 : vector<8xf32> to vector<8x1xf32>
    %54 = vector.broadcast %53 : vector<8x1xf32> to vector<8x8xf32>
    %55 = arith.subf %51, %54 : vector<8x8xf32>
    %56 = math.exp %55 : vector<8x8xf32>
    %cst_31 = arith.constant dense<0.000000e+00> : vector<8xf32>
    %57 = vector.multi_reduction <add>, %56, %cst_31 [1] : vector<8x8xf32> to vector<8xf32>
    %58 = vector.shape_cast %57 : vector<8xf32> to vector<8x1xf32>
    %59 = tpu.reciprocal %58 {approx = true} : vector<8x1xf32> -> vector<8x1xf32>
    %60 = vector.broadcast %59 : vector<8x1xf32> to vector<8x8xf32>
    %61 = arith.mulf %56, %60 : vector<8x8xf32>
    %cst_32 = arith.constant dense<0.000000e+00> : vector<8x8xf32>
    %62 = tpu.matmul %61, %44, %cst_32 {dimension_numbers = #tpu.dot_dimension_numbers<[1], [0], [0], [1], [0, 0, 1, 1], [], []>} : vector<8x8xf32>, vector<8x8xf32>, vector<8x8xf32> -> vector<8x8xf32>
    %63 = vector.extract_strided_slice %40 {offsets = [0, 0], sizes = [8, 32], strides = [1, 1]} : vector<32x32xf32> to vector<8x32xf32>
    %cst_33 = arith.constant dense<0.000000e+00> : vector<8x32xf32>
    %64 = tpu.matmul %62, %63, %cst_33 {dimension_numbers = #tpu.dot_dimension_numbers<[1], [0], [0], [1], [0, 0, 1, 1], [], []>} : vector<8x8xf32>, vector<8x32xf32>, vector<8x32xf32> -> vector<8x32xf32>
    %65 = vector.extract_strided_slice %37 {offsets = [0, 8], sizes = [8, 8], strides = [1, 1]} : vector<8x32xf32> to vector<8x8xf32>
    %66 = vector.extract_strided_slice %38 {offsets = [0, 8], sizes = [8, 8], strides = [1, 1]} : vector<8x32xf32> to vector<8x8xf32>
    %67 = vector.extract_strided_slice %39 {offsets = [0, 8], sizes = [8, 8], strides = [1, 1]} : vector<8x32xf32> to vector<8x8xf32>
    %cst_34 = arith.constant dense<0.000000e+00> : vector<8x8xf32>
    %68 = tpu.matmul %65, %66, %cst_34 {dimension_numbers = #tpu.dot_dimension_numbers<[1], [1], [0], [0], [0, 0, 1, 0], [], []>} : vector<8x8xf32>, vector<8x8xf32>, vector<8x8xf32> -> vector<8x8xf32>
    %cst_35 = arith.constant 0.353553385 : f32
    %69 = vector.broadcast %cst_35 : f32 to vector<8x8xf32>
    %70 = arith.mulf %68, %69 : vector<8x8xf32>
    %cst_36 = arith.constant 0.000000e+00 : f32
    %71 = vector.broadcast %cst_36 : f32 to vector<8x8xf32>
    %72 = arith.cmpf oeq, %5, %71 : vector<8x8xf32>
    %cst_37 = arith.constant -1.000000e+09 : f32
    %73 = vector.broadcast %cst_37 : f32 to vector<8x8xf32>
    %74 = arith.select %72, %73, %70 : vector<8x8xi1>, vector<8x8xf32>
    %cst_38 = arith.constant dense<0xFF800000> : vector<8xf32>
    %75 = vector.multi_reduction <maximumf>, %74, %cst_38 [1] : vector<8x8xf32> to vector<8xf32>
    %76 = vector.shape_cast %75 : vector<8xf32> to vector<8x1xf32>
    %77 = vector.broadcast %76 : vector<8x1xf32> to vector<8x8xf32>
    %78 = arith.subf %74, %77 : vector<8x8xf32>
    %79 = math.exp %78 : vector<8x8xf32>
    %cst_39 = arith.constant dense<0.000000e+00> : vector<8xf32>
    %80 = vector.multi_reduction <add>, %79, %cst_39 [1] : vector<8x8xf32> to vector<8xf32>
    %81 = vector.shape_cast %80 : vector<8xf32> to vector<8x1xf32>
    %82 = tpu.reciprocal %81 {approx = true} : vector<8x1xf32> -> vector<8x1xf32>
    %83 = vector.broadcast %82 : vector<8x1xf32> to vector<8x8xf32>
    %84 = arith.mulf %79, %83 : vector<8x8xf32>
    %cst_40 = arith.constant dense<0.000000e+00> : vector<8x8xf32>
    %85 = tpu.matmul %84, %67, %cst_40 {dimension_numbers = #tpu.dot_dimension_numbers<[1], [0], [0], [1], [0, 0, 1, 1], [], []>} : vector<8x8xf32>, vector<8x8xf32>, vector<8x8xf32> -> vector<8x8xf32>
    %86 = vector.extract_strided_slice %40 {offsets = [8, 0], sizes = [8, 32], strides = [1, 1]} : vector<32x32xf32> to vector<8x32xf32>
    %cst_41 = arith.constant dense<0.000000e+00> : vector<8x32xf32>
    %87 = tpu.matmul %85, %86, %cst_41 {dimension_numbers = #tpu.dot_dimension_numbers<[1], [0], [0], [1], [0, 0, 1, 1], [], []>} : vector<8x8xf32>, vector<8x32xf32>, vector<8x32xf32> -> vector<8x32xf32>
    %88 = arith.addf %64, %87 : vector<8x32xf32>
    %89 = vector.extract_strided_slice %37 {offsets = [0, 16], sizes = [8, 8], strides = [1, 1]} : vector<8x32xf32> to vector<8x8xf32>
    %90 = vector.extract_strided_slice %38 {offsets = [0, 16], sizes = [8, 8], strides = [1, 1]} : vector<8x32xf32> to vector<8x8xf32>
    %91 = vector.extract_strided_slice %39 {offsets = [0, 16], sizes = [8, 8], strides = [1, 1]} : vector<8x32xf32> to vector<8x8xf32>
    %cst_42 = arith.constant dense<0.000000e+00> : vector<8x8xf32>
    %92 = tpu.matmul %89, %90, %cst_42 {dimension_numbers = #tpu.dot_dimension_numbers<[1], [1], [0], [0], [0, 0, 1, 0], [], []>} : vector<8x8xf32>, vector<8x8xf32>, vector<8x8xf32> -> vector<8x8xf32>
    %cst_43 = arith.constant 0.353553385 : f32
    %93 = vector.broadcast %cst_43 : f32 to vector<8x8xf32>
    %94 = arith.mulf %92, %93 : vector<8x8xf32>
    %cst_44 = arith.constant 0.000000e+00 : f32
    %95 = vector.broadcast %cst_44 : f32 to vector<8x8xf32>
    %96 = arith.cmpf oeq, %5, %95 : vector<8x8xf32>
    %cst_45 = arith.constant -1.000000e+09 : f32
    %97 = vector.broadcast %cst_45 : f32 to vector<8x8xf32>
    %98 = arith.select %96, %97, %94 : vector<8x8xi1>, vector<8x8xf32>
    %cst_46 = arith.constant dense<0xFF800000> : vector<8xf32>
    %99 = vector.multi_reduction <maximumf>, %98, %cst_46 [1] : vector<8x8xf32> to vector<8xf32>
    %100 = vector.shape_cast %99 : vector<8xf32> to vector<8x1xf32>
    %101 = vector.broadcast %100 : vector<8x1xf32> to vector<8x8xf32>
    %102 = arith.subf %98, %101 : vector<8x8xf32>
    %103 = math.exp %102 : vector<8x8xf32>
    %cst_47 = arith.constant dense<0.000000e+00> : vector<8xf32>
    %104 = vector.multi_reduction <add>, %103, %cst_47 [1] : vector<8x8xf32> to vector<8xf32>
    %105 = vector.shape_cast %104 : vector<8xf32> to vector<8x1xf32>
    %106 = tpu.reciprocal %105 {approx = true} : vector<8x1xf32> -> vector<8x1xf32>
    %107 = vector.broadcast %106 : vector<8x1xf32> to vector<8x8xf32>
    %108 = arith.mulf %103, %107 : vector<8x8xf32>
    %cst_48 = arith.constant dense<0.000000e+00> : vector<8x8xf32>
    %109 = tpu.matmul %108, %91, %cst_48 {dimension_numbers = #tpu.dot_dimension_numbers<[1], [0], [0], [1], [0, 0, 1, 1], [], []>} : vector<8x8xf32>, vector<8x8xf32>, vector<8x8xf32> -> vector<8x8xf32>
    %110 = vector.extract_strided_slice %40 {offsets = [16, 0], sizes = [8, 32], strides = [1, 1]} : vector<32x32xf32> to vector<8x32xf32>
    %cst_49 = arith.constant dense<0.000000e+00> : vector<8x32xf32>
    %111 = tpu.matmul %109, %110, %cst_49 {dimension_numbers = #tpu.dot_dimension_numbers<[1], [0], [0], [1], [0, 0, 1, 1], [], []>} : vector<8x8xf32>, vector<8x32xf32>, vector<8x32xf32> -> vector<8x32xf32>
    %112 = arith.addf %88, %111 : vector<8x32xf32>
    %113 = vector.extract_strided_slice %37 {offsets = [0, 24], sizes = [8, 8], strides = [1, 1]} : vector<8x32xf32> to vector<8x8xf32>
    %114 = vector.extract_strided_slice %38 {offsets = [0, 24], sizes = [8, 8], strides = [1, 1]} : vector<8x32xf32> to vector<8x8xf32>
    %115 = vector.extract_strided_slice %39 {offsets = [0, 24], sizes = [8, 8], strides = [1, 1]} : vector<8x32xf32> to vector<8x8xf32>
    %cst_50 = arith.constant dense<0.000000e+00> : vector<8x8xf32>
    %116 = tpu.matmul %113, %114, %cst_50 {dimension_numbers = #tpu.dot_dimension_numbers<[1], [1], [0], [0], [0, 0, 1, 0], [], []>} : vector<8x8xf32>, vector<8x8xf32>, vector<8x8xf32> -> vector<8x8xf32>
    %cst_51 = arith.constant 0.353553385 : f32
    %117 = vector.broadcast %cst_51 : f32 to vector<8x8xf32>
    %118 = arith.mulf %116, %117 : vector<8x8xf32>
    %cst_52 = arith.constant 0.000000e+00 : f32
    %119 = vector.broadcast %cst_52 : f32 to vector<8x8xf32>
    %120 = arith.cmpf oeq, %5, %119 : vector<8x8xf32>
    %cst_53 = arith.constant -1.000000e+09 : f32
    %121 = vector.broadcast %cst_53 : f32 to vector<8x8xf32>
    %122 = arith.select %120, %121, %118 : vector<8x8xi1>, vector<8x8xf32>
    %cst_54 = arith.constant dense<0xFF800000> : vector<8xf32>
    %123 = vector.multi_reduction <maximumf>, %122, %cst_54 [1] : vector<8x8xf32> to vector<8xf32>
    %124 = vector.shape_cast %123 : vector<8xf32> to vector<8x1xf32>
    %125 = vector.broadcast %124 : vector<8x1xf32> to vector<8x8xf32>
    %126 = arith.subf %122, %125 : vector<8x8xf32>
    %127 = math.exp %126 : vector<8x8xf32>
    %cst_55 = arith.constant dense<0.000000e+00> : vector<8xf32>
    %128 = vector.multi_reduction <add>, %127, %cst_55 [1] : vector<8x8xf32> to vector<8xf32>
    %129 = vector.shape_cast %128 : vector<8xf32> to vector<8x1xf32>
    %130 = tpu.reciprocal %129 {approx = true} : vector<8x1xf32> -> vector<8x1xf32>
    %131 = vector.broadcast %130 : vector<8x1xf32> to vector<8x8xf32>
    %132 = arith.mulf %127, %131 : vector<8x8xf32>
    %cst_56 = arith.constant dense<0.000000e+00> : vector<8x8xf32>
    %133 = tpu.matmul %132, %115, %cst_56 {dimension_numbers = #tpu.dot_dimension_numbers<[1], [0], [0], [1], [0, 0, 1, 1], [], []>} : vector<8x8xf32>, vector<8x8xf32>, vector<8x8xf32> -> vector<8x8xf32>
    %134 = vector.extract_strided_slice %40 {offsets = [24, 0], sizes = [8, 32], strides = [1, 1]} : vector<32x32xf32> to vector<8x32xf32>
    %cst_57 = arith.constant dense<0.000000e+00> : vector<8x32xf32>
    %135 = tpu.matmul %133, %134, %cst_57 {dimension_numbers = #tpu.dot_dimension_numbers<[1], [0], [0], [1], [0, 0, 1, 1], [], []>} : vector<8x8xf32>, vector<8x32xf32>, vector<8x32xf32> -> vector<8x32xf32>
    %136 = arith.addf %112, %135 : vector<8x32xf32>
    %137 = vector.broadcast %41 : vector<1x32xf32> to vector<8x32xf32>
    %138 = arith.addf %136, %137 : vector<8x32xf32>
    %139 = arith.addf %1, %138 : vector<8x32xf32>
    %c0_58 = arith.constant 0 : index
    %c0_59 = arith.constant 0 : index
    %140 = vector.load %arg10[%c0_58, %c0_59] : memref<2x32xf32, #tpu.memory_space<vmem>>, vector<2x32xf32>
    %cst_60 = arith.constant dense<0.000000e+00> : vector<8xf32>
    %141 = vector.multi_reduction <add>, %139, %cst_60 [1] : vector<8x32xf32> to vector<8xf32>
    %142 = vector.shape_cast %141 : vector<8xf32> to vector<8x1xf32>
    %cst_61 = arith.constant 3.200000e+01 : f32
    %143 = vector.broadcast %cst_61 : f32 to vector<8x1xf32>
    %144 = arith.divf %142, %143 : vector<8x1xf32>
    %145 = vector.broadcast %144 : vector<8x1xf32> to vector<8x32xf32>
    %146 = arith.subf %139, %145 : vector<8x32xf32>
    %147 = arith.mulf %146, %146 : vector<8x32xf32>
    %cst_62 = arith.constant dense<0.000000e+00> : vector<8xf32>
    %148 = vector.multi_reduction <add>, %147, %cst_62 [1] : vector<8x32xf32> to vector<8xf32>
    %149 = vector.shape_cast %148 : vector<8xf32> to vector<8x1xf32>
    %cst_63 = arith.constant 0.0322580636 : f32
    %150 = vector.broadcast %cst_63 : f32 to vector<8x1xf32>
    %151 = arith.mulf %149, %150 : vector<8x1xf32>
    %152 = math.sqrt %151 : vector<8x1xf32>
    %cst_64 = arith.constant 9.99999997E-7 : f32
    %153 = vector.broadcast %cst_64 : f32 to vector<8x1xf32>
    %154 = arith.addf %152, %153 : vector<8x1xf32>
    %155 = tpu.reciprocal %154 : vector<8x1xf32> -> vector<8x1xf32>
    %156 = vector.extract_strided_slice %140 {offsets = [0, 0], sizes = [1, 32], strides = [1, 1]} : vector<2x32xf32> to vector<1x32xf32>
    %157 = vector.broadcast %155 : vector<8x1xf32> to vector<8x32xf32>
    %158 = arith.mulf %146, %157 : vector<8x32xf32>
    %159 = vector.broadcast %156 : vector<1x32xf32> to vector<8x32xf32>
    %160 = arith.mulf %159, %158 : vector<8x32xf32>
    %161 = vector.extract_strided_slice %140 {offsets = [1, 0], sizes = [1, 32], strides = [1, 1]} : vector<2x32xf32> to vector<1x32xf32>
    %162 = vector.broadcast %161 : vector<1x32xf32> to vector<8x32xf32>
    %163 = arith.addf %160, %162 : vector<8x32xf32>
    %c0_65 = arith.constant 0 : index
    %c0_66 = arith.constant 0 : index
    %164 = vector.load %arg11[%c0_65, %c0_66] : memref<32x32xf32, #tpu.memory_space<vmem>>, vector<32x32xf32>
    %cst_67 = arith.constant dense<0.000000e+00> : vector<8x32xf32>
    %165 = tpu.matmul %163, %164, %cst_67 {dimension_numbers = #tpu.dot_dimension_numbers<[1], [0], [0], [1], [0, 0, 1, 1], [], []>} : vector<8x32xf32>, vector<32x32xf32>, vector<8x32xf32> -> vector<8x32xf32>
    %c0_68 = arith.constant 0 : index
    %c0_69 = arith.constant 0 : index
    %166 = vector.load %arg12[%c0_68, %c0_69] : memref<1x32xf32, #tpu.memory_space<vmem>>, vector<1x32xf32>
    %167 = vector.broadcast %166 : vector<1x32xf32> to vector<8x32xf32>
    %168 = arith.addf %165, %167 : vector<8x32xf32>
    %c0_70 = arith.constant 0 : index
    %c0_71 = arith.constant 0 : index
    %169 = vector.load %arg13[%c0_70, %c0_71] : memref<32x64xf32, #tpu.memory_space<vmem>>, vector<32x64xf32>
    %cst_72 = arith.constant dense<0.000000e+00> : vector<8x64xf32>
    %170 = tpu.matmul %3, %169, %cst_72 {dimension_numbers = #tpu.dot_dimension_numbers<[1], [0], [0], [1], [0, 0, 1, 1], [], []>} : vector<8x32xf32>, vector<32x64xf32>, vector<8x64xf32> -> vector<8x64xf32>
    %c0_73 = arith.constant 0 : index
    %c0_74 = arith.constant 0 : index
    %171 = vector.load %arg14[%c0_73, %c0_74] : memref<1x64xf32, #tpu.memory_space<vmem>>, vector<1x64xf32>
    %172 = vector.broadcast %171 : vector<1x64xf32> to vector<8x64xf32>
    %173 = arith.addf %170, %172 : vector<8x64xf32>
    %174 = vector.extract_strided_slice %173 {offsets = [0, 0], sizes = [8, 32], strides = [1, 1]} : vector<8x64xf32> to vector<8x32xf32>
    %175 = vector.extract_strided_slice %173 {offsets = [0, 32], sizes = [8, 32], strides = [1, 1]} : vector<8x64xf32> to vector<8x32xf32>
    %c0_75 = arith.constant 0 : index
    %c0_76 = arith.constant 0 : index
    %176 = vector.load %arg15[%c0_75, %c0_76] : memref<32x32xf32, #tpu.memory_space<vmem>>, vector<32x32xf32>
    %c0_77 = arith.constant 0 : index
    %c0_78 = arith.constant 0 : index
    %177 = vector.load %arg16[%c0_77, %c0_78] : memref<1x32xf32, #tpu.memory_space<vmem>>, vector<1x32xf32>
    %178 = vector.extract_strided_slice %168 {offsets = [0, 0], sizes = [8, 8], strides = [1, 1]} : vector<8x32xf32> to vector<8x8xf32>
    %179 = vector.extract_strided_slice %174 {offsets = [0, 0], sizes = [8, 8], strides = [1, 1]} : vector<8x32xf32> to vector<8x8xf32>
    %180 = vector.extract_strided_slice %175 {offsets = [0, 0], sizes = [8, 8], strides = [1, 1]} : vector<8x32xf32> to vector<8x8xf32>
    %cst_79 = arith.constant dense<0.000000e+00> : vector<8x8xf32>
    %181 = tpu.matmul %178, %179, %cst_79 {dimension_numbers = #tpu.dot_dimension_numbers<[1], [1], [0], [0], [0, 0, 1, 0], [], []>} : vector<8x8xf32>, vector<8x8xf32>, vector<8x8xf32> -> vector<8x8xf32>
    %cst_80 = arith.constant 0.353553385 : f32
    %182 = vector.broadcast %cst_80 : f32 to vector<8x8xf32>
    %183 = arith.mulf %181, %182 : vector<8x8xf32>
    %cst_81 = arith.constant 0.000000e+00 : f32
    %184 = vector.broadcast %cst_81 : f32 to vector<8x8xf32>
    %185 = arith.cmpf oeq, %7, %184 : vector<8x8xf32>
    %cst_82 = arith.constant -1.000000e+09 : f32
    %186 = vector.broadcast %cst_82 : f32 to vector<8x8xf32>
    %187 = arith.select %185, %186, %183 : vector<8x8xi1>, vector<8x8xf32>
    %cst_83 = arith.constant dense<0xFF800000> : vector<8xf32>
    %188 = vector.multi_reduction <maximumf>, %187, %cst_83 [1] : vector<8x8xf32> to vector<8xf32>
    %189 = vector.shape_cast %188 : vector<8xf32> to vector<8x1xf32>
    %190 = vector.broadcast %189 : vector<8x1xf32> to vector<8x8xf32>
    %191 = arith.subf %187, %190 : vector<8x8xf32>
    %192 = math.exp %191 : vector<8x8xf32>
    %cst_84 = arith.constant dense<0.000000e+00> : vector<8xf32>
    %193 = vector.multi_reduction <add>, %192, %cst_84 [1] : vector<8x8xf32> to vector<8xf32>
    %194 = vector.shape_cast %193 : vector<8xf32> to vector<8x1xf32>
    %195 = tpu.reciprocal %194 {approx = true} : vector<8x1xf32> -> vector<8x1xf32>
    %196 = vector.broadcast %195 : vector<8x1xf32> to vector<8x8xf32>
    %197 = arith.mulf %192, %196 : vector<8x8xf32>
    %cst_85 = arith.constant dense<0.000000e+00> : vector<8x8xf32>
    %198 = tpu.matmul %197, %180, %cst_85 {dimension_numbers = #tpu.dot_dimension_numbers<[1], [0], [0], [1], [0, 0, 1, 1], [], []>} : vector<8x8xf32>, vector<8x8xf32>, vector<8x8xf32> -> vector<8x8xf32>
    %199 = vector.extract_strided_slice %176 {offsets = [0, 0], sizes = [8, 32], strides = [1, 1]} : vector<32x32xf32> to vector<8x32xf32>
    %cst_86 = arith.constant dense<0.000000e+00> : vector<8x32xf32>
    %200 = tpu.matmul %198, %199, %cst_86 {dimension_numbers = #tpu.dot_dimension_numbers<[1], [0], [0], [1], [0, 0, 1, 1], [], []>} : vector<8x8xf32>, vector<8x32xf32>, vector<8x32xf32> -> vector<8x32xf32>
    %201 = vector.extract_strided_slice %168 {offsets = [0, 8], sizes = [8, 8], strides = [1, 1]} : vector<8x32xf32> to vector<8x8xf32>
    %202 = vector.extract_strided_slice %174 {offsets = [0, 8], sizes = [8, 8], strides = [1, 1]} : vector<8x32xf32> to vector<8x8xf32>
    %203 = vector.extract_strided_slice %175 {offsets = [0, 8], sizes = [8, 8], strides = [1, 1]} : vector<8x32xf32> to vector<8x8xf32>
    %cst_87 = arith.constant dense<0.000000e+00> : vector<8x8xf32>
    %204 = tpu.matmul %201, %202, %cst_87 {dimension_numbers = #tpu.dot_dimension_numbers<[1], [1], [0], [0], [0, 0, 1, 0], [], []>} : vector<8x8xf32>, vector<8x8xf32>, vector<8x8xf32> -> vector<8x8xf32>
    %cst_88 = arith.constant 0.353553385 : f32
    %205 = vector.broadcast %cst_88 : f32 to vector<8x8xf32>
    %206 = arith.mulf %204, %205 : vector<8x8xf32>
    %cst_89 = arith.constant 0.000000e+00 : f32
    %207 = vector.broadcast %cst_89 : f32 to vector<8x8xf32>
    %208 = arith.cmpf oeq, %7, %207 : vector<8x8xf32>
    %cst_90 = arith.constant -1.000000e+09 : f32
    %209 = vector.broadcast %cst_90 : f32 to vector<8x8xf32>
    %210 = arith.select %208, %209, %206 : vector<8x8xi1>, vector<8x8xf32>
    %cst_91 = arith.constant dense<0xFF800000> : vector<8xf32>
    %211 = vector.multi_reduction <maximumf>, %210, %cst_91 [1] : vector<8x8xf32> to vector<8xf32>
    %212 = vector.shape_cast %211 : vector<8xf32> to vector<8x1xf32>
    %213 = vector.broadcast %212 : vector<8x1xf32> to vector<8x8xf32>
    %214 = arith.subf %210, %213 : vector<8x8xf32>
    %215 = math.exp %214 : vector<8x8xf32>
    %cst_92 = arith.constant dense<0.000000e+00> : vector<8xf32>
    %216 = vector.multi_reduction <add>, %215, %cst_92 [1] : vector<8x8xf32> to vector<8xf32>
    %217 = vector.shape_cast %216 : vector<8xf32> to vector<8x1xf32>
    %218 = tpu.reciprocal %217 {approx = true} : vector<8x1xf32> -> vector<8x1xf32>
    %219 = vector.broadcast %218 : vector<8x1xf32> to vector<8x8xf32>
    %220 = arith.mulf %215, %219 : vector<8x8xf32>
    %cst_93 = arith.constant dense<0.000000e+00> : vector<8x8xf32>
    %221 = tpu.matmul %220, %203, %cst_93 {dimension_numbers = #tpu.dot_dimension_numbers<[1], [0], [0], [1], [0, 0, 1, 1], [], []>} : vector<8x8xf32>, vector<8x8xf32>, vector<8x8xf32> -> vector<8x8xf32>
    %222 = vector.extract_strided_slice %176 {offsets = [8, 0], sizes = [8, 32], strides = [1, 1]} : vector<32x32xf32> to vector<8x32xf32>
    %cst_94 = arith.constant dense<0.000000e+00> : vector<8x32xf32>
    %223 = tpu.matmul %221, %222, %cst_94 {dimension_numbers = #tpu.dot_dimension_numbers<[1], [0], [0], [1], [0, 0, 1, 1], [], []>} : vector<8x8xf32>, vector<8x32xf32>, vector<8x32xf32> -> vector<8x32xf32>
    %224 = arith.addf %200, %223 : vector<8x32xf32>
    %225 = vector.extract_strided_slice %168 {offsets = [0, 16], sizes = [8, 8], strides = [1, 1]} : vector<8x32xf32> to vector<8x8xf32>
    %226 = vector.extract_strided_slice %174 {offsets = [0, 16], sizes = [8, 8], strides = [1, 1]} : vector<8x32xf32> to vector<8x8xf32>
    %227 = vector.extract_strided_slice %175 {offsets = [0, 16], sizes = [8, 8], strides = [1, 1]} : vector<8x32xf32> to vector<8x8xf32>
    %cst_95 = arith.constant dense<0.000000e+00> : vector<8x8xf32>
    %228 = tpu.matmul %225, %226, %cst_95 {dimension_numbers = #tpu.dot_dimension_numbers<[1], [1], [0], [0], [0, 0, 1, 0], [], []>} : vector<8x8xf32>, vector<8x8xf32>, vector<8x8xf32> -> vector<8x8xf32>
    %cst_96 = arith.constant 0.353553385 : f32
    %229 = vector.broadcast %cst_96 : f32 to vector<8x8xf32>
    %230 = arith.mulf %228, %229 : vector<8x8xf32>
    %cst_97 = arith.constant 0.000000e+00 : f32
    %231 = vector.broadcast %cst_97 : f32 to vector<8x8xf32>
    %232 = arith.cmpf oeq, %7, %231 : vector<8x8xf32>
    %cst_98 = arith.constant -1.000000e+09 : f32
    %233 = vector.broadcast %cst_98 : f32 to vector<8x8xf32>
    %234 = arith.select %232, %233, %230 : vector<8x8xi1>, vector<8x8xf32>
    %cst_99 = arith.constant dense<0xFF800000> : vector<8xf32>
    %235 = vector.multi_reduction <maximumf>, %234, %cst_99 [1] : vector<8x8xf32> to vector<8xf32>
    %236 = vector.shape_cast %235 : vector<8xf32> to vector<8x1xf32>
    %237 = vector.broadcast %236 : vector<8x1xf32> to vector<8x8xf32>
    %238 = arith.subf %234, %237 : vector<8x8xf32>
    %239 = math.exp %238 : vector<8x8xf32>
    %cst_100 = arith.constant dense<0.000000e+00> : vector<8xf32>
    %240 = vector.multi_reduction <add>, %239, %cst_100 [1] : vector<8x8xf32> to vector<8xf32>
    %241 = vector.shape_cast %240 : vector<8xf32> to vector<8x1xf32>
    %242 = tpu.reciprocal %241 {approx = true} : vector<8x1xf32> -> vector<8x1xf32>
    %243 = vector.broadcast %242 : vector<8x1xf32> to vector<8x8xf32>
    %244 = arith.mulf %239, %243 : vector<8x8xf32>
    %cst_101 = arith.constant dense<0.000000e+00> : vector<8x8xf32>
    %245 = tpu.matmul %244, %227, %cst_101 {dimension_numbers = #tpu.dot_dimension_numbers<[1], [0], [0], [1], [0, 0, 1, 1], [], []>} : vector<8x8xf32>, vector<8x8xf32>, vector<8x8xf32> -> vector<8x8xf32>
    %246 = vector.extract_strided_slice %176 {offsets = [16, 0], sizes = [8, 32], strides = [1, 1]} : vector<32x32xf32> to vector<8x32xf32>
    %cst_102 = arith.constant dense<0.000000e+00> : vector<8x32xf32>
    %247 = tpu.matmul %245, %246, %cst_102 {dimension_numbers = #tpu.dot_dimension_numbers<[1], [0], [0], [1], [0, 0, 1, 1], [], []>} : vector<8x8xf32>, vector<8x32xf32>, vector<8x32xf32> -> vector<8x32xf32>
    %248 = arith.addf %224, %247 : vector<8x32xf32>
    %249 = vector.extract_strided_slice %168 {offsets = [0, 24], sizes = [8, 8], strides = [1, 1]} : vector<8x32xf32> to vector<8x8xf32>
    %250 = vector.extract_strided_slice %174 {offsets = [0, 24], sizes = [8, 8], strides = [1, 1]} : vector<8x32xf32> to vector<8x8xf32>
    %251 = vector.extract_strided_slice %175 {offsets = [0, 24], sizes = [8, 8], strides = [1, 1]} : vector<8x32xf32> to vector<8x8xf32>
    %cst_103 = arith.constant dense<0.000000e+00> : vector<8x8xf32>
    %252 = tpu.matmul %249, %250, %cst_103 {dimension_numbers = #tpu.dot_dimension_numbers<[1], [1], [0], [0], [0, 0, 1, 0], [], []>} : vector<8x8xf32>, vector<8x8xf32>, vector<8x8xf32> -> vector<8x8xf32>
    %cst_104 = arith.constant 0.353553385 : f32
    %253 = vector.broadcast %cst_104 : f32 to vector<8x8xf32>
    %254 = arith.mulf %252, %253 : vector<8x8xf32>
    %cst_105 = arith.constant 0.000000e+00 : f32
    %255 = vector.broadcast %cst_105 : f32 to vector<8x8xf32>
    %256 = arith.cmpf oeq, %7, %255 : vector<8x8xf32>
    %cst_106 = arith.constant -1.000000e+09 : f32
    %257 = vector.broadcast %cst_106 : f32 to vector<8x8xf32>
    %258 = arith.select %256, %257, %254 : vector<8x8xi1>, vector<8x8xf32>
    %cst_107 = arith.constant dense<0xFF800000> : vector<8xf32>
    %259 = vector.multi_reduction <maximumf>, %258, %cst_107 [1] : vector<8x8xf32> to vector<8xf32>
    %260 = vector.shape_cast %259 : vector<8xf32> to vector<8x1xf32>
    %261 = vector.broadcast %260 : vector<8x1xf32> to vector<8x8xf32>
    %262 = arith.subf %258, %261 : vector<8x8xf32>
    %263 = math.exp %262 : vector<8x8xf32>
    %cst_108 = arith.constant dense<0.000000e+00> : vector<8xf32>
    %264 = vector.multi_reduction <add>, %263, %cst_108 [1] : vector<8x8xf32> to vector<8xf32>
    %265 = vector.shape_cast %264 : vector<8xf32> to vector<8x1xf32>
    %266 = tpu.reciprocal %265 {approx = true} : vector<8x1xf32> -> vector<8x1xf32>
    %267 = vector.broadcast %266 : vector<8x1xf32> to vector<8x8xf32>
    %268 = arith.mulf %263, %267 : vector<8x8xf32>
    %cst_109 = arith.constant dense<0.000000e+00> : vector<8x8xf32>
    %269 = tpu.matmul %268, %251, %cst_109 {dimension_numbers = #tpu.dot_dimension_numbers<[1], [0], [0], [1], [0, 0, 1, 1], [], []>} : vector<8x8xf32>, vector<8x8xf32>, vector<8x8xf32> -> vector<8x8xf32>
    %270 = vector.extract_strided_slice %176 {offsets = [24, 0], sizes = [8, 32], strides = [1, 1]} : vector<32x32xf32> to vector<8x32xf32>
    %cst_110 = arith.constant dense<0.000000e+00> : vector<8x32xf32>
    %271 = tpu.matmul %269, %270, %cst_110 {dimension_numbers = #tpu.dot_dimension_numbers<[1], [0], [0], [1], [0, 0, 1, 1], [], []>} : vector<8x8xf32>, vector<8x32xf32>, vector<8x32xf32> -> vector<8x32xf32>
    %272 = arith.addf %248, %271 : vector<8x32xf32>
    %273 = vector.broadcast %177 : vector<1x32xf32> to vector<8x32xf32>
    %274 = arith.addf %272, %273 : vector<8x32xf32>
    %275 = arith.addf %139, %274 : vector<8x32xf32>
    %c0_111 = arith.constant 0 : index
    %c0_112 = arith.constant 0 : index
    %276 = vector.load %arg17[%c0_111, %c0_112] : memref<2x32xf32, #tpu.memory_space<vmem>>, vector<2x32xf32>
    %cst_113 = arith.constant dense<0.000000e+00> : vector<8xf32>
    %277 = vector.multi_reduction <add>, %275, %cst_113 [1] : vector<8x32xf32> to vector<8xf32>
    %278 = vector.shape_cast %277 : vector<8xf32> to vector<8x1xf32>
    %cst_114 = arith.constant 3.200000e+01 : f32
    %279 = vector.broadcast %cst_114 : f32 to vector<8x1xf32>
    %280 = arith.divf %278, %279 : vector<8x1xf32>
    %281 = vector.broadcast %280 : vector<8x1xf32> to vector<8x32xf32>
    %282 = arith.subf %275, %281 : vector<8x32xf32>
    %283 = arith.mulf %282, %282 : vector<8x32xf32>
    %cst_115 = arith.constant dense<0.000000e+00> : vector<8xf32>
    %284 = vector.multi_reduction <add>, %283, %cst_115 [1] : vector<8x32xf32> to vector<8xf32>
    %285 = vector.shape_cast %284 : vector<8xf32> to vector<8x1xf32>
    %cst_116 = arith.constant 0.0322580636 : f32
    %286 = vector.broadcast %cst_116 : f32 to vector<8x1xf32>
    %287 = arith.mulf %285, %286 : vector<8x1xf32>
    %288 = math.sqrt %287 : vector<8x1xf32>
    %cst_117 = arith.constant 9.99999997E-7 : f32
    %289 = vector.broadcast %cst_117 : f32 to vector<8x1xf32>
    %290 = arith.addf %288, %289 : vector<8x1xf32>
    %291 = tpu.reciprocal %290 : vector<8x1xf32> -> vector<8x1xf32>
    %292 = vector.extract_strided_slice %276 {offsets = [0, 0], sizes = [1, 32], strides = [1, 1]} : vector<2x32xf32> to vector<1x32xf32>
    %293 = vector.broadcast %291 : vector<8x1xf32> to vector<8x32xf32>
    %294 = arith.mulf %282, %293 : vector<8x32xf32>
    %295 = vector.broadcast %292 : vector<1x32xf32> to vector<8x32xf32>
    %296 = arith.mulf %295, %294 : vector<8x32xf32>
    %297 = vector.extract_strided_slice %276 {offsets = [1, 0], sizes = [1, 32], strides = [1, 1]} : vector<2x32xf32> to vector<1x32xf32>
    %298 = vector.broadcast %297 : vector<1x32xf32> to vector<8x32xf32>
    %299 = arith.addf %296, %298 : vector<8x32xf32>
    %c0_118 = arith.constant 0 : index
    %c0_119 = arith.constant 0 : index
    %300 = vector.load %arg18[%c0_118, %c0_119] : memref<32x64xf32, #tpu.memory_space<vmem>>, vector<32x64xf32>
    %cst_120 = arith.constant dense<0.000000e+00> : vector<8x64xf32>
    %301 = tpu.matmul %299, %300, %cst_120 {dimension_numbers = #tpu.dot_dimension_numbers<[1], [0], [0], [1], [0, 0, 1, 1], [], []>} : vector<8x32xf32>, vector<32x64xf32>, vector<8x64xf32> -> vector<8x64xf32>
    %c0_121 = arith.constant 0 : index
    %c0_122 = arith.constant 0 : index
    %302 = vector.load %arg19[%c0_121, %c0_122] : memref<1x64xf32, #tpu.memory_space<vmem>>, vector<1x64xf32>
    %303 = vector.broadcast %302 : vector<1x64xf32> to vector<8x64xf32>
    %304 = arith.addf %301, %303 : vector<8x64xf32>
    %cst_123 = arith.constant 0.000000e+00 : f32
    %305 = vector.broadcast %cst_123 : f32 to vector<8x64xf32>
    %306 = arith.maximumf %304, %305 : vector<8x64xf32>
    %c0_124 = arith.constant 0 : index
    %c0_125 = arith.constant 0 : index
    %307 = vector.load %arg20[%c0_124, %c0_125] : memref<64x32xf32, #tpu.memory_space<vmem>>, vector<64x32xf32>
    %cst_126 = arith.constant dense<0.000000e+00> : vector<8x32xf32>
    %308 = tpu.matmul %306, %307, %cst_126 {dimension_numbers = #tpu.dot_dimension_numbers<[1], [0], [0], [1], [0, 0, 1, 1], [], []>} : vector<8x64xf32>, vector<64x32xf32>, vector<8x32xf32> -> vector<8x32xf32>
    %c0_127 = arith.constant 0 : index
    %c0_128 = arith.constant 0 : index
    %309 = vector.load %arg21[%c0_127, %c0_128] : memref<1x32xf32, #tpu.memory_space<vmem>>, vector<1x32xf32>
    %310 = vector.broadcast %309 : vector<1x32xf32> to vector<8x32xf32>
    %311 = arith.addf %308, %310 : vector<8x32xf32>
    %312 = arith.addf %275, %311 : vector<8x32xf32>
    %c0_129 = arith.constant 0 : index
    %c0_130 = arith.constant 0 : index
    %c0_131 = arith.constant 0 : index
    %313 = vector.load %arg22[%c0_129, %c0_130, %c0_131] : memref<1x8x32xf32, #tpu.memory_space<vmem>>, vector<1x8x32xf32>
    %314 = vector.shape_cast %313 : vector<1x8x32xf32> to vector<8x32xf32>
    %315 = vector.shape_cast %312 : vector<8x32xf32> to vector<1x8x32xf32>
    tpu.vector_store %arg22[%c0_129, %c0_130, %c0_131], %315 {strides = array<i32>} : memref<1x8x32xf32, #tpu.memory_space<vmem>>, vector<1x8x32xf32>,
    return
  }
  func.func @transform_0(%arg0: i32) -> (i32, i32, i32) {
    %c0_i32 = arith.constant 0 : i32
    %c0_i32_0 = arith.constant 0 : i32
    %c0_i32_1 = arith.constant 0 : i32
    return %arg0, %c0_i32, %c0_i32_0 : i32, i32, i32
  }
  func.func @transform_1(%arg0: i32) -> (i32, i32, i32) {
    %c0_i32 = arith.constant 0 : i32
    %c0_i32_0 = arith.constant 0 : i32
    %c0_i32_1 = arith.constant 0 : i32
    return %arg0, %c0_i32, %c0_i32_0 : i32, i32, i32
  }
  func.func @transform_2(%arg0: i32) -> (i32, i32, i32) {
    %c0_i32 = arith.constant 0 : i32
    %c0_i32_0 = arith.constant 0 : i32
    %c0_i32_1 = arith.constant 0 : i32
    return %arg0, %c0_i32, %c0_i32_0 : i32, i32, i32
  }
  func.func @transform_3(%arg0: i32) -> (i32, i32, i32) {
    %c0_i32 = arith.constant 0 : i32
    %c0_i32_0 = arith.constant 0 : i32
    %c0_i32_1 = arith.constant 0 : i32
    return %arg0, %c0_i32, %c0_i32_0 : i32, i32, i32
  }
  func.func @transform_4(%arg0: i32) -> (i32, i32) {
    %c0_i32 = arith.constant 0 : i32
    %c0_i32_0 = arith.constant 0 : i32
    %c0_i32_1 = arith.constant 0 : i32
    return %c0_i32, %c0_i32_0 : i32, i32
  }
  func.func @transform_5(%arg0: i32) -> (i32, i32) {
    %c0_i32 = arith.constant 0 : i32
    %c0_i32_0 = arith.constant 0 : i32
    %c0_i32_1 = arith.constant 0 : i32
    return %c0_i32, %c0_i32_0 : i32, i32
  }
  func.func @transform_6(%arg0: i32) -> (i32, i32) {
    %c0_i32 = arith.constant 0 : i32
    %c0_i32_0 = arith.constant 0 : i32
    %c0_i32_1 = arith.constant 0 : i32
    return %c0_i32, %c0_i32_0 : i32, i32
  }
  func.func @transform_7(%arg0: i32) -> (i32, i32) {
    %c0_i32 = arith.constant 0 : i32
    %c0_i32_0 = arith.constant 0 : i32
    %c0_i32_1 = arith.constant 0 : i32
    return %c0_i32, %c0_i32_0 : i32, i32
  }
  func.func @transform_8(%arg0: i32) -> (i32, i32) {
    %c0_i32 = arith.constant 0 : i32
    %c0_i32_0 = arith.constant 0 : i32
    %c0_i32_1 = arith.constant 0 : i32
    return %c0_i32, %c0_i32_0 : i32, i32
  }
  func.func @transform_9(%arg0: i32) -> (i32, i32) {
    %c0_i32 = arith.constant 0 : i32
    %c0_i32_0 = arith.constant 0 : i32
    %c0_i32_1 = arith.constant 0 : i32
    return %c0_i32, %c0_i32_0 : i32, i32
  }
  func.func @transform_10(%arg0: i32) -> (i32, i32) {
    %c0_i32 = arith.constant 0 : i32
    %c0_i32_0 = arith.constant 0 : i32
    %c0_i32_1 = arith.constant 0 : i32
    return %c0_i32, %c0_i32_0 : i32, i32
  }
  func.func @transform_11(%arg0: i32) -> (i32, i32) {
    %c0_i32 = arith.constant 0 : i32
    %c0_i32_0 = arith.constant 0 : i32
    %c0_i32_1 = arith.constant 0 : i32
    return %c0_i32, %c0_i32_0 : i32, i32
  }
  func.func @transform_12(%arg0: i32) -> (i32, i32) {
    %c0_i32 = arith.constant 0 : i32
    %c0_i32_0 = arith.constant 0 : i32
    %c0_i32_1 = arith.constant 0 : i32
    return %c0_i32, %c0_i32_0 : i32, i32
  }
  func.func @transform_13(%arg0: i32) -> (i32, i32) {
    %c0_i32 = arith.constant 0 : i32
    %c0_i32_0 = arith.constant 0 : i32
    %c0_i32_1 = arith.constant 0 : i32
    return %c0_i32, %c0_i32_0 : i32, i32
  }
  func.func @transform_14(%arg0: i32) -> (i32, i32) {
    %c0_i32 = arith.constant 0 : i32
    %c0_i32_0 = arith.constant 0 : i32
    %c0_i32_1 = arith.constant 0 : i32
    return %c0_i32, %c0_i32_0 : i32, i32
  }
  func.func @transform_15(%arg0: i32) -> (i32, i32) {
    %c0_i32 = arith.constant 0 : i32
    %c0_i32_0 = arith.constant 0 : i32
    %c0_i32_1 = arith.constant 0 : i32
    return %c0_i32, %c0_i32_0 : i32, i32
  }
  func.func @transform_16(%arg0: i32) -> (i32, i32) {
    %c0_i32 = arith.constant 0 : i32
    %c0_i32_0 = arith.constant 0 : i32
    %c0_i32_1 = arith.constant 0 : i32
    return %c0_i32, %c0_i32_0 : i32, i32
  }
  func.func @transform_17(%arg0: i32) -> (i32, i32) {
    %c0_i32 = arith.constant 0 : i32
    %c0_i32_0 = arith.constant 0 : i32
    %c0_i32_1 = arith.constant 0 : i32
    return %c0_i32, %c0_i32_0 : i32, i32
  }
  func.func @transform_18(%arg0: i32) -> (i32, i32) {
    %c0_i32 = arith.constant 0 : i32
    %c0_i32_0 = arith.constant 0 : i32
    %c0_i32_1 = arith.constant 0 : i32
    return %c0_i32, %c0_i32_0 : i32, i32
  }
  func.func @transform_19(%arg0: i32) -> (i32, i32) {
    %c0_i32 = arith.constant 0 : i32
    %c0_i32_0 = arith.constant 0 : i32
    %c0_i32_1 = arith.constant 0 : i32
    return %c0_i32, %c0_i32_0 : i32, i32
  }
  func.func @transform_20(%arg0: i32) -> (i32, i32) {
    %c0_i32 = arith.constant 0 : i32
    %c0_i32_0 = arith.constant 0 : i32
    %c0_i32_1 = arith.constant 0 : i32
    return %c0_i32, %c0_i32_0 : i32, i32
  }
  func.func @transform_21(%arg0: i32) -> (i32, i32, i32) {
    %c0_i32 = arith.constant 0 : i32
    %c0_i32_0 = arith.constant 0 : i32
    %c0_i32_1 = arith.constant 0 : i32
    return %arg0, %c0_i32, %c0_i32_0 : i32, i32, i32
  }
}

</mosaic_0001>

<llo_original>
// kernel: decoder_block.1
$region0: #{decoder_block.1}
  #allocation0 [shape = 'u32[]', space=smem, size = 0x4, offset = 0x4, fixed_abs, tag = 'smem constant byte address 0x4 - core index']
  #allocation1 [shape = 'u32[144,128]{1,0:T(1,128)}', space=vmem, size = 0x12000, scoped, tag = 'internal scratch']
  %s0 = inlined_call_operand.hbm [shape: f32[2,8,32], index: 0, kind: input, shape index: {}]
  %s1 = inlined_call_operand.hbm [shape: f32[2,8,32], index: 1, kind: input, shape index: {}]
  %s2 = inlined_call_operand.vmem [shape: f32[2,8,8], index: 2, kind: input, shape index: {}]
  %s3 = inlined_call_operand.vmem [shape: f32[2,8,8], index: 3, kind: input, shape index: {}]
  %s4 = inlined_call_operand.hbm [shape: f32[2,32], index: 4, kind: input, shape index: {}]
  %s5 = inlined_call_operand.vmem [shape: f32[32,96], index: 5, kind: input, shape index: {}]
  %s6 = inlined_call_operand.vmem [shape: f32[1,96], index: 6, kind: input, shape index: {}]
  %s7 = inlined_call_operand.vmem [shape: f32[32,32], index: 7, kind: input, shape index: {}]
  %s8 = inlined_call_operand.hbm [shape: f32[1,32], index: 8, kind: input, shape index: {}]
  %s9 = inlined_call_operand.vmem [shape: f32[2,32], index: 9, kind: input, shape index: {}]
  %s10 = inlined_call_operand.vmem [shape: f32[32,32], index: 10, kind: input, shape index: {}]
  %s11 = inlined_call_operand.hbm [shape: f32[1,32], index: 11, kind: input, shape index: {}]
  %s12 = inlined_call_operand.vmem [shape: f32[32,64], index: 12, kind: input, shape index: {}]
  %s13 = inlined_call_operand.hbm [shape: f32[1,64], index: 13, kind: input, shape index: {}]
  %s14 = inlined_call_operand.vmem [shape: f32[32,32], index: 14, kind: input, shape index: {}]
  %s15 = inlined_call_operand.hbm [shape: f32[1,32], index: 15, kind: input, shape index: {}]
  %s16 = inlined_call_operand.vmem [shape: f32[2,32], index: 16, kind: input, shape index: {}]
  %s17 = inlined_call_operand.hbm [shape: f32[32,64], index: 17, kind: input, shape index: {}]
  %s18 = inlined_call_operand.hbm [shape: f32[1,64], index: 18, kind: input, shape index: {}]
  %s19 = inlined_call_operand.vmem [shape: f32[64,32], index: 19, kind: input, shape index: {}]
  %s20 = inlined_call_operand.hbm [shape: f32[1,32], index: 20, kind: input, shape index: {}]
  %s21 = inlined_call_operand.hbm [shape: f32[2,8,32], index: 21, kind: output, shape index: {}]
  %s22 = sld [smem:[#allocation0]]
  $region157: #{decoder_block.1} parent=0
    _
  %s24 = ssub.s32 1, %s22
  %s25 = scalar_select 0, %s24, %s22
  $region1: #{decoder_block.1} parent=0
    #allocation2 [shape = 'u8[8192]{0}', space=vmem, size = 0x2000, scoped, tag = 'input window, operand 0']
    #allocation3 [shape = 's32[2]{0}', space=sflag, size = 0x8, scoped, tag = 'scoped memory for decoder_block.1']
    #allocation4 [shape = 's32[2]{0}', space=sflag, size = 0x8, scoped, tag = 'scoped memory for decoder_block.1']
    #allocation5 [shape = 'u8[8192]{0}', space=vmem, size = 0x2000, scoped, tag = 'input window, operand 1']
    #allocation6 [shape = 's32[2]{0}', space=sflag, size = 0x8, scoped, tag = 'scoped memory for decoder_block.1']
    #allocation7 [shape = 'u8[1024]{0}', space=vmem, size = 0x400, scoped, tag = 'input window, operand 4, single buffered']
    #allocation8 [shape = 'u8[512]{0}', space=vmem, size = 0x400, scoped, tag = 'input window, operand 8, single buffered']
    #allocation9 [shape = 's32[1]{0}', space=sflag, size = 0x4, scoped, tag = 'scoped memory for decoder_block.1']
    #allocation10 [shape = 'u8[512]{0}', space=vmem, size = 0x400, scoped, tag = 'input window, operand 11, single buffered']
    #allocation11 [shape = 'u8[512]{0}', space=vmem, size = 0x400, scoped, tag = 'input window, operand 13, single buffered']
    #allocation12 [shape = 's32[1]{0}', space=sflag, size = 0x4, scoped, tag = 'scoped memory for decoder_block.1']
    #allocation13 [shape = 'u8[512]{0}', space=vmem, size = 0x400, scoped, tag = 'input window, operand 15, single buffered']
    #allocation14 [shape = 'u8[16384]{0}', space=vmem, size = 0x4000, scoped, tag = 'input window, operand 17, single buffered']
    #allocation15 [shape = 's32[1]{0}', space=sflag, size = 0x4, scoped, tag = 'scoped memory for decoder_block.1']
    #allocation16 [shape = 'u8[512]{0}', space=vmem, size = 0x400, scoped, tag = 'input window, operand 18, single buffered']
    #allocation17 [shape = 'u8[512]{0}', space=vmem, size = 0x400, scoped, tag = 'input window, operand 20, single buffered']
    #allocation18 [shape = 's32[1]{0}', space=sflag, size = 0x4, scoped, tag = 'scoped memory for decoder_block.1']
    #allocation19 [shape = 'u8[8192]{0}', space=vmem, size = 0x2000, scoped, tag = 'output window, operand 0']
    %26 = vsyncpa [#allocation3], 0
    %s27 = scalar_lea.sflag [#allocation3], 1
    %28 = vsyncpa %s27, 0
    %29 = vsyncpa [#allocation6], 0
    %s30 = scalar_lea.sflag [#allocation6], 1
    %31 = vsyncpa %s30, 0
    %32 = vsyncpa [#allocation9], 0
    %33 = vsyncpa [#allocation12], 0
    %34 = vsyncpa [#allocation15], 0
    %35 = vsyncpa [#allocation18], 0
    %36 = vsyncpa [#allocation4], 0
    %s37 = scalar_lea.sflag [#allocation4], 1
    %38 = vsyncpa %s37, 0
    loop: start=0, step=1, limit=4
    $region2: #{decoder_block.1} parent=1 // loop_pre_header
      _
    $region3: #{decoder_block.1} parent=1 // loop_header
      %s40 = sphi 0, %s44
      %p41 = scmp.ge.s32.totalorder %s40, 4
      %s50 = sphi 0, %s52
      %s53 = sphi 0, %s50
      %s54 = sphi 0, %s53
      %s70 = sphi 0, %s54
      %s76 = sphi 0, %s78
      %s79 = sphi 0, %s76
      %s80 = sphi 0, %s79
      %s96 = sphi 0, %s80
      %s102 = sphi 0, %s104
      %s105 = sphi 0, %s102
      %s106 = sphi 0, %s105
      %s122 = sphi 0, %s106
      %s128 = sphi 0, %s130
      %s131 = sphi 0, %s128
      %s132 = sphi 0, %s131
      %s148 = sphi 0, %s132
      %s152 = sphi 0, %s152
      %s154 = sphi 0, %s152
      %s155 = sphi 0, %s154
      %s169 = sphi 0, %s155
      %s173 = sphi 0, %s173
      %s175 = sphi 0, %s173
      %s176 = sphi 0, %s175
      %s190 = sphi 0, %s176
      %s194 = sphi 0, %s194
      %s196 = sphi 0, %s194
      %s197 = sphi 0, %s196
      %s211 = sphi 0, %s197
      %s215 = sphi 0, %s215
      %s217 = sphi 0, %s215
      %s218 = sphi 0, %s217
      %s232 = sphi 0, %s218
      %s236 = sphi 0, %s236
      %s238 = sphi 0, %s236
      %s239 = sphi 0, %s238
      %s253 = sphi 0, %s239
      %s257 = sphi 0, %s257
      %s259 = sphi 0, %s257
      %s260 = sphi 0, %s259
      %s274 = sphi 0, %s260
      %s278 = sphi 0, %s278
      %s280 = sphi 0, %s278
      %s281 = sphi 0, %s280
      %s295 = sphi 0, %s281
      %s299 = sphi 0, %s299
      %s301 = sphi 0, %s299
      %s302 = sphi 0, %s301
      %s316 = sphi 0, %s302
      %s320 = sphi 0, %s320
      %s322 = sphi 0, %s320
      %s323 = sphi 0, %s322
      %s337 = sphi 0, %s323
      %s341 = sphi 0, %s341
      %s343 = sphi 0, %s341
      %s344 = sphi 0, %s343
      %s358 = sphi 0, %s344
      %s362 = sphi 0, %s362
      %s364 = sphi 0, %s362
      %s365 = sphi 0, %s364
      %s379 = sphi 0, %s365
      %s383 = sphi 0, %s383
      %s385 = sphi 0, %s383
      %s386 = sphi 0, %s385
      %s400 = sphi 0, %s386
      %s404 = sphi 0, %s404
      %s406 = sphi 0, %s404
      %s407 = sphi 0, %s406
      %s421 = sphi 0, %s407
      %s425 = sphi 0, %s425
      %s427 = sphi 0, %s425
      %s428 = sphi 0, %s427
      %s442 = sphi 0, %s428
      %s446 = sphi 0, %s446
      %s448 = sphi 0, %s446
      %s449 = sphi 0, %s448
      %s463 = sphi 0, %s449
      %s467 = sphi 0, %s467
      %s469 = sphi 0, %s467
      %s470 = sphi 0, %s469
      %s484 = sphi 0, %s470
      %s488 = sphi 0, %s488
      %s490 = sphi 0, %s488
      %s491 = sphi 0, %s490
      %s505 = sphi 0, %s491
      %s511 = sphi 0, %s513
      %s514 = sphi 0, %s511
      %s515 = sphi 0, %s514
      %s531 = sphi 0, %s515
    $region4: #{decoder_block.1} parent=1 // loop_header_branch
      %43 = sbr.rel (%p41) target = $region8
    $region5: #{decoder_block.1} parent=1 // loop_body
      %s45 = ssub.s32 %s40, 1
      %s46 = ssub.s32 %s40, 2
      %s47 = sadd.s32 %s40, 1
      %s48 = ssub.s32 %s40, %s47
      %p49 = scmp.eq.s32.totalorder %s48, 0
      %s51 = sadd.s32 %s50, 1
      %s52 = scalar_select %p49, %s50, %s51
      %p55 = pneg %p49
      %p56 = scmp.eq.s32.totalorder %s40, 1
      %p57 = por %p55, %p56
      %p58 = scmp.ne.s32.totalorder %s50, %s53
      %p59 = scmp.eq.s32.totalorder %s40, 0
      %p60 = por %p58, %p59
      %p61 = scmp.ne.s32.totalorder %s50, %s53
      %p62 = scmp.eq.s32.totalorder %s45, 1
      %p63 = por %p61, %p62
      %p64 = scmp.ne.s32.totalorder %s53, %s54
      %p65 = scmp.eq.s32.totalorder %s45, 0
      %p66 = por %p64, %p65
      %p67 = scmp.ne.s32.totalorder %s53, %s54
      %p68 = scmp.eq.s32.totalorder %s46, 1
      %p69 = por %p67, %p68
      %p71 = scmp.ne.s32.totalorder %s54, %s70
      %p72 = scmp.eq.s32.totalorder %s46, 0
      %p73 = por %p71, %p72
      %s74 = ssub.s32 %s40, %s47
      %p75 = scmp.eq.s32.totalorder %s74, 0
      %s77 = sadd.s32 %s76, 1
      %s78 = scalar_select %p75, %s76, %s77
      %p81 = pneg %p75
      %p82 = scmp.eq.s32.totalorder %s40, 1
      %p83 = por %p81, %p82
      %p84 = scmp.ne.s32.totalorder %s76, %s79
      %p85 = scmp.eq.s32.totalorder %s40, 0
      %p86 = por %p84, %p85
      %p87 = scmp.ne.s32.totalorder %s76, %s79
      %p88 = scmp.eq.s32.totalorder %s45, 1
      %p89 = por %p87, %p88
      %p90 = scmp.ne.s32.totalorder %s79, %s80
      %p91 = scmp.eq.s32.totalorder %s45, 0
      %p92 = por %p90, %p91
      %p93 = scmp.ne.s32.totalorder %s79, %s80
      %p94 = scmp.eq.s32.totalorder %s46, 1
      %p95 = por %p93, %p94
      %p97 = scmp.ne.s32.totalorder %s80, %s96
      %p98 = scmp.eq.s32.totalorder %s46, 0
      %p99 = por %p97, %p98
      %s100 = ssub.s32 %s40, %s47
      %p101 = scmp.eq.s32.totalorder %s100, 0
      %s103 = sadd.s32 %s102, 1
      %s104 = scalar_select %p101, %s102, %s103
      %p107 = pneg %p101
      %p108 = scmp.eq.s32.totalorder %s40, 1
      %p109 = por %p107, %p108
      %p110 = scmp.ne.s32.totalorder %s102, %s105
      %p111 = scmp.eq.s32.totalorder %s40, 0
      %p112 = por %p110, %p111
      %p113 = scmp.ne.s32.totalorder %s102, %s105
      %p114 = scmp.eq.s32.totalorder %s45, 1
      %p115 = por %p113, %p114
      %p116 = scmp.ne.s32.totalorder %s105, %s106
      %p117 = scmp.eq.s32.totalorder %s45, 0
      %p118 = por %p116, %p117
      %p119 = scmp.ne.s32.totalorder %s105, %s106
      %p120 = scmp.eq.s32.totalorder %s46, 1
      %p121 = por %p119, %p120
      %p123 = scmp.ne.s32.totalorder %s106, %s122
      %p124 = scmp.eq.s32.totalorder %s46, 0
      %p125 = por %p123, %p124
      %s126 = ssub.s32 %s40, %s47
      %p127 = scmp.eq.s32.totalorder %s126, 0
      %s129 = sadd.s32 %s128, 1
      %s130 = scalar_select %p127, %s128, %s129
      %p133 = pneg %p127
      %p134 = scmp.eq.s32.totalorder %s40, 1
      %p135 = por %p133, %p134
      %p136 = scmp.ne.s32.totalorder %s128, %s131
      %p137 = scmp.eq.s32.totalorder %s40, 0
      %p138 = por %p136, %p137
      %p139 = scmp.ne.s32.totalorder %s128, %s131
      %p140 = scmp.eq.s32.totalorder %s45, 1
      %p141 = por %p139, %p140
      %p142 = scmp.ne.s32.totalorder %s131, %s132
      %p143 = scmp.eq.s32.totalorder %s45, 0
      %p144 = por %p142, %p143
      %p145 = scmp.ne.s32.totalorder %s131, %s132
      %p146 = scmp.eq.s32.totalorder %s46, 1
      %p147 = por %p145, %p146
      %p149 = scmp.ne.s32.totalorder %s132, %s148
      %p150 = scmp.eq.s32.totalorder %s46, 0
      %p151 = por %p149, %p150
      %s153 = sadd.s32 %s152, 1
      %p156 = scmp.eq.s32.totalorder %s40, 1
      %p157 = scmp.ne.s32.totalorder %s152, %s154
      %p158 = scmp.eq.s32.totalorder %s40, 0
      %p159 = por %p157, %p158
      %p160 = scmp.ne.s32.totalorder %s152, %s154
      %p161 = scmp.eq.s32.totalorder %s45, 1
      %p162 = por %p160, %p161
      %p163 = scmp.ne.s32.totalorder %s154, %s155
      %p164 = scmp.eq.s32.totalorder %s45, 0
      %p165 = por %p163, %p164
      %p166 = scmp.ne.s32.totalorder %s154, %s155
      %p167 = scmp.eq.s32.totalorder %s46, 1
      %p168 = por %p166, %p167
      %p170 = scmp.ne.s32.totalorder %s155, %s169
      %p171 = scmp.eq.s32.totalorder %s46, 0
      %p172 = por %p170, %p171
      %s174 = sadd.s32 %s173, 1
      %p177 = scmp.eq.s32.totalorder %s40, 1
      %p178 = scmp.ne.s32.totalorder %s173, %s175
      %p179 = scmp.eq.s32.totalorder %s40, 0
      %p180 = por %p178, %p179
      %p181 = scmp.ne.s32.totalorder %s173, %s175
      %p182 = scmp.eq.s32.totalorder %s45, 1
      %p183 = por %p181, %p182
      %p184 = scmp.ne.s32.totalorder %s175, %s176
      %p185 = scmp.eq.s32.totalorder %s45, 0
      %p186 = por %p184, %p185
      %p187 = scmp.ne.s32.totalorder %s175, %s176
      %p188 = scmp.eq.s32.totalorder %s46, 1
      %p189 = por %p187, %p188
      %p191 = scmp.ne.s32.totalorder %s176, %s190
      %p192 = scmp.eq.s32.totalorder %s46, 0
      %p193 = por %p191, %p192
      %s195 = sadd.s32 %s194, 1
      %p198 = scmp.eq.s32.totalorder %s40, 1
      %p199 = scmp.ne.s32.totalorder %s194, %s196
      %p200 = scmp.eq.s32.totalorder %s40, 0
      %p201 = por %p199, %p200
      %p202 = scmp.ne.s32.totalorder %s194, %s196
      %p203 = scmp.eq.s32.totalorder %s45, 1
      %p204 = por %p202, %p203
      %p205 = scmp.ne.s32.totalorder %s196, %s197
      %p206 = scmp.eq.s32.totalorder %s45, 0
      %p207 = por %p205, %p206
      %p208 = scmp.ne.s32.totalorder %s196, %s197
      %p209 = scmp.eq.s32.totalorder %s46, 1
      %p210 = por %p208, %p209
      %p212 = scmp.ne.s32.totalorder %s197, %s211
      %p213 = scmp.eq.s32.totalorder %s46, 0
      %p214 = por %p212, %p213
      %s216 = sadd.s32 %s215, 1
      %p219 = scmp.eq.s32.totalorder %s40, 1
      %p220 = scmp.ne.s32.totalorder %s215, %s217
      %p221 = scmp.eq.s32.totalorder %s40, 0
      %p222 = por %p220, %p221
      %p223 = scmp.ne.s32.totalorder %s215, %s217
      %p224 = scmp.eq.s32.totalorder %s45, 1
      %p225 = por %p223, %p224
      %p226 = scmp.ne.s32.totalorder %s217, %s218
      %p227 = scmp.eq.s32.totalorder %s45, 0
      %p228 = por %p226, %p227
      %p229 = scmp.ne.s32.totalorder %s217, %s218
      %p230 = scmp.eq.s32.totalorder %s46, 1
      %p231 = por %p229, %p230
      %p233 = scmp.ne.s32.totalorder %s218, %s232
      %p234 = scmp.eq.s32.totalorder %s46, 0
      %p235 = por %p233, %p234
      %s237 = sadd.s32 %s236, 1
      %p240 = scmp.eq.s32.totalorder %s40, 1
      %p241 = scmp.ne.s32.totalorder %s236, %s238
      %p242 = scmp.eq.s32.totalorder %s40, 0
      %p243 = por %p241, %p242
      %p244 = scmp.ne.s32.totalorder %s236, %s238
      %p245 = scmp.eq.s32.totalorder %s45, 1
      %p246 = por %p244, %p245
      %p247 = scmp.ne.s32.totalorder %s238, %s239
      %p248 = scmp.eq.s32.totalorder %s45, 0
      %p249 = por %p247, %p248
      %p250 = scmp.ne.s32.totalorder %s238, %s239
      %p251 = scmp.eq.s32.totalorder %s46, 1
      %p252 = por %p250, %p251
      %p254 = scmp.ne.s32.totalorder %s239, %s253
      %p255 = scmp.eq.s32.totalorder %s46, 0
      %p256 = por %p254, %p255
      %s258 = sadd.s32 %s257, 1
      %p261 = scmp.eq.s32.totalorder %s40, 1
      %p262 = scmp.ne.s32.totalorder %s257, %s259
      %p263 = scmp.eq.s32.totalorder %s40, 0
      %p264 = por %p262, %p263
      %p265 = scmp.ne.s32.totalorder %s257, %s259
      %p266 = scmp.eq.s32.totalorder %s45, 1
      %p267 = por %p265, %p266
      %p268 = scmp.ne.s32.totalorder %s259, %s260
      %p269 = scmp.eq.s32.totalorder %s45, 0
      %p270 = por %p268, %p269
      %p271 = scmp.ne.s32.totalorder %s259, %s260
      %p272 = scmp.eq.s32.totalorder %s46, 1
      %p273 = por %p271, %p272
      %p275 = scmp.ne.s32.totalorder %s260, %s274
      %p276 = scmp.eq.s32.totalorder %s46, 0
      %p277 = por %p275, %p276
      %s279 = sadd.s32 %s278, 1
      %p282 = scmp.eq.s32.totalorder %s40, 1
      %p283 = scmp.ne.s32.totalorder %s278, %s280
      %p284 = scmp.eq.s32.totalorder %s40, 0
      %p285 = por %p283, %p284
      %p286 = scmp.ne.s32.totalorder %s278, %s280
      %p287 = scmp.eq.s32.totalorder %s45, 1
      %p288 = por %p286, %p287
      %p289 = scmp.ne.s32.totalorder %s280, %s281
      %p290 = scmp.eq.s32.totalorder %s45, 0
      %p291 = por %p289, %p290
      %p292 = scmp.ne.s32.totalorder %s280, %s281
      %p293 = scmp.eq.s32.totalorder %s46, 1
      %p294 = por %p292, %p293
      %p296 = scmp.ne.s32.totalorder %s281, %s295
      %p297 = scmp.eq.s32.totalorder %s46, 0
      %p298 = por %p296, %p297
      %s300 = sadd.s32 %s299, 1
      %p303 = scmp.eq.s32.totalorder %s40, 1
      %p304 = scmp.ne.s32.totalorder %s299, %s301
      %p305 = scmp.eq.s32.totalorder %s40, 0
      %p306 = por %p304, %p305
      %p307 = scmp.ne.s32.totalorder %s299, %s301
      %p308 = scmp.eq.s32.totalorder %s45, 1
      %p309 = por %p307, %p308
      %p310 = scmp.ne.s32.totalorder %s301, %s302
      %p311 = scmp.eq.s32.totalorder %s45, 0
      %p312 = por %p310, %p311
      %p313 = scmp.ne.s32.totalorder %s301, %s302
      %p314 = scmp.eq.s32.totalorder %s46, 1
      %p315 = por %p313, %p314
      %p317 = scmp.ne.s32.totalorder %s302, %s316
      %p318 = scmp.eq.s32.totalorder %s46, 0
      %p319 = por %p317, %p318
      %s321 = sadd.s32 %s320, 1
      %p324 = scmp.eq.s32.totalorder %s40, 1
      %p325 = scmp.ne.s32.totalorder %s320, %s322
      %p326 = scmp.eq.s32.totalorder %s40, 0
      %p327 = por %p325, %p326
      %p328 = scmp.ne.s32.totalorder %s320, %s322
      %p329 = scmp.eq.s32.totalorder %s45, 1
      %p330 = por %p328, %p329
      %p331 = scmp.ne.s32.totalorder %s322, %s323
      %p332 = scmp.eq.s32.totalorder %s45, 0
      %p333 = por %p331, %p332
      %p334 = scmp.ne.s32.totalorder %s322, %s323
      %p335 = scmp.eq.s32.totalorder %s46, 1
      %p336 = por %p334, %p335
      %p338 = scmp.ne.s32.totalorder %s323, %s337
      %p339 = scmp.eq.s32.totalorder %s46, 0
      %p340 = por %p338, %p339
      %s342 = sadd.s32 %s341, 1
      %p345 = scmp.eq.s32.totalorder %s40, 1
      %p346 = scmp.ne.s32.totalorder %s341, %s343
      %p347 = scmp.eq.s32.totalorder %s40, 0
      %p348 = por %p346, %p347
      %p349 = scmp.ne.s32.totalorder %s341, %s343
      %p350 = scmp.eq.s32.totalorder %s45, 1
      %p351 = por %p349, %p350
      %p352 = scmp.ne.s32.totalorder %s343, %s344
      %p353 = scmp.eq.s32.totalorder %s45, 0
      %p354 = por %p352, %p353
      %p355 = scmp.ne.s32.totalorder %s343, %s344
      %p356 = scmp.eq.s32.totalorder %s46, 1
      %p357 = por %p355, %p356
      %p359 = scmp.ne.s32.totalorder %s344, %s358
      %p360 = scmp.eq.s32.totalorder %s46, 0
      %p361 = por %p359, %p360
      %s363 = sadd.s32 %s362, 1
      %p366 = scmp.eq.s32.totalorder %s40, 1
      %p367 = scmp.ne.s32.totalorder %s362, %s364
      %p368 = scmp.eq.s32.totalorder %s40, 0
      %p369 = por %p367, %p368
      %p370 = scmp.ne.s32.totalorder %s362, %s364
      %p371 = scmp.eq.s32.totalorder %s45, 1
      %p372 = por %p370, %p371
      %p373 = scmp.ne.s32.totalorder %s364, %s365
      %p374 = scmp.eq.s32.totalorder %s45, 0
      %p375 = por %p373, %p374
      %p376 = scmp.ne.s32.totalorder %s364, %s365
      %p377 = scmp.eq.s32.totalorder %s46, 1
      %p378 = por %p376, %p377
      %p380 = scmp.ne.s32.totalorder %s365, %s379
      %p381 = scmp.eq.s32.totalorder %s46, 0
      %p382 = por %p380, %p381
      %s384 = sadd.s32 %s383, 1
      %p387 = scmp.eq.s32.totalorder %s40, 1
      %p388 = scmp.ne.s32.totalorder %s383, %s385
      %p389 = scmp.eq.s32.totalorder %s40, 0
      %p390 = por %p388, %p389
      %p391 = scmp.ne.s32.totalorder %s383, %s385
      %p392 = scmp.eq.s32.totalorder %s45, 1
      %p393 = por %p391, %p392
      %p394 = scmp.ne.s32.totalorder %s385, %s386
      %p395 = scmp.eq.s32.totalorder %s45, 0
      %p396 = por %p394, %p395
      %p397 = scmp.ne.s32.totalorder %s385, %s386
      %p398 = scmp.eq.s32.totalorder %s46, 1
      %p399 = por %p397, %p398
      %p401 = scmp.ne.s32.totalorder %s386, %s400
      %p402 = scmp.eq.s32.totalorder %s46, 0
      %p403 = por %p401, %p402
      %s405 = sadd.s32 %s404, 1
      %p408 = scmp.eq.s32.totalorder %s40, 1
      %p409 = scmp.ne.s32.totalorder %s404, %s406
      %p410 = scmp.eq.s32.totalorder %s40, 0
      %p411 = por %p409, %p410
      %p412 = scmp.ne.s32.totalorder %s404, %s406
      %p413 = scmp.eq.s32.totalorder %s45, 1
      %p414 = por %p412, %p413
      %p415 = scmp.ne.s32.totalorder %s406, %s407
      %p416 = scmp.eq.s32.totalorder %s45, 0
      %p417 = por %p415, %p416
      %p418 = scmp.ne.s32.totalorder %s406, %s407
      %p419 = scmp.eq.s32.totalorder %s46, 1
      %p420 = por %p418, %p419
      %p422 = scmp.ne.s32.totalorder %s407, %s421
      %p423 = scmp.eq.s32.totalorder %s46, 0
      %p424 = por %p422, %p423
      %s426 = sadd.s32 %s425, 1
      %p429 = scmp.eq.s32.totalorder %s40, 1
      %p430 = scmp.ne.s32.totalorder %s425, %s427
      %p431 = scmp.eq.s32.totalorder %s40, 0
      %p432 = por %p430, %p431
      %p433 = scmp.ne.s32.totalorder %s425, %s427
      %p434 = scmp.eq.s32.totalorder %s45, 1
      %p435 = por %p433, %p434
      %p436 = scmp.ne.s32.totalorder %s427, %s428
      %p437 = scmp.eq.s32.totalorder %s45, 0
      %p438 = por %p436, %p437
      %p439 = scmp.ne.s32.totalorder %s427, %s428
      %p440 = scmp.eq.s32.totalorder %s46, 1
      %p441 = por %p439, %p440
      %p443 = scmp.ne.s32.totalorder %s428, %s442
      %p444 = scmp.eq.s32.totalorder %s46, 0
      %p445 = por %p443, %p444
      %s447 = sadd.s32 %s446, 1
      %p450 = scmp.eq.s32.totalorder %s40, 1
      %p451 = scmp.ne.s32.totalorder %s446, %s448
      %p452 = scmp.eq.s32.totalorder %s40, 0
      %p453 = por %p451, %p452
      %p454 = scmp.ne.s32.totalorder %s446, %s448
      %p455 = scmp.eq.s32.totalorder %s45, 1
      %p456 = por %p454, %p455
      %p457 = scmp.ne.s32.totalorder %s448, %s449
      %p458 = scmp.eq.s32.totalorder %s45, 0
      %p459 = por %p457, %p458
      %p460 = scmp.ne.s32.totalorder %s448, %s449
      %p461 = scmp.eq.s32.totalorder %s46, 1
      %p462 = por %p460, %p461
      %p464 = scmp.ne.s32.totalorder %s449, %s463
      %p465 = scmp.eq.s32.totalorder %s46, 0
      %p466 = por %p464, %p465
      %s468 = sadd.s32 %s467, 1
      %p471 = scmp.eq.s32.totalorder %s40, 1
      %p472 = scmp.ne.s32.totalorder %s467, %s469
      %p473 = scmp.eq.s32.totalorder %s40, 0
      %p474 = por %p472, %p473
      %p475 = scmp.ne.s32.totalorder %s467, %s469
      %p476 = scmp.eq.s32.totalorder %s45, 1
      %p477 = por %p475, %p476
      %p478 = scmp.ne.s32.totalorder %s469, %s470
      %p479 = scmp.eq.s32.totalorder %s45, 0
      %p480 = por %p478, %p479
      %p481 = scmp.ne.s32.totalorder %s469, %s470
      %p482 = scmp.eq.s32.totalorder %s46, 1
      %p483 = por %p481, %p482
      %p485 = scmp.ne.s32.totalorder %s470, %s484
      %p486 = scmp.eq.s32.totalorder %s46, 0
      %p487 = por %p485, %p486
      %s489 = sadd.s32 %s488, 1
      %p492 = scmp.eq.s32.totalorder %s40, 1
      %p493 = scmp.ne.s32.totalorder %s488, %s490
      %p494 = scmp.eq.s32.totalorder %s40, 0
      %p495 = por %p493, %p494
      %p496 = scmp.ne.s32.totalorder %s488, %s490
      %p497 = scmp.eq.s32.totalorder %s45, 1
      %p498 = por %p496, %p497
      %p499 = scmp.ne.s32.totalorder %s490, %s491
      %p500 = scmp.eq.s32.totalorder %s45, 0
      %p501 = por %p499, %p500
      %p502 = scmp.ne.s32.totalorder %s490, %s491
      %p503 = scmp.eq.s32.totalorder %s46, 1
      %p504 = por %p502, %p503
      %p506 = scmp.ne.s32.totalorder %s491, %s505
      %p507 = scmp.eq.s32.totalorder %s46, 0
      %p508 = por %p506, %p507
      %s509 = ssub.s32 %s40, %s47
      %p510 = scmp.eq.s32.totalorder %s509, 0
      %s512 = sadd.s32 %s511, 1
      %s513 = scalar_select %p510, %s511, %s512
      %p516 = pneg %p510
      %p517 = scmp.eq.s32.totalorder %s40, 1
      %p518 = por %p516, %p517
      %p519 = scmp.ne.s32.totalorder %s511, %s514
      %p520 = scmp.eq.s32.totalorder %s40, 0
      %p521 = por %p519, %p520
      %p522 = scmp.ne.s32.totalorder %s511, %s514
      %p523 = scmp.eq.s32.totalorder %s45, 1
      %p524 = por %p522, %p523
      %p525 = scmp.ne.s32.totalorder %s514, %s515
      %p526 = scmp.eq.s32.totalorder %s45, 0
      %p527 = por %p525, %p526
      %p528 = scmp.ne.s32.totalorder %s514, %s515
      %p529 = scmp.eq.s32.totalorder %s46, 1
      %p530 = por %p528, %p529
      %p532 = scmp.ne.s32.totalorder %s515, %s531
      %p533 = scmp.eq.s32.totalorder %s46, 0
      %p534 = por %p532, %p533
      %p535 = scmp.le.s32.totalorder 1, %s40
      %p536 = scmp.lt.s32.totalorder %s40, 3
      %p537 = pnand %p535, %p536
      %p538 = pneg %p537
      // Predicated region
      $region9: #{decoder_block.1} parent=5 // pred_check
        _
      $region10: #{decoder_block.1} parent=5 // pred_check_branch
        %540 = sbr.rel (%p537) target = $region12
      $region11: #{decoder_block.1} parent=5 // pred_region
        %s541 = ssub.s32 %s40, 1
        // Predicated region
        $region13: #{decoder_block.1} parent=11 // pred_check
          %p542 = pneg %p165
        $region14: #{decoder_block.1} parent=11 // pred_check_branch
          %544 = sbr.rel (%p542) target = $region16
        $region15: #{decoder_block.1} parent=11 // pred_region
          %s546 = ssub.s32 32, 32
          %547 = vsyncadd [#allocation6], %s546
          %s549 = sshll.u32 [#allocation7], 4
          %s550 = int_to_ptr.vmem [resolvable:$true] %s549
          %552 = dma.hbm_to_vmem [thread:$0]  %s4, 32, %s550, [#allocation6]
        $region16: #{decoder_block.1} parent=11 // pred_fallthru
          _
        // Predicated region
        $region17: #{decoder_block.1} parent=11 // pred_check
          %p553 = pneg %p186
        $region18: #{decoder_block.1} parent=11 // pred_check_branch
          %555 = sbr.rel (%p553) target = $region20
        $region19: #{decoder_block.1} parent=11 // pred_region
          _
        $region20: #{decoder_block.1} parent=11 // pred_fallthru
          _
        // Predicated region
        $region21: #{decoder_block.1} parent=11 // pred_check
          %p556 = pneg %p207
        $region22: #{decoder_block.1} parent=11 // pred_check_branch
          %558 = sbr.rel (%p556) target = $region24
        $region23: #{decoder_block.1} parent=11 // pred_region
          _
        $region24: #{decoder_block.1} parent=11 // pred_fallthru
          _
        // Predicated region
        $region25: #{decoder_block.1} parent=11 // pred_check
          %p559 = pneg %p228
        $region26: #{decoder_block.1} parent=11 // pred_check_branch
          %561 = sbr.rel (%p559) target = $region28
        $region27: #{decoder_block.1} parent=11 // pred_region
          _
        $region28: #{decoder_block.1} parent=11 // pred_fallthru
          _
        // Predicated region
        $region29: #{decoder_block.1} parent=11 // pred_check
          %p562 = pneg %p249
        $region30: #{decoder_block.1} parent=11 // pred_check_branch
          %564 = sbr.rel (%p562) target = $region32
        $region31: #{decoder_block.1} parent=11 // pred_region
          %s566 = ssub.s32 16, 16
          %567 = vsyncadd [#allocation9], %s566
          %s569 = sshll.u32 [#allocation8], 4
          %s570 = int_to_ptr.vmem [resolvable:$true] %s569
          %572 = dma.hbm_to_vmem [thread:$0]  %s8, 16, %s570, [#allocation9]
        $region32: #{decoder_block.1} parent=11 // pred_fallthru
          _
        // Predicated region
        $region33: #{decoder_block.1} parent=11 // pred_check
          %p573 = pneg %p270
        $region34: #{decoder_block.1} parent=11 // pred_check_branch
          %575 = sbr.rel (%p573) target = $region36
        $region35: #{decoder_block.1} parent=11 // pred_region
          _
        $region36: #{decoder_block.1} parent=11 // pred_fallthru
          _
        // Predicated region
        $region37: #{decoder_block.1} parent=11 // pred_check
          %p576 = pneg %p291
        $region38: #{decoder_block.1} parent=11 // pred_check_branch
          %578 = sbr.rel (%p576) target = $region40
        $region39: #{decoder_block.1} parent=11 // pred_region
          _
        $region40: #{decoder_block.1} parent=11 // pred_fallthru
          _
        // Predicated region
        $region41: #{decoder_block.1} parent=11 // pred_check
          %p579 = pneg %p312
        $region42: #{decoder_block.1} parent=11 // pred_check_branch
          %581 = sbr.rel (%p579) target = $region44
        $region43: #{decoder_block.1} parent=11 // pred_region
          %s583 = ssub.s32 16, 16
          %584 = vsyncadd [#allocation9], %s583
          %s586 = sshll.u32 [#allocation10], 4
          %s587 = int_to_ptr.vmem [resolvable:$true] %s586
          %589 = dma.hbm_to_vmem [thread:$0]  %s11, 16, %s587, [#allocation9]
        $region44: #{decoder_block.1} parent=11 // pred_fallthru
          _
        // Predicated region
        $region45: #{decoder_block.1} parent=11 // pred_check
          %p590 = pneg %p333
        $region46: #{decoder_block.1} parent=11 // pred_check_branch
          %592 = sbr.rel (%p590) target = $region48
        $region47: #{decoder_block.1} parent=11 // pred_region
          _
        $region48: #{decoder_block.1} parent=11 // pred_fallthru
          _
        // Predicated region
        $region49: #{decoder_block.1} parent=11 // pred_check
          %p593 = pneg %p354
        $region50: #{decoder_block.1} parent=11 // pred_check_branch
          %595 = sbr.rel (%p593) target = $region52
        $region51: #{decoder_block.1} parent=11 // pred_region
          %s597 = ssub.s32 16, 16
          %598 = vsyncadd [#allocation12], %s597
          %s600 = sshll.u32 [#allocation11], 4
          %s601 = int_to_ptr.vmem [resolvable:$true] %s600
          %603 = dma.hbm_to_vmem [thread:$0]  %s13, 16, %s601, [#allocation12]
        $region52: #{decoder_block.1} parent=11 // pred_fallthru
          _
        // Predicated region
        $region53: #{decoder_block.1} parent=11 // pred_check
          %p604 = pneg %p375
        $region54: #{decoder_block.1} parent=11 // pred_check_branch
          %606 = sbr.rel (%p604) target = $region56
        $region55: #{decoder_block.1} parent=11 // pred_region
          _
        $region56: #{decoder_block.1} parent=11 // pred_fallthru
          _
        // Predicated region
        $region57: #{decoder_block.1} parent=11 // pred_check
          %p607 = pneg %p396
        $region58: #{decoder_block.1} parent=11 // pred_check_branch
          %609 = sbr.rel (%p607) target = $region60
        $region59: #{decoder_block.1} parent=11 // pred_region
          %s611 = ssub.s32 16, 16
          %612 = vsyncadd [#allocation12], %s611
          %s614 = sshll.u32 [#allocation13], 4
          %s615 = int_to_ptr.vmem [resolvable:$true] %s614
          %617 = dma.hbm_to_vmem [thread:$0]  %s15, 16, %s615, [#allocation12]
        $region60: #{decoder_block.1} parent=11 // pred_fallthru
          _
        // Predicated region
        $region61: #{decoder_block.1} parent=11 // pred_check
          %p618 = pneg %p417
        $region62: #{decoder_block.1} parent=11 // pred_check_branch
          %620 = sbr.rel (%p618) target = $region64
        $region63: #{decoder_block.1} parent=11 // pred_region
          _
        $region64: #{decoder_block.1} parent=11 // pred_fallthru
          _
        // Predicated region
        $region65: #{decoder_block.1} parent=11 // pred_check
          %p621 = pneg %p438
        $region66: #{decoder_block.1} parent=11 // pred_check_branch
          %623 = sbr.rel (%p621) target = $region68
        $region67: #{decoder_block.1} parent=11 // pred_region
          %s625 = ssub.s32 512, 512
          %626 = vsyncadd [#allocation15], %s625
          %s627 = sshll.u32 [#allocation14], 4
          %s628 = int_to_ptr.vmem [resolvable:$true] %s627
          %633 = dma.hbm_to_vmem [thread:$0]  %s17, 512, %s628, [#allocation15], 128, 128, 8
        $region68: #{decoder_block.1} parent=11 // pred_fallthru
          _
        // Predicated region
        $region69: #{decoder_block.1} parent=11 // pred_check
          %p634 = pneg %p459
        $region70: #{decoder_block.1} parent=11 // pred_check_branch
          %636 = sbr.rel (%p634) target = $region72
        $region71: #{decoder_block.1} parent=11 // pred_region
          %s638 = ssub.s32 16, 16
          %639 = vsyncadd [#allocation15], %s638
          %s641 = sshll.u32 [#allocation16], 4
          %s642 = int_to_ptr.vmem [resolvable:$true] %s641
          %644 = dma.hbm_to_vmem [thread:$0]  %s18, 16, %s642, [#allocation15]
        $region72: #{decoder_block.1} parent=11 // pred_fallthru
          _
        // Predicated region
        $region73: #{decoder_block.1} parent=11 // pred_check
          %p645 = pneg %p480
        $region74: #{decoder_block.1} parent=11 // pred_check_branch
          %647 = sbr.rel (%p645) target = $region76
        $region75: #{decoder_block.1} parent=11 // pred_region
          _
        $region76: #{decoder_block.1} parent=11 // pred_fallthru
          _
        // Predicated region
        $region77: #{decoder_block.1} parent=11 // pred_check
          %p648 = pneg %p501
        $region78: #{decoder_block.1} parent=11 // pred_check_branch
          %650 = sbr.rel (%p648) target = $region80
        $region79: #{decoder_block.1} parent=11 // pred_region
          %s652 = ssub.s32 16, 16
          %653 = vsyncadd [#allocation18], %s652
          %s655 = sshll.u32 [#allocation17], 4
          %s656 = int_to_ptr.vmem [resolvable:$true] %s655
          %658 = dma.hbm_to_vmem [thread:$0]  %s20, 16, %s656, [#allocation18]
        $region80: #{decoder_block.1} parent=11 // pred_fallthru
          _
      $region12: #{decoder_block.1} parent=5 // pred_fallthru
        _
      %p659 = scmp.lt.s32.totalorder %s40, 2
      // Predicated region
      $region81: #{decoder_block.1} parent=5 // pred_check
        %p660 = pneg %p659
      $region82: #{decoder_block.1} parent=5 // pred_check_branch
        %662 = sbr.rel (%p660) target = $region84
      $region83: #{decoder_block.1} parent=5 // pred_region
        // Predicated region
        $region85: #{decoder_block.1} parent=83 // pred_check
          %p663 = pneg %p60
        $region86: #{decoder_block.1} parent=83 // pred_check_branch
          %665 = sbr.rel (%p663) target = $region88
        $region87: #{decoder_block.1} parent=83 // pred_region
          %s666 = sand.u32 %s50, 1
          %s667 = scalar_lea.sflag [#allocation3], %s666
          %s668 = sand.u32 %s50, 1
          %s669 = smul.addr %s668, 8
          %s670 = scalar_lea.vmem [#allocation2], %s669
          %s672 = ssub.s32 128, 128
          %673 = vsyncadd %s667, %s672
          %s674 = smul.addr %s40, 128
          %s675 = scalar_lea.hbm %s0, %s674
          %s677 = sshll.u32 %s670, 4
          %s678 = int_to_ptr.vmem [resolvable:$true] %s677
          %680 = dma.hbm_to_vmem [thread:$0]  %s675, 128, %s678, %s667
        $region88: #{decoder_block.1} parent=83 // pred_fallthru
          _
        // Predicated region
        $region89: #{decoder_block.1} parent=83 // pred_check
          %p681 = pneg %p86
        $region90: #{decoder_block.1} parent=83 // pred_check_branch
          %683 = sbr.rel (%p681) target = $region92
        $region91: #{decoder_block.1} parent=83 // pred_region
          %s684 = sand.u32 %s40, 1
          %s685 = scalar_lea.sflag [#allocation6], %s684
          %s686 = sand.u32 %s76, 1
          %s687 = smul.addr %s686, 8
          %s688 = scalar_lea.vmem [#allocation5], %s687
          %s690 = ssub.s32 128, 128
          %691 = vsyncadd %s685, %s690
          %s692 = smul.addr %s40, 128
          %s693 = scalar_lea.hbm %s1, %s692
          %s695 = sshll.u32 %s688, 4
          %s696 = int_to_ptr.vmem [resolvable:$true] %s695
          %698 = dma.hbm_to_vmem [thread:$0]  %s693, 128, %s696, %s685
        $region92: #{decoder_block.1} parent=83 // pred_fallthru
          _
        // Predicated region
        $region93: #{decoder_block.1} parent=83 // pred_check
          %p699 = pneg %p112
        $region94: #{decoder_block.1} parent=83 // pred_check_branch
          %701 = sbr.rel (%p699) target = $region96
        $region95: #{decoder_block.1} parent=83 // pred_region
          %p702 = scmp.lt.s32.totalorder %s40, 1
          %s703 = scalar_select %p702, %s40, 1
          %s704 = smul.addr %s703, 8
          %s705 = scalar_lea.vmem %s2, %s704
        $region96: #{decoder_block.1} parent=83 // pred_fallthru
          _
        // Predicated region
        $region97: #{decoder_block.1} parent=83 // pred_check
          %p706 = pneg %p138
        $region98: #{decoder_block.1} parent=83 // pred_check_branch
          %708 = sbr.rel (%p706) target = $region100
        $region99: #{decoder_block.1} parent=83 // pred_region
          %p709 = scmp.lt.s32.totalorder %s40, 1
          %s710 = scalar_select %p709, %s40, 1
          %s711 = smul.addr %s710, 8
          %s712 = scalar_lea.vmem %s3, %s711
        $region100: #{decoder_block.1} parent=83 // pred_fallthru
          _
      $region84: #{decoder_block.1} parent=5 // pred_fallthru
        _
      %p713 = scmp.le.s32.totalorder 1, %s40
      %p714 = scmp.lt.s32.totalorder %s40, 3
      %p715 = pnand %p713, %p714
      %p716 = pneg %p715
      // Predicated region
      $region101: #{decoder_block.1} parent=5 // pred_check
        _
      $region102: #{decoder_block.1} parent=5 // pred_check_branch
        %718 = sbr.rel (%p715) target = $region104
      $region103: #{decoder_block.1} parent=5 // pred_region
        %s719 = ssub.s32 %s40, 1
        %s720 = sand.u32 %s53, 1
        %s721 = scalar_lea.sflag [#allocation3], %s720
        %s722 = sand.u32 %s53, 1
        %s723 = smul.addr %s722, 8
        %s724 = scalar_lea.vmem [#allocation2], %s723
        // Predicated region
        $region105: #{decoder_block.1} parent=103 // pred_check
          %p725 = pneg %p66
        $region106: #{decoder_block.1} parent=103 // pred_check_branch
          %727 = sbr.rel (%p725) target = $region108
        $region107: #{decoder_block.1} parent=103 // pred_region
          %728 = dma.done %s721, 128
        $region108: #{decoder_block.1} parent=103 // pred_fallthru
          _
        %s729 = sand.u32 %s45, 1
        %s730 = scalar_lea.sflag [#allocation6], %s729
        %s731 = sand.u32 %s79, 1
        %s732 = smul.addr %s731, 8
        %s733 = scalar_lea.vmem [#allocation5], %s732
        // Predicated region
        $region109: #{decoder_block.1} parent=103 // pred_check
          %p734 = pneg %p92
        $region110: #{decoder_block.1} parent=103 // pred_check_branch
          %736 = sbr.rel (%p734) target = $region112
        $region111: #{decoder_block.1} parent=103 // pred_region
          %737 = dma.done %s730, 128
        $region112: #{decoder_block.1} parent=103 // pred_fallthru
          _
        // Predicated region
        $region113: #{decoder_block.1} parent=103 // pred_check
          %p738 = pneg %p165
        $region114: #{decoder_block.1} parent=103 // pred_check_branch
          %740 = sbr.rel (%p738) target = $region116
        $region115: #{decoder_block.1} parent=103 // pred_region
          %741 = dma.done [#allocation6], 32
        $region116: #{decoder_block.1} parent=103 // pred_fallthru
          _
        // Predicated region
        $region117: #{decoder_block.1} parent=103 // pred_check
          %p742 = pneg %p249
        $region118: #{decoder_block.1} parent=103 // pred_check_branch
          %744 = sbr.rel (%p742) target = $region120
        $region119: #{decoder_block.1} parent=103 // pred_region
          %745 = dma.done [#allocation9], 16
        $region120: #{decoder_block.1} parent=103 // pred_fallthru
          _
        // Predicated region
        $region121: #{decoder_block.1} parent=103 // pred_check
          %p746 = pneg %p312
        $region122: #{decoder_block.1} parent=103 // pred_check_branch
          %748 = sbr.rel (%p746) target = $region124
        $region123: #{decoder_block.1} parent=103 // pred_region
          %749 = dma.done [#allocation9], 16
        $region124: #{decoder_block.1} parent=103 // pred_fallthru
          _
        // Predicated region
        $region125: #{decoder_block.1} parent=103 // pred_check
          %p750 = pneg %p354
        $region126: #{decoder_block.1} parent=103 // pred_check_branch
          %752 = sbr.rel (%p750) target = $region128
        $region127: #{decoder_block.1} parent=103 // pred_region
          %753 = dma.done [#allocation12], 16
        $region128: #{decoder_block.1} parent=103 // pred_fallthru
          _
        // Predicated region
        $region129: #{decoder_block.1} parent=103 // pred_check
          %p754 = pneg %p396
        $region130: #{decoder_block.1} parent=103 // pred_check_branch
          %756 = sbr.rel (%p754) target = $region132
        $region131: #{decoder_block.1} parent=103 // pred_region
          %757 = dma.done [#allocation12], 16
        $region132: #{decoder_block.1} parent=103 // pred_fallthru
          _
        // Predicated region
        $region133: #{decoder_block.1} parent=103 // pred_check
          %p758 = pneg %p438
        $region134: #{decoder_block.1} parent=103 // pred_check_branch
          %760 = sbr.rel (%p758) target = $region136
        $region135: #{decoder_block.1} parent=103 // pred_region
          %761 = dma.done [#allocation15], 512
        $region136: #{decoder_block.1} parent=103 // pred_fallthru
          _
        // Predicated region
        $region137: #{decoder_block.1} parent=103 // pred_check
          %p762 = pneg %p459
        $region138: #{decoder_block.1} parent=103 // pred_check_branch
          %764 = sbr.rel (%p762) target = $region140
        $region139: #{decoder_block.1} parent=103 // pred_region
          %765 = dma.done [#allocation15], 16
        $region140: #{decoder_block.1} parent=103 // pred_fallthru
          _
        // Predicated region
        $region141: #{decoder_block.1} parent=103 // pred_check
          %p766 = pneg %p501
        $region142: #{decoder_block.1} parent=103 // pred_check_branch
          %768 = sbr.rel (%p766) target = $region144
        $region143: #{decoder_block.1} parent=103 // pred_region
          %769 = dma.done [#allocation18], 16
        $region144: #{decoder_block.1} parent=103 // pred_fallthru
          _
        %s770 = sand.u32 %s53, 1
        %s771 = scalar_lea.sflag [#allocation3], %s770
        %s772 = sand.u32 %s53, 1
        %s773 = smul.addr %s772, 8
        %s774 = scalar_lea.vmem [#allocation2], %s773
        %p775 = pneg %p66
        %p776 = pneg %p63
        %s777 = sand.u32 %s45, 1
        %s778 = scalar_lea.sflag [#allocation6], %s777
        %s779 = sand.u32 %s79, 1
        %s780 = smul.addr %s779, 8
        %s781 = scalar_lea.vmem [#allocation5], %s780
        %p782 = pneg %p92
        %p783 = pneg %p89
        %p784 = scmp.lt.s32.totalorder %s45, 1
        %s785 = scalar_select %p784, %s45, 1
        %s786 = smul.addr %s785, 8
        %s787 = scalar_lea.vmem %s2, %s786
        %p788 = pneg %p118
        %p789 = pneg %p115
        %p790 = scmp.lt.s32.totalorder %s45, 1
        %s791 = scalar_select %p790, %s45, 1
        %s792 = smul.addr %s791, 8
        %s793 = scalar_lea.vmem %s3, %s792
        %p794 = pneg %p144
        %p795 = pneg %p141
        %p796 = pneg %p165
        %p797 = pneg %p162
        %p798 = pneg %p186
        %p799 = pneg %p183
        %p800 = pneg %p207
        %p801 = pneg %p204
        %p802 = pneg %p228
        %p803 = pneg %p225
        %p804 = pneg %p249
        %p805 = pneg %p246
        %p806 = pneg %p270
        %p807 = pneg %p267
        %p808 = pneg %p291
        %p809 = pneg %p288
        %p810 = pneg %p312
        %p811 = pneg %p309
        %p812 = pneg %p333
        %p813 = pneg %p330
        %p814 = pneg %p354
        %p815 = pneg %p351
        %p816 = pneg %p375
        %p817 = pneg %p372
        %p818 = pneg %p396
        %p819 = pneg %p393
        %p820 = pneg %p417
        %p821 = pneg %p414
        %p822 = pneg %p438
        %p823 = pneg %p435
        %p824 = pneg %p459
        %p825 = pneg %p456
        %p826 = pneg %p480
        %p827 = pneg %p477
        %p828 = pneg %p501
        %p829 = pneg %p498
        %p830 = pneg %p527
        %p831 = pneg %p524
        %s832 = sand.u32 %s514, 1
        %s833 = scalar_lea.sflag [#allocation4], %s832
        %s834 = sand.u32 %s514, 1
        %s835 = smul.addr %s834, 8
        %s836 = scalar_lea.vmem [#allocation19], %s835
        %p837 = scmp.lt.s32.totalorder %s45, 1
        %s838 = scalar_select %p837, %s45, 1
        %s839 = smul.addr %s838, 8
        %s840 = scalar_lea.vmem %s2, %s839
        %p841 = scmp.lt.s32.totalorder %s45, 1
        %s842 = scalar_select %p841, %s45, 1
        %s843 = smul.addr %s842, 8
        %s844 = scalar_lea.vmem %s3, %s843
        %v845 = vld [vmem:[%s724] sm:$0xff]
        %v846 = vld [vmem:[%s733] sm:$0xff]
        %v847 = vld [vmem:[%s840] sm:$0xff]
        %v848 = vld [vmem:[%s844] sm:$0xff]
        %v849 = vld [vmem:[#allocation7] sm:$0x3]
        %vm850 = vcmask 261120
        %v851 = vsel %vm850, %v845, 0.0
        %852 = vadd.xlane.f32.xlu0 %v851
        %v853 = vpop.xlane.xlu0 %852
        %v854 = vrcp.pop 32.0
        %v855 = vmul.f32 %v853, %v854
        %v856 = vsub.f32 %v845, %v855
        %v857 = vmul.f32 %v856, %v856
        %v858 = vsel %vm850, %v857, 0.0
        %859 = vadd.xlane.f32.xlu0 %v858
        %v860 = vpop.xlane.xlu0 %859
        %v861 = vmul.f32 %v860, 0.032258064
        %v862 = vrsqrt.pop %v861
        %v863 = vmul.f32 %v861, %v862
        %vm864 = vcmp.eq.f32.partialorder %v861, inf
        %v865 = vsel %vm864, %v861, %v863
        %vm866 = vcmp.eq.f32.partialorder %v861, 0.0
        %v867 = vand.u32 %v861, 2147483648
        %v868 = vsel %vm866, %v867, %v865
        %v869 = vadd.f32 %v868, 1e-06
        %v870 = vrcp.pop %v869
        %v871 = vmul.f32 %v856, %v870
        %v872 = vlaneseq
        %v873 = vshrl.u32 %v872, 7
        %v874 = vsub.s32 0, %v873
        %v875 = vrot.slane %v849, %v874
        %v876 = vmul.f32 %v875, %v871
        %v877 = vlaneseq
        %v878 = vshrl.u32 %v877, 7
        %v879 = vsub.s32 1, %v878
        %v880 = vrot.slane %v849, %v879
        %v881 = vadd.f32 %v876, %v880
        %v882 = vld [vmem:[%s5] sm:$0xff]
        %v883 = vld [vmem:[%s5 + $0x8] sm:$0xff]
        %v884 = vld [vmem:[%s5 + $0x10] sm:$0xff]
        %v885 = vld [vmem:[%s5 + $0x18] sm:$0xff]
        %v886 = vld [vmem:[%s6] sm:$0x1]
        %v888 = vlaneseq
        %v889 = vshrl.u32 %v888, 7
        %v890 = vsub.s32 0, %v889
        %v891 = vrot.slane %v886, %v890
        %v894 = vsel %vm850, %v881, 0
        %896 = vmatprep.subr.mxu0 0.0
        %897 = vmatpush1.msra.mxu0 0.0
        %898 = vmatprep.subr.mxu0 0.0
        %899 = vmatpush1.msra.mxu0 0.0
        %900 = vmatprep.subr.mxu0 0.0
        %901 = vmatpush1.msra.mxu0 0.0
        %902 = vmatprep.subr.mxu0 0.0
        %903 = vmatpush1.msra.mxu0 0.0
        %904 = vmatprep.subr.mxu0 0.0
        %905 = vmatpush1.msra.mxu0 0.0
        %906 = vmatprep.subr.mxu0 0.0
        %907 = vmatpush1.msra.mxu0 0.0
        %908 = vmatprep.subr.mxu0 0.0
        %909 = vmatpush1.msra.mxu0 0.0
        %910 = vmatprep.subr.mxu0 0.0
        %911 = vmatpush1.msra.mxu0 0.0
        %912 = vmatprep.subr.mxu0 0.0
        %913 = vmatpush1.msra.mxu0 0.0
        %914 = vmatprep.subr.mxu0 0.0
        %915 = vmatpush1.msra.mxu0 0.0
        %916 = vmatprep.subr.mxu0 0.0
        %917 = vmatpush1.msra.mxu0 0.0
        %918 = vmatprep.subr.mxu0 0.0
        %919 = vmatpush1.msra.mxu0 0.0
        %920 = vmatprep.subr.mxu0 0.0
        %921 = vmatpush1.msra.mxu0 %v885
        %922 = vmatprep.subr.mxu0 0.0
        %923 = vmatpush1.msra.mxu0 %v884
        %924 = vmatprep.subr.mxu0 0.0
        %925 = vmatpush1.msra.mxu0 %v883
        %926 = vmatprep.subr.mxu0 0.0
        %927 = vmatpush1.msra.mxu0 %v882
        %928 = vmatprep.subr.mxu0 0.0
        %929 = vmatpush2.msra.mxu0 0.0
        %930 = vmatprep.subr.mxu0 0.0
        %931 = vmatpush2.msra.mxu0 0.0
        %932 = vmatprep.subr.mxu0 0.0
        %933 = vmatpush2.msra.mxu0 0.0
        %934 = vmatprep.subr.mxu0 0.0
        %935 = vmatpush2.msra.mxu0 0.0
        %936 = vmatprep.subr.mxu0 0.0
        %937 = vmatpush2.msra.mxu0 0.0
        %938 = vmatprep.subr.mxu0 0.0
        %939 = vmatpush2.msra.mxu0 0.0
        %940 = vmatprep.subr.mxu0 0.0
        %941 = vmatpush2.msra.mxu0 0.0
        %942 = vmatprep.subr.mxu0 0.0
        %943 = vmatpush2.msra.mxu0 0.0
        %944 = vmatprep.subr.mxu0 0.0
        %945 = vmatpush2.msra.mxu0 0.0
        %946 = vmatprep.subr.mxu0 0.0
        %947 = vmatpush2.msra.mxu0 0.0
        %948 = vmatprep.subr.mxu0 0.0
        %949 = vmatpush2.msra.mxu0 0.0
        %950 = vmatprep.subr.mxu0 0.0
        %951 = vmatpush2.msra.mxu0 0.0
        %952 = vmatprep.subr.mxu0 0.0
        %953 = vmatpush2.msra.mxu0 0.0
        %954 = vmatprep.subr.mxu0 0.0
        %955 = vmatpush2.msra.mxu0 0.0
        %956 = vmatprep.subr.mxu0 0.0
        %957 = vmatpush2.msra.mxu0 0.0
        %958 = vmatprep.subr.mxu0 0.0
        %959 = vmatpush2.msra.mxu0 0.0
        %960 = vmatprep.mubr.f32.mxu0 0.0
        %961 = vmatmul.mubr.f32.gmra.mxu0 %v894
        %v962 = vpop.f32.mrf.mxu0
        %v963 = vadd.f32 %v891, %v962
        %v964 = vpop.f32.mrf.mxu0
        %965 = vdwg.mxu0
        %v966 = vld [vmem:[%s7] sm:$0xff]
        %v967 = vld [vmem:[%s7 + $0x8] sm:$0xff]
        %v968 = vld [vmem:[%s7 + $0x10] sm:$0xff]
        %v969 = vld [vmem:[%s7 + $0x18] sm:$0xff]
        %v970 = vld [vmem:[#allocation8] sm:$0x1]
        %972 = vrot.lane.b32.xlu0 %v963, 96
        %v973 = vpop.permute.xlu0 %972
        %vm974 = vcmask 64512
        %v975 = vsel %vm974, %v963, 0
        %v977 = vsel %vm974, %v973, 0
        %979 = vmatprep.subr.mxu0 0.0
        %980 = vmatpush1.xpose.msra.mxu0 0.0
        %981 = vmatprep.subr.mxu0 0.0
        %982 = vmatpush1.xpose.msra.mxu0 0.0
        %983 = vmatprep.subr.mxu0 0.0
        %984 = vmatpush1.xpose.msra.mxu0 0.0
        %985 = vmatprep.subr.mxu0 0.0
        %986 = vmatpush1.xpose.msra.mxu0 0.0
        %987 = vmatprep.subr.mxu0 0.0
        %988 = vmatpush1.xpose.msra.mxu0 0.0
        %989 = vmatprep.subr.mxu0 0.0
        %990 = vmatpush1.xpose.msra.mxu0 0.0
        %991 = vmatprep.subr.mxu0 0.0
        %992 = vmatpush1.xpose.msra.mxu0 0.0
        %993 = vmatprep.subr.mxu0 0.0
        %994 = vmatpush1.xpose.msra.mxu0 0.0
        %995 = vmatprep.subr.mxu0 0.0
        %996 = vmatpush1.xpose.msra.mxu0 0.0
        %997 = vmatprep.subr.mxu0 0.0
        %998 = vmatpush1.xpose.msra.mxu0 0.0
        %999 = vmatprep.subr.mxu0 0.0
        %1000 = vmatpush1.xpose.msra.mxu0 0.0
        %1001 = vmatprep.subr.mxu0 0.0
        %1002 = vmatpush1.xpose.msra.mxu0 0.0
        %1003 = vmatprep.subr.mxu0 0.0
        %1004 = vmatpush1.xpose.msra.mxu0 0.0
        %1005 = vmatprep.subr.mxu0 0.0
        %1006 = vmatpush1.xpose.msra.mxu0 0.0
        %1007 = vmatprep.subr.mxu0 0.0
        %1008 = vmatpush1.xpose.msra.mxu0 0.0
        %1009 = vmatprep.subr.mxu0 0.0
        %1010 = vmatpush1.xpose.msra.mxu0 %v977
        %1011 = vmatprep.subr.mxu0 0.0
        %1012 = vmatpush2.xpose.msra.mxu0 0.0
        %1013 = vmatprep.subr.mxu0 0.0
        %1014 = vmatpush2.xpose.msra.mxu0 0.0
        %1015 = vmatprep.subr.mxu0 0.0
        %1016 = vmatpush2.xpose.msra.mxu0 0.0
        %1017 = vmatprep.subr.mxu0 0.0
        %1018 = vmatpush2.xpose.msra.mxu0 0.0
        %1019 = vmatprep.subr.mxu0 0.0
        %1020 = vmatpush2.xpose.msra.mxu0 0.0
        %1021 = vmatprep.subr.mxu0 0.0
        %1022 = vmatpush2.xpose.msra.mxu0 0.0
        %1023 = vmatprep.subr.mxu0 0.0
        %1024 = vmatpush2.xpose.msra.mxu0 0.0
        %1025 = vmatprep.subr.mxu0 0.0
        %1026 = vmatpush2.xpose.msra.mxu0 0.0
        %1027 = vmatprep.subr.mxu0 0.0
        %1028 = vmatpush2.xpose.msra.mxu0 0.0
        %1029 = vmatprep.subr.mxu0 0.0
        %1030 = vmatpush2.xpose.msra.mxu0 0.0
        %1031 = vmatprep.subr.mxu0 0.0
        %1032 = vmatpush2.xpose.msra.mxu0 0.0
        %1033 = vmatprep.subr.mxu0 0.0
        %1034 = vmatpush2.xpose.msra.mxu0 0.0
        %1035 = vmatprep.subr.mxu0 0.0
        %1036 = vmatpush2.xpose.msra.mxu0 0.0
        %1037 = vmatprep.subr.mxu0 0.0
        %1038 = vmatpush2.xpose.msra.mxu0 0.0
        %1039 = vmatprep.subr.mxu0 0.0
        %1040 = vmatpush2.xpose.msra.mxu0 0.0
        %1041 = vmatprep.subr.mxu0 0.0
        %1042 = vmatpush2.xpose.msra.mxu0 0.0
        %1043 = vmatprep.mubr.f32.mxu0 0.0
        %1044 = vmatmul.mubr.f32.gmra.mxu0 %v975
        %v1045 = vpop.f32.mrf.mxu0
        %v1046 = vadd.f32 0.0, %v1045
        %v1047 = vpop.f32.mrf.mxu0
        %1048 = vdwg.mxu0
        %v1049 = vmul.f32 %v1046, 0.35355338
        %vm1050 = vcmp.eq.f32.partialorder %v847, 0.0
        %v1051 = vsel %vm1050, -1e+09, %v1049
        %v1052 = vsel %vm974, %v1051, -inf
        %1053 = vmax.xlane.f32.xlu0 %v1052
        %v1054 = vpop.xlane.xlu0 %1053
        %v1055 = vsub.f32 %v1051, %v1054
        %v1056 = vmul.f32 %v1055, 1.442695
        %v1057 = vpow.pop %v1056
        %v1058 = vsel %vm974, %v1057, 0.0
        %1059 = vadd.xlane.f32.xlu0 %v1058
        %v1060 = vpop.xlane.xlu0 %1059
        %v1061 = vrcp.pop %v1060
        %v1062 = vmul.f32 %v1057, %v1061
        %1063 = vrot.lane.b32.xlu0 %v963, 64
        %v1064 = vpop.permute.xlu0 %1063
        %v1067 = vsel %vm974, %v1062, 0
        %1069 = vmatprep.subr.mxu0 0.0
        %1070 = vmatpush1.msra.mxu0 0.0
        %1071 = vmatprep.subr.mxu0 0.0
        %1072 = vmatpush1.msra.mxu0 0.0
        %1073 = vmatprep.subr.mxu0 0.0
        %1074 = vmatpush1.msra.mxu0 0.0
        %1075 = vmatprep.subr.mxu0 0.0
        %1076 = vmatpush1.msra.mxu0 0.0
        %1077 = vmatprep.subr.mxu0 0.0
        %1078 = vmatpush1.msra.mxu0 0.0
        %1079 = vmatprep.subr.mxu0 0.0
        %1080 = vmatpush1.msra.mxu0 0.0
        %1081 = vmatprep.subr.mxu0 0.0
        %1082 = vmatpush1.msra.mxu0 0.0
        %1083 = vmatprep.subr.mxu0 0.0
        %1084 = vmatpush1.msra.mxu0 0.0
        %1085 = vmatprep.subr.mxu0 0.0
        %1086 = vmatpush1.msra.mxu0 0.0
        %1087 = vmatprep.subr.mxu0 0.0
        %1088 = vmatpush1.msra.mxu0 0.0
        %1089 = vmatprep.subr.mxu0 0.0
        %1090 = vmatpush1.msra.mxu0 0.0
        %1091 = vmatprep.subr.mxu0 0.0
        %1092 = vmatpush1.msra.mxu0 0.0
        %1093 = vmatprep.subr.mxu0 0.0
        %1094 = vmatpush1.msra.mxu0 0.0
        %1095 = vmatprep.subr.mxu0 0.0
        %1096 = vmatpush1.msra.mxu0 0.0
        %1097 = vmatprep.subr.mxu0 0.0
        %1098 = vmatpush1.msra.mxu0 0.0
        %1099 = vmatprep.subr.mxu0 0.0
        %1100 = vmatpush1.msra.mxu0 %v1064
        %1101 = vmatprep.subr.mxu0 0.0
        %1102 = vmatpush2.msra.mxu0 0.0
        %1103 = vmatprep.subr.mxu0 0.0
        %1104 = vmatpush2.msra.mxu0 0.0
        %1105 = vmatprep.subr.mxu0 0.0
        %1106 = vmatpush2.msra.mxu0 0.0
        %1107 = vmatprep.subr.mxu0 0.0
        %1108 = vmatpush2.msra.mxu0 0.0
        %1109 = vmatprep.subr.mxu0 0.0
        %1110 = vmatpush2.msra.mxu0 0.0
        %1111 = vmatprep.subr.mxu0 0.0
        %1112 = vmatpush2.msra.mxu0 0.0
        %1113 = vmatprep.subr.mxu0 0.0
        %1114 = vmatpush2.msra.mxu0 0.0
        %1115 = vmatprep.subr.mxu0 0.0
        %1116 = vmatpush2.msra.mxu0 0.0
        %1117 = vmatprep.subr.mxu0 0.0
        %1118 = vmatpush2.msra.mxu0 0.0
        %1119 = vmatprep.subr.mxu0 0.0
        %1120 = vmatpush2.msra.mxu0 0.0
        %1121 = vmatprep.subr.mxu0 0.0
        %1122 = vmatpush2.msra.mxu0 0.0
        %1123 = vmatprep.subr.mxu0 0.0
        %1124 = vmatpush2.msra.mxu0 0.0
        %1125 = vmatprep.subr.mxu0 0.0
        %1126 = vmatpush2.msra.mxu0 0.0
        %1127 = vmatprep.subr.mxu0 0.0
        %1128 = vmatpush2.msra.mxu0 0.0
        %1129 = vmatprep.subr.mxu0 0.0
        %1130 = vmatpush2.msra.mxu0 0.0
        %1131 = vmatprep.subr.mxu0 0.0
        %1132 = vmatpush2.msra.mxu0 0.0
        %1133 = vmatprep.mubr.f32.mxu0 0.0
        %1134 = vmatmul.mubr.f32.gmra.mxu0 %v1067
        %v1135 = vpop.f32.mrf.mxu0
        %v1136 = vadd.f32 0.0, %v1135
        %v1137 = vpop.f32.mrf.mxu0
        %1138 = vdwg.mxu0
        %1139 = vrot.lane.b32.xlu0 %v963, 120
        %v1140 = vpop.permute.xlu0 %1139
        %1141 = vrot.lane.b32.xlu0 %v963, 88
        %v1142 = vpop.permute.xlu0 %1141
        %v1143 = vsel %vm974, %v1140, 0
        %v1145 = vsel %vm974, %v1142, 0
        %1147 = vmatprep.subr.mxu0 0.0
        %1148 = vmatpush1.xpose.msra.mxu0 0.0
        %1149 = vmatprep.subr.mxu0 0.0
        %1150 = vmatpush1.xpose.msra.mxu0 0.0
        %1151 = vmatprep.subr.mxu0 0.0
        %1152 = vmatpush1.xpose.msra.mxu0 0.0
        %1153 = vmatprep.subr.mxu0 0.0
        %1154 = vmatpush1.xpose.msra.mxu0 0.0
        %1155 = vmatprep.subr.mxu0 0.0
        %1156 = vmatpush1.xpose.msra.mxu0 0.0
        %1157 = vmatprep.subr.mxu0 0.0
        %1158 = vmatpush1.xpose.msra.mxu0 0.0
        %1159 = vmatprep.subr.mxu0 0.0
        %1160 = vmatpush1.xpose.msra.mxu0 0.0
        %1161 = vmatprep.subr.mxu0 0.0
        %1162 = vmatpush1.xpose.msra.mxu0 0.0
        %1163 = vmatprep.subr.mxu0 0.0
        %1164 = vmatpush1.xpose.msra.mxu0 0.0
        %1165 = vmatprep.subr.mxu0 0.0
        %1166 = vmatpush1.xpose.msra.mxu0 0.0
        %1167 = vmatprep.subr.mxu0 0.0
        %1168 = vmatpush1.xpose.msra.mxu0 0.0
        %1169 = vmatprep.subr.mxu0 0.0
        %1170 = vmatpush1.xpose.msra.mxu0 0.0
        %1171 = vmatprep.subr.mxu0 0.0
        %1172 = vmatpush1.xpose.msra.mxu0 0.0
        %1173 = vmatprep.subr.mxu0 0.0
        %1174 = vmatpush1.xpose.msra.mxu0 0.0
        %1175 = vmatprep.subr.mxu0 0.0
        %1176 = vmatpush1.xpose.msra.mxu0 0.0
        %1177 = vmatprep.subr.mxu0 0.0
        %1178 = vmatpush1.xpose.msra.mxu0 %v1145
        %1179 = vmatprep.subr.mxu0 0.0
        %1180 = vmatpush2.xpose.msra.mxu0 0.0
        %1181 = vmatprep.subr.mxu0 0.0
        %1182 = vmatpush2.xpose.msra.mxu0 0.0
        %1183 = vmatprep.subr.mxu0 0.0
        %1184 = vmatpush2.xpose.msra.mxu0 0.0
        %1185 = vmatprep.subr.mxu0 0.0
        %1186 = vmatpush2.xpose.msra.mxu0 0.0
        %1187 = vmatprep.subr.mxu0 0.0
        %1188 = vmatpush2.xpose.msra.mxu0 0.0
        %1189 = vmatprep.subr.mxu0 0.0
        %1190 = vmatpush2.xpose.msra.mxu0 0.0
        %1191 = vmatprep.subr.mxu0 0.0
        %1192 = vmatpush2.xpose.msra.mxu0 0.0
        %1193 = vmatprep.subr.mxu0 0.0
        %1194 = vmatpush2.xpose.msra.mxu0 0.0
        %1195 = vmatprep.subr.mxu0 0.0
        %1196 = vmatpush2.xpose.msra.mxu0 0.0
        %1197 = vmatprep.subr.mxu0 0.0
        %1198 = vmatpush2.xpose.msra.mxu0 0.0
        %1199 = vmatprep.subr.mxu0 0.0
        %1200 = vmatpush2.xpose.msra.mxu0 0.0
        %1201 = vmatprep.subr.mxu0 0.0
        %1202 = vmatpush2.xpose.msra.mxu0 0.0
        %1203 = vmatprep.subr.mxu0 0.0
        %1204 = vmatpush2.xpose.msra.mxu0 0.0
        %1205 = vmatprep.subr.mxu0 0.0
        %1206 = vmatpush2.xpose.msra.mxu0 0.0
        %1207 = vmatprep.subr.mxu0 0.0
        %1208 = vmatpush2.xpose.msra.mxu0 0.0
        %1209 = vmatprep.subr.mxu0 0.0
        %1210 = vmatpush2.xpose.msra.mxu0 0.0
        %1211 = vmatprep.mubr.f32.mxu0 0.0
        %1212 = vmatmul.mubr.f32.gmra.mxu0 %v1143
        %v1213 = vpop.f32.mrf.mxu0
        %v1214 = vadd.f32 0.0, %v1213
        %v1215 = vpop.f32.mrf.mxu0
        %1216 = vdwg.mxu0
        %v1217 = vmul.f32 %v1214, 0.35355338
        %v1218 = vsel %vm1050, -1e+09, %v1217
        %v1219 = vsel %vm974, %v1218, -inf
        %1220 = vmax.xlane.f32.xlu0 %v1219
        %v1221 = vpop.xlane.xlu0 %1220
        %v1222 = vsub.f32 %v1218, %v1221
        %v1223 = vmul.f32 %v1222, 1.442695
        %v1224 = vpow.pop %v1223
        %v1225 = vsel %vm974, %v1224, 0.0
        %1226 = vadd.xlane.f32.xlu0 %v1225
        %v1227 = vpop.xlane.xlu0 %1226
        %v1228 = vrcp.pop %v1227
        %v1229 = vmul.f32 %v1224, %v1228
        %1230 = vrot.lane.b32.xlu0 %v963, 56
        %v1231 = vpop.permute.xlu0 %1230
        %v1234 = vsel %vm974, %v1229, 0
        %1236 = vmatprep.subr.mxu0 0.0
        %1237 = vmatpush1.msra.mxu0 0.0
        %1238 = vmatprep.subr.mxu0 0.0
        %1239 = vmatpush1.msra.mxu0 0.0
        %1240 = vmatprep.subr.mxu0 0.0
        %1241 = vmatpush1.msra.mxu0 0.0
        %1242 = vmatprep.subr.mxu0 0.0
        %1243 = vmatpush1.msra.mxu0 0.0
        %1244 = vmatprep.subr.mxu0 0.0
        %1245 = vmatpush1.msra.mxu0 0.0
        %1246 = vmatprep.subr.mxu0 0.0
        %1247 = vmatpush1.msra.mxu0 0.0
        %1248 = vmatprep.subr.mxu0 0.0
        %1249 = vmatpush1.msra.mxu0 0.0
        %1250 = vmatprep.subr.mxu0 0.0
        %1251 = vmatpush1.msra.mxu0 0.0
        %1252 = vmatprep.subr.mxu0 0.0
        %1253 = vmatpush1.msra.mxu0 0.0
        %1254 = vmatprep.subr.mxu0 0.0
        %1255 = vmatpush1.msra.mxu0 0.0
        %1256 = vmatprep.subr.mxu0 0.0
        %1257 = vmatpush1.msra.mxu0 0.0
        %1258 = vmatprep.subr.mxu0 0.0
        %1259 = vmatpush1.msra.mxu0 0.0
        %1260 = vmatprep.subr.mxu0 0.0
        %1261 = vmatpush1.msra.mxu0 0.0
        %1262 = vmatprep.subr.mxu0 0.0
        %1263 = vmatpush1.msra.mxu0 0.0
        %1264 = vmatprep.subr.mxu0 0.0
        %1265 = vmatpush1.msra.mxu0 0.0
        %1266 = vmatprep.subr.mxu0 0.0
        %1267 = vmatpush1.msra.mxu0 %v1231
        %1268 = vmatprep.subr.mxu0 0.0
        %1269 = vmatpush2.msra.mxu0 0.0
        %1270 = vmatprep.subr.mxu0 0.0
        %1271 = vmatpush2.msra.mxu0 0.0
        %1272 = vmatprep.subr.mxu0 0.0
        %1273 = vmatpush2.msra.mxu0 0.0
        %1274 = vmatprep.subr.mxu0 0.0
        %1275 = vmatpush2.msra.mxu0 0.0
        %1276 = vmatprep.subr.mxu0 0.0
        %1277 = vmatpush2.msra.mxu0 0.0
        %1278 = vmatprep.subr.mxu0 0.0
        %1279 = vmatpush2.msra.mxu0 0.0
        %1280 = vmatprep.subr.mxu0 0.0
        %1281 = vmatpush2.msra.mxu0 0.0
        %1282 = vmatprep.subr.mxu0 0.0
        %1283 = vmatpush2.msra.mxu0 0.0
        %1284 = vmatprep.subr.mxu0 0.0
        %1285 = vmatpush2.msra.mxu0 0.0
        %1286 = vmatprep.subr.mxu0 0.0
        %1287 = vmatpush2.msra.mxu0 0.0
        %1288 = vmatprep.subr.mxu0 0.0
        %1289 = vmatpush2.msra.mxu0 0.0
        %1290 = vmatprep.subr.mxu0 0.0
        %1291 = vmatpush2.msra.mxu0 0.0
        %1292 = vmatprep.subr.mxu0 0.0
        %1293 = vmatpush2.msra.mxu0 0.0
        %1294 = vmatprep.subr.mxu0 0.0
        %1295 = vmatpush2.msra.mxu0 0.0
        %1296 = vmatprep.subr.mxu0 0.0
        %1297 = vmatpush2.msra.mxu0 0.0
        %1298 = vmatprep.subr.mxu0 0.0
        %1299 = vmatpush2.msra.mxu0 0.0
        %1300 = vmatprep.mubr.f32.mxu0 0.0
        %1301 = vmatmul.mubr.f32.gmra.mxu0 %v1234
        %v1302 = vpop.f32.mrf.mxu0
        %v1303 = vadd.f32 0.0, %v1302
        %v1304 = vpop.f32.mrf.mxu0
        %1305 = vdwg.mxu0
        %v1307 = vsel %vm974, %v1303, 0
        %1309 = vmatprep.subr.mxu0 0.0
        %1310 = vmatpush1.msra.mxu0 0.0
        %1311 = vmatprep.subr.mxu0 0.0
        %1312 = vmatpush1.msra.mxu0 0.0
        %1313 = vmatprep.subr.mxu0 0.0
        %1314 = vmatpush1.msra.mxu0 0.0
        %1315 = vmatprep.subr.mxu0 0.0
        %1316 = vmatpush1.msra.mxu0 0.0
        %1317 = vmatprep.subr.mxu0 0.0
        %1318 = vmatpush1.msra.mxu0 0.0
        %1319 = vmatprep.subr.mxu0 0.0
        %1320 = vmatpush1.msra.mxu0 0.0
        %1321 = vmatprep.subr.mxu0 0.0
        %1322 = vmatpush1.msra.mxu0 0.0
        %1323 = vmatprep.subr.mxu0 0.0
        %1324 = vmatpush1.msra.mxu0 0.0
        %1325 = vmatprep.subr.mxu0 0.0
        %1326 = vmatpush1.msra.mxu0 0.0
        %1327 = vmatprep.subr.mxu0 0.0
        %1328 = vmatpush1.msra.mxu0 0.0
        %1329 = vmatprep.subr.mxu0 0.0
        %1330 = vmatpush1.msra.mxu0 0.0
        %1331 = vmatprep.subr.mxu0 0.0
        %1332 = vmatpush1.msra.mxu0 0.0
        %1333 = vmatprep.subr.mxu0 0.0
        %1334 = vmatpush1.msra.mxu0 0.0
        %1335 = vmatprep.subr.mxu0 0.0
        %1336 = vmatpush1.msra.mxu0 0.0
        %1337 = vmatprep.subr.mxu0 0.0
        %1338 = vmatpush1.msra.mxu0 0.0
        %1339 = vmatprep.subr.mxu0 0.0
        %1340 = vmatpush1.msra.mxu0 %v967
        %1341 = vmatprep.subr.mxu0 0.0
        %1342 = vmatpush2.msra.mxu0 0.0
        %1343 = vmatprep.subr.mxu0 0.0
        %1344 = vmatpush2.msra.mxu0 0.0
        %1345 = vmatprep.subr.mxu0 0.0
        %1346 = vmatpush2.msra.mxu0 0.0
        %1347 = vmatprep.subr.mxu0 0.0
        %1348 = vmatpush2.msra.mxu0 0.0
        %1349 = vmatprep.subr.mxu0 0.0
        %1350 = vmatpush2.msra.mxu0 0.0
        %1351 = vmatprep.subr.mxu0 0.0
        %1352 = vmatpush2.msra.mxu0 0.0
        %1353 = vmatprep.subr.mxu0 0.0
        %1354 = vmatpush2.msra.mxu0 0.0
        %1355 = vmatprep.subr.mxu0 0.0
        %1356 = vmatpush2.msra.mxu0 0.0
        %1357 = vmatprep.subr.mxu0 0.0
        %1358 = vmatpush2.msra.mxu0 0.0
        %1359 = vmatprep.subr.mxu0 0.0
        %1360 = vmatpush2.msra.mxu0 0.0
        %1361 = vmatprep.subr.mxu0 0.0
        %1362 = vmatpush2.msra.mxu0 0.0
        %1363 = vmatprep.subr.mxu0 0.0
        %1364 = vmatpush2.msra.mxu0 0.0
        %1365 = vmatprep.subr.mxu0 0.0
        %1366 = vmatpush2.msra.mxu0 0.0
        %1367 = vmatprep.subr.mxu0 0.0
        %1368 = vmatpush2.msra.mxu0 0.0
        %1369 = vmatprep.subr.mxu0 0.0
        %1370 = vmatpush2.msra.mxu0 0.0
        %1371 = vmatprep.subr.mxu0 0.0
        %1372 = vmatpush2.msra.mxu0 0.0
        %1373 = vmatprep.mubr.f32.mxu0 0.0
        %1374 = vmatmul.mubr.f32.gmra.mxu0 %v1307
        %v1375 = vpop.f32.mrf.mxu0
        %v1376 = vadd.f32 0.0, %v1375
        %v1377 = vpop.f32.mrf.mxu0
        %1378 = vdwg.mxu0
        %v1380 = vsel %vm974, %v1136, 0
        %1382 = vmatprep.subr.mxu0 0.0
        %1383 = vmatpush1.msra.mxu0 0.0
        %1384 = vmatprep.subr.mxu0 0.0
        %1385 = vmatpush1.msra.mxu0 0.0
        %1386 = vmatprep.subr.mxu0 0.0
        %1387 = vmatpush1.msra.mxu0 0.0
        %1388 = vmatprep.subr.mxu0 0.0
        %1389 = vmatpush1.msra.mxu0 0.0
        %1390 = vmatprep.subr.mxu0 0.0
        %1391 = vmatpush1.msra.mxu0 0.0
        %1392 = vmatprep.subr.mxu0 0.0
        %1393 = vmatpush1.msra.mxu0 0.0
        %1394 = vmatprep.subr.mxu0 0.0
        %1395 = vmatpush1.msra.mxu0 0.0
        %1396 = vmatprep.subr.mxu0 0.0
        %1397 = vmatpush1.msra.mxu0 0.0
        %1398 = vmatprep.subr.mxu0 0.0
        %1399 = vmatpush1.msra.mxu0 0.0
        %1400 = vmatprep.subr.mxu0 0.0
        %1401 = vmatpush1.msra.mxu0 0.0
        %1402 = vmatprep.subr.mxu0 0.0
        %1403 = vmatpush1.msra.mxu0 0.0
        %1404 = vmatprep.subr.mxu0 0.0
        %1405 = vmatpush1.msra.mxu0 0.0
        %1406 = vmatprep.subr.mxu0 0.0
        %1407 = vmatpush1.msra.mxu0 0.0
        %1408 = vmatprep.subr.mxu0 0.0
        %1409 = vmatpush1.msra.mxu0 0.0
        %1410 = vmatprep.subr.mxu0 0.0
        %1411 = vmatpush1.msra.mxu0 0.0
        %1412 = vmatprep.subr.mxu0 0.0
        %1413 = vmatpush1.msra.mxu0 %v966
        %1414 = vmatprep.subr.mxu0 0.0
        %1415 = vmatpush2.msra.mxu0 0.0
        %1416 = vmatprep.subr.mxu0 0.0
        %1417 = vmatpush2.msra.mxu0 0.0
        %1418 = vmatprep.subr.mxu0 0.0
        %1419 = vmatpush2.msra.mxu0 0.0
        %1420 = vmatprep.subr.mxu0 0.0
        %1421 = vmatpush2.msra.mxu0 0.0
        %1422 = vmatprep.subr.mxu0 0.0
        %1423 = vmatpush2.msra.mxu0 0.0
        %1424 = vmatprep.subr.mxu0 0.0
        %1425 = vmatpush2.msra.mxu0 0.0
        %1426 = vmatprep.subr.mxu0 0.0
        %1427 = vmatpush2.msra.mxu0 0.0
        %1428 = vmatprep.subr.mxu0 0.0
        %1429 = vmatpush2.msra.mxu0 0.0
        %1430 = vmatprep.subr.mxu0 0.0
        %1431 = vmatpush2.msra.mxu0 0.0
        %1432 = vmatprep.subr.mxu0 0.0
        %1433 = vmatpush2.msra.mxu0 0.0
        %1434 = vmatprep.subr.mxu0 0.0
        %1435 = vmatpush2.msra.mxu0 0.0
        %1436 = vmatprep.subr.mxu0 0.0
        %1437 = vmatpush2.msra.mxu0 0.0
        %1438 = vmatprep.subr.mxu0 0.0
        %1439 = vmatpush2.msra.mxu0 0.0
        %1440 = vmatprep.subr.mxu0 0.0
        %1441 = vmatpush2.msra.mxu0 0.0
        %1442 = vmatprep.subr.mxu0 0.0
        %1443 = vmatpush2.msra.mxu0 0.0
        %1444 = vmatprep.subr.mxu0 0.0
        %1445 = vmatpush2.msra.mxu0 0.0
        %1446 = vmatprep.mubr.f32.mxu0 0.0
        %1447 = vmatmul.mubr.f32.gmra.mxu0 %v1380
        %v1448 = vpop.f32.mrf.mxu0
        %v1449 = vadd.f32 %v1376, %v1448
        %v1450 = vpop.f32.mrf.mxu0
        %1451 = vdwg.mxu0
        %1452 = vrot.lane.b32.xlu0 %v963, 112
        %v1453 = vpop.permute.xlu0 %1452
        %1454 = vrot.lane.b32.xlu0 %v963, 80
        %v1455 = vpop.permute.xlu0 %1454
        %v1456 = vsel %vm974, %v1453, 0
        %v1458 = vsel %vm974, %v1455, 0
        %1460 = vmatprep.subr.mxu0 0.0
        %1461 = vmatpush1.xpose.msra.mxu0 0.0
        %1462 = vmatprep.subr.mxu0 0.0
        %1463 = vmatpush1.xpose.msra.mxu0 0.0
        %1464 = vmatprep.subr.mxu0 0.0
        %1465 = vmatpush1.xpose.msra.mxu0 0.0
        %1466 = vmatprep.subr.mxu0 0.0
        %1467 = vmatpush1.xpose.msra.mxu0 0.0
        %1468 = vmatprep.subr.mxu0 0.0
        %1469 = vmatpush1.xpose.msra.mxu0 0.0
        %1470 = vmatprep.subr.mxu0 0.0
        %1471 = vmatpush1.xpose.msra.mxu0 0.0
        %1472 = vmatprep.subr.mxu0 0.0
        %1473 = vmatpush1.xpose.msra.mxu0 0.0
        %1474 = vmatprep.subr.mxu0 0.0
        %1475 = vmatpush1.xpose.msra.mxu0 0.0
        %1476 = vmatprep.subr.mxu0 0.0
        %1477 = vmatpush1.xpose.msra.mxu0 0.0
        %1478 = vmatprep.subr.mxu0 0.0
        %1479 = vmatpush1.xpose.msra.mxu0 0.0
        %1480 = vmatprep.subr.mxu0 0.0
        %1481 = vmatpush1.xpose.msra.mxu0 0.0
        %1482 = vmatprep.subr.mxu0 0.0
        %1483 = vmatpush1.xpose.msra.mxu0 0.0
        %1484 = vmatprep.subr.mxu0 0.0
        %1485 = vmatpush1.xpose.msra.mxu0 0.0
        %1486 = vmatprep.subr.mxu0 0.0
        %1487 = vmatpush1.xpose.msra.mxu0 0.0
        %1488 = vmatprep.subr.mxu0 0.0
        %1489 = vmatpush1.xpose.msra.mxu0 0.0
        %1490 = vmatprep.subr.mxu0 0.0
        %1491 = vmatpush1.xpose.msra.mxu0 %v1458
        %1492 = vmatprep.subr.mxu0 0.0
        %1493 = vmatpush2.xpose.msra.mxu0 0.0
        %1494 = vmatprep.subr.mxu0 0.0
        %1495 = vmatpush2.xpose.msra.mxu0 0.0
        %1496 = vmatprep.subr.mxu0 0.0
        %1497 = vmatpush2.xpose.msra.mxu0 0.0
        %1498 = vmatprep.subr.mxu0 0.0
        %1499 = vmatpush2.xpose.msra.mxu0 0.0
        %1500 = vmatprep.subr.mxu0 0.0
        %1501 = vmatpush2.xpose.msra.mxu0 0.0
        %1502 = vmatprep.subr.mxu0 0.0
        %1503 = vmatpush2.xpose.msra.mxu0 0.0
        %1504 = vmatprep.subr.mxu0 0.0
        %1505 = vmatpush2.xpose.msra.mxu0 0.0
        %1506 = vmatprep.subr.mxu0 0.0
        %1507 = vmatpush2.xpose.msra.mxu0 0.0
        %1508 = vmatprep.subr.mxu0 0.0
        %1509 = vmatpush2.xpose.msra.mxu0 0.0
        %1510 = vmatprep.subr.mxu0 0.0
        %1511 = vmatpush2.xpose.msra.mxu0 0.0
        %1512 = vmatprep.subr.mxu0 0.0
        %1513 = vmatpush2.xpose.msra.mxu0 0.0
        %1514 = vmatprep.subr.mxu0 0.0
        %1515 = vmatpush2.xpose.msra.mxu0 0.0
        %1516 = vmatprep.subr.mxu0 0.0
        %1517 = vmatpush2.xpose.msra.mxu0 0.0
        %1518 = vmatprep.subr.mxu0 0.0
        %1519 = vmatpush2.xpose.msra.mxu0 0.0
        %1520 = vmatprep.subr.mxu0 0.0
        %1521 = vmatpush2.xpose.msra.mxu0 0.0
        %1522 = vmatprep.subr.mxu0 0.0
        %1523 = vmatpush2.xpose.msra.mxu0 0.0
        %1524 = vmatprep.mubr.f32.mxu0 0.0
        %1525 = vmatmul.mubr.f32.gmra.mxu0 %v1456
        %v1526 = vpop.f32.mrf.mxu0
        %v1527 = vadd.f32 0.0, %v1526
        %v1528 = vpop.f32.mrf.mxu0
        %1529 = vdwg.mxu0
        %v1530 = vmul.f32 %v1527, 0.35355338
        %v1531 = vsel %vm1050, -1e+09, %v1530
        %v1532 = vsel %vm974, %v1531, -inf
        %1533 = vmax.xlane.f32.xlu0 %v1532
        %v1534 = vpop.xlane.xlu0 %1533
        %v1535 = vsub.f32 %v1531, %v1534
        %v1536 = vmul.f32 %v1535, 1.442695
        %v1537 = vpow.pop %v1536
        %v1538 = vsel %vm974, %v1537, 0.0
        %1539 = vadd.xlane.f32.xlu0 %v1538
        %v1540 = vpop.xlane.xlu0 %1539
        %v1541 = vrcp.pop %v1540
        %v1542 = vmul.f32 %v1537, %v1541
        %1543 = vrot.lane.b32.xlu0 %v963, 48
        %v1544 = vpop.permute.xlu0 %1543
        %v1547 = vsel %vm974, %v1542, 0
        %1549 = vmatprep.subr.mxu0 0.0
        %1550 = vmatpush1.msra.mxu0 0.0
        %1551 = vmatprep.subr.mxu0 0.0
        %1552 = vmatpush1.msra.mxu0 0.0
        %1553 = vmatprep.subr.mxu0 0.0
        %1554 = vmatpush1.msra.mxu0 0.0
        %1555 = vmatprep.subr.mxu0 0.0
        %1556 = vmatpush1.msra.mxu0 0.0
        %1557 = vmatprep.subr.mxu0 0.0
        %1558 = vmatpush1.msra.mxu0 0.0
        %1559 = vmatprep.subr.mxu0 0.0
        %1560 = vmatpush1.msra.mxu0 0.0
        %1561 = vmatprep.subr.mxu0 0.0
        %1562 = vmatpush1.msra.mxu0 0.0
        %1563 = vmatprep.subr.mxu0 0.0
        %1564 = vmatpush1.msra.mxu0 0.0
        %1565 = vmatprep.subr.mxu0 0.0
        %1566 = vmatpush1.msra.mxu0 0.0
        %1567 = vmatprep.subr.mxu0 0.0
        %1568 = vmatpush1.msra.mxu0 0.0
        %1569 = vmatprep.subr.mxu0 0.0
        %1570 = vmatpush1.msra.mxu0 0.0
        %1571 = vmatprep.subr.mxu0 0.0
        %1572 = vmatpush1.msra.mxu0 0.0
        %1573 = vmatprep.subr.mxu0 0.0
        %1574 = vmatpush1.msra.mxu0 0.0
        %1575 = vmatprep.subr.mxu0 0.0
        %1576 = vmatpush1.msra.mxu0 0.0
        %1577 = vmatprep.subr.mxu0 0.0
        %1578 = vmatpush1.msra.mxu0 0.0
        %1579 = vmatprep.subr.mxu0 0.0
        %1580 = vmatpush1.msra.mxu0 %v1544
        %1581 = vmatprep.subr.mxu0 0.0
        %1582 = vmatpush2.msra.mxu0 0.0
        %1583 = vmatprep.subr.mxu0 0.0
        %1584 = vmatpush2.msra.mxu0 0.0
        %1585 = vmatprep.subr.mxu0 0.0
        %1586 = vmatpush2.msra.mxu0 0.0
        %1587 = vmatprep.subr.mxu0 0.0
        %1588 = vmatpush2.msra.mxu0 0.0
        %1589 = vmatprep.subr.mxu0 0.0
        %1590 = vmatpush2.msra.mxu0 0.0
        %1591 = vmatprep.subr.mxu0 0.0
        %1592 = vmatpush2.msra.mxu0 0.0
        %1593 = vmatprep.subr.mxu0 0.0
        %1594 = vmatpush2.msra.mxu0 0.0
        %1595 = vmatprep.subr.mxu0 0.0
        %1596 = vmatpush2.msra.mxu0 0.0
        %1597 = vmatprep.subr.mxu0 0.0
        %1598 = vmatpush2.msra.mxu0 0.0
        %1599 = vmatprep.subr.mxu0 0.0
        %1600 = vmatpush2.msra.mxu0 0.0
        %1601 = vmatprep.subr.mxu0 0.0
        %1602 = vmatpush2.msra.mxu0 0.0
        %1603 = vmatprep.subr.mxu0 0.0
        %1604 = vmatpush2.msra.mxu0 0.0
        %1605 = vmatprep.subr.mxu0 0.0
        %1606 = vmatpush2.msra.mxu0 0.0
        %1607 = vmatprep.subr.mxu0 0.0
        %1608 = vmatpush2.msra.mxu0 0.0
        %1609 = vmatprep.subr.mxu0 0.0
        %1610 = vmatpush2.msra.mxu0 0.0
        %1611 = vmatprep.subr.mxu0 0.0
        %1612 = vmatpush2.msra.mxu0 0.0
        %1613 = vmatprep.mubr.f32.mxu0 0.0
        %1614 = vmatmul.mubr.f32.gmra.mxu0 %v1547
        %v1615 = vpop.f32.mrf.mxu0
        %v1616 = vadd.f32 0.0, %v1615
        %v1617 = vpop.f32.mrf.mxu0
        %1618 = vdwg.mxu0
        %v1620 = vsel %vm974, %v1616, 0
        %1622 = vmatprep.subr.mxu0 0.0
        %1623 = vmatpush1.msra.mxu0 0.0
        %1624 = vmatprep.subr.mxu0 0.0
        %1625 = vmatpush1.msra.mxu0 0.0
        %1626 = vmatprep.subr.mxu0 0.0
        %1627 = vmatpush1.msra.mxu0 0.0
        %1628 = vmatprep.subr.mxu0 0.0
        %1629 = vmatpush1.msra.mxu0 0.0
        %1630 = vmatprep.subr.mxu0 0.0
        %1631 = vmatpush1.msra.mxu0 0.0
        %1632 = vmatprep.subr.mxu0 0.0
        %1633 = vmatpush1.msra.mxu0 0.0
        %1634 = vmatprep.subr.mxu0 0.0
        %1635 = vmatpush1.msra.mxu0 0.0
        %1636 = vmatprep.subr.mxu0 0.0
        %1637 = vmatpush1.msra.mxu0 0.0
        %1638 = vmatprep.subr.mxu0 0.0
        %1639 = vmatpush1.msra.mxu0 0.0
        %1640 = vmatprep.subr.mxu0 0.0
        %1641 = vmatpush1.msra.mxu0 0.0
        %1642 = vmatprep.subr.mxu0 0.0
        %1643 = vmatpush1.msra.mxu0 0.0
        %1644 = vmatprep.subr.mxu0 0.0
        %1645 = vmatpush1.msra.mxu0 0.0
        %1646 = vmatprep.subr.mxu0 0.0
        %1647 = vmatpush1.msra.mxu0 0.0
        %1648 = vmatprep.subr.mxu0 0.0
        %1649 = vmatpush1.msra.mxu0 0.0
        %1650 = vmatprep.subr.mxu0 0.0
        %1651 = vmatpush1.msra.mxu0 0.0
        %1652 = vmatprep.subr.mxu0 0.0
        %1653 = vmatpush1.msra.mxu0 %v968
        %1654 = vmatprep.subr.mxu0 0.0
        %1655 = vmatpush2.msra.mxu0 0.0
        %1656 = vmatprep.subr.mxu0 0.0
        %1657 = vmatpush2.msra.mxu0 0.0
        %1658 = vmatprep.subr.mxu0 0.0
        %1659 = vmatpush2.msra.mxu0 0.0
        %1660 = vmatprep.subr.mxu0 0.0
        %1661 = vmatpush2.msra.mxu0 0.0
        %1662 = vmatprep.subr.mxu0 0.0
        %1663 = vmatpush2.msra.mxu0 0.0
        %1664 = vmatprep.subr.mxu0 0.0
        %1665 = vmatpush2.msra.mxu0 0.0
        %1666 = vmatprep.subr.mxu0 0.0
        %1667 = vmatpush2.msra.mxu0 0.0
        %1668 = vmatprep.subr.mxu0 0.0
        %1669 = vmatpush2.msra.mxu0 0.0
        %1670 = vmatprep.subr.mxu0 0.0
        %1671 = vmatpush2.msra.mxu0 0.0
        %1672 = vmatprep.subr.mxu0 0.0
        %1673 = vmatpush2.msra.mxu0 0.0
        %1674 = vmatprep.subr.mxu0 0.0
        %1675 = vmatpush2.msra.mxu0 0.0
        %1676 = vmatprep.subr.mxu0 0.0
        %1677 = vmatpush2.msra.mxu0 0.0
        %1678 = vmatprep.subr.mxu0 0.0
        %1679 = vmatpush2.msra.mxu0 0.0
        %1680 = vmatprep.subr.mxu0 0.0
        %1681 = vmatpush2.msra.mxu0 0.0
        %1682 = vmatprep.subr.mxu0 0.0
        %1683 = vmatpush2.msra.mxu0 0.0
        %1684 = vmatprep.subr.mxu0 0.0
        %1685 = vmatpush2.msra.mxu0 0.0
        %1686 = vmatprep.mubr.f32.mxu0 0.0
        %1687 = vmatmul.mubr.f32.gmra.mxu0 %v1620
        %v1688 = vpop.f32.mrf.mxu0
        %v1689 = vadd.f32 0.0, %v1688
        %v1690 = vpop.f32.mrf.mxu0
        %1691 = vdwg.mxu0
        %v1692 = vadd.f32 %v1449, %v1689
        %1693 = vrot.lane.b32.xlu0 %v963, 104
        %v1694 = vpop.permute.xlu0 %1693
        %1695 = vrot.lane.b32.xlu0 %v963, 72
        %v1696 = vpop.permute.xlu0 %1695
        %v1697 = vsel %vm974, %v1694, 0
        %v1699 = vsel %vm974, %v1696, 0
        %1701 = vmatprep.subr.mxu0 0.0
        %1702 = vmatpush1.xpose.msra.mxu0 0.0
        %1703 = vmatprep.subr.mxu0 0.0
        %1704 = vmatpush1.xpose.msra.mxu0 0.0
        %1705 = vmatprep.subr.mxu0 0.0
        %1706 = vmatpush1.xpose.msra.mxu0 0.0
        %1707 = vmatprep.subr.mxu0 0.0
        %1708 = vmatpush1.xpose.msra.mxu0 0.0
        %1709 = vmatprep.subr.mxu0 0.0
        %1710 = vmatpush1.xpose.msra.mxu0 0.0
        %1711 = vmatprep.subr.mxu0 0.0
        %1712 = vmatpush1.xpose.msra.mxu0 0.0
        %1713 = vmatprep.subr.mxu0 0.0
        %1714 = vmatpush1.xpose.msra.mxu0 0.0
        %1715 = vmatprep.subr.mxu0 0.0
        %1716 = vmatpush1.xpose.msra.mxu0 0.0
        %1717 = vmatprep.subr.mxu0 0.0
        %1718 = vmatpush1.xpose.msra.mxu0 0.0
        %1719 = vmatprep.subr.mxu0 0.0
        %1720 = vmatpush1.xpose.msra.mxu0 0.0
        %1721 = vmatprep.subr.mxu0 0.0
        %1722 = vmatpush1.xpose.msra.mxu0 0.0
        %1723 = vmatprep.subr.mxu0 0.0
        %1724 = vmatpush1.xpose.msra.mxu0 0.0
        %1725 = vmatprep.subr.mxu0 0.0
        %1726 = vmatpush1.xpose.msra.mxu0 0.0
        %1727 = vmatprep.subr.mxu0 0.0
        %1728 = vmatpush1.xpose.msra.mxu0 0.0
        %1729 = vmatprep.subr.mxu0 0.0
        %1730 = vmatpush1.xpose.msra.mxu0 0.0
        %1731 = vmatprep.subr.mxu0 0.0
        %1732 = vmatpush1.xpose.msra.mxu0 %v1699
        %1733 = vmatprep.subr.mxu0 0.0
        %1734 = vmatpush2.xpose.msra.mxu0 0.0
        %1735 = vmatprep.subr.mxu0 0.0
        %1736 = vmatpush2.xpose.msra.mxu0 0.0
        %1737 = vmatprep.subr.mxu0 0.0
        %1738 = vmatpush2.xpose.msra.mxu0 0.0
        %1739 = vmatprep.subr.mxu0 0.0
        %1740 = vmatpush2.xpose.msra.mxu0 0.0
        %1741 = vmatprep.subr.mxu0 0.0
        %1742 = vmatpush2.xpose.msra.mxu0 0.0
        %1743 = vmatprep.subr.mxu0 0.0
        %1744 = vmatpush2.xpose.msra.mxu0 0.0
        %1745 = vmatprep.subr.mxu0 0.0
        %1746 = vmatpush2.xpose.msra.mxu0 0.0
        %1747 = vmatprep.subr.mxu0 0.0
        %1748 = vmatpush2.xpose.msra.mxu0 0.0
        %1749 = vmatprep.subr.mxu0 0.0
        %1750 = vmatpush2.xpose.msra.mxu0 0.0
        %1751 = vmatprep.subr.mxu0 0.0
        %1752 = vmatpush2.xpose.msra.mxu0 0.0
        %1753 = vmatprep.subr.mxu0 0.0
        %1754 = vmatpush2.xpose.msra.mxu0 0.0
        %1755 = vmatprep.subr.mxu0 0.0
        %1756 = vmatpush2.xpose.msra.mxu0 0.0
        %1757 = vmatprep.subr.mxu0 0.0
        %1758 = vmatpush2.xpose.msra.mxu0 0.0
        %1759 = vmatprep.subr.mxu0 0.0
        %1760 = vmatpush2.xpose.msra.mxu0 0.0
        %1761 = vmatprep.subr.mxu0 0.0
        %1762 = vmatpush2.xpose.msra.mxu0 0.0
        %1763 = vmatprep.subr.mxu0 0.0
        %1764 = vmatpush2.xpose.msra.mxu0 0.0
        %1765 = vmatprep.mubr.f32.mxu0 0.0
        %1766 = vmatmul.mubr.f32.gmra.mxu0 %v1697
        %v1767 = vpop.f32.mrf.mxu0
        %v1768 = vadd.f32 0.0, %v1767
        %v1769 = vpop.f32.mrf.mxu0
        %1770 = vdwg.mxu0
        %v1771 = vmul.f32 %v1768, 0.35355338
        %v1772 = vsel %vm1050, -1e+09, %v1771
        %v1773 = vsel %vm974, %v1772, -inf
        %1774 = vmax.xlane.f32.xlu0 %v1773
        %v1775 = vpop.xlane.xlu0 %1774
        %v1776 = vsub.f32 %v1772, %v1775
        %v1777 = vmul.f32 %v1776, 1.442695
        %v1778 = vpow.pop %v1777
        %v1779 = vsel %vm974, %v1778, 0.0
        %1780 = vadd.xlane.f32.xlu0 %v1779
        %v1781 = vpop.xlane.xlu0 %1780
        %v1782 = vrcp.pop %v1781
        %v1783 = vmul.f32 %v1778, %v1782
        %1784 = vrot.lane.b32.xlu0 %v963, 40
        %v1785 = vpop.permute.xlu0 %1784
        %v1788 = vsel %vm974, %v1783, 0
        %1790 = vmatprep.subr.mxu0 0.0
        %1791 = vmatpush1.msra.mxu0 0.0
        %1792 = vmatprep.subr.mxu0 0.0
        %1793 = vmatpush1.msra.mxu0 0.0
        %1794 = vmatprep.subr.mxu0 0.0
        %1795 = vmatpush1.msra.mxu0 0.0
        %1796 = vmatprep.subr.mxu0 0.0
        %1797 = vmatpush1.msra.mxu0 0.0
        %1798 = vmatprep.subr.mxu0 0.0
        %1799 = vmatpush1.msra.mxu0 0.0
        %1800 = vmatprep.subr.mxu0 0.0
        %1801 = vmatpush1.msra.mxu0 0.0
        %1802 = vmatprep.subr.mxu0 0.0
        %1803 = vmatpush1.msra.mxu0 0.0
        %1804 = vmatprep.subr.mxu0 0.0
        %1805 = vmatpush1.msra.mxu0 0.0
        %1806 = vmatprep.subr.mxu0 0.0
        %1807 = vmatpush1.msra.mxu0 0.0
        %1808 = vmatprep.subr.mxu0 0.0
        %1809 = vmatpush1.msra.mxu0 0.0
        %1810 = vmatprep.subr.mxu0 0.0
        %1811 = vmatpush1.msra.mxu0 0.0
        %1812 = vmatprep.subr.mxu0 0.0
        %1813 = vmatpush1.msra.mxu0 0.0
        %1814 = vmatprep.subr.mxu0 0.0
        %1815 = vmatpush1.msra.mxu0 0.0
        %1816 = vmatprep.subr.mxu0 0.0
        %1817 = vmatpush1.msra.mxu0 0.0
        %1818 = vmatprep.subr.mxu0 0.0
        %1819 = vmatpush1.msra.mxu0 0.0
        %1820 = vmatprep.subr.mxu0 0.0
        %1821 = vmatpush1.msra.mxu0 %v1785
        %1822 = vmatprep.subr.mxu0 0.0
        %1823 = vmatpush2.msra.mxu0 0.0
        %1824 = vmatprep.subr.mxu0 0.0
        %1825 = vmatpush2.msra.mxu0 0.0
        %1826 = vmatprep.subr.mxu0 0.0
        %1827 = vmatpush2.msra.mxu0 0.0
        %1828 = vmatprep.subr.mxu0 0.0
        %1829 = vmatpush2.msra.mxu0 0.0
        %1830 = vmatprep.subr.mxu0 0.0
        %1831 = vmatpush2.msra.mxu0 0.0
        %1832 = vmatprep.subr.mxu0 0.0
        %1833 = vmatpush2.msra.mxu0 0.0
        %1834 = vmatprep.subr.mxu0 0.0
        %1835 = vmatpush2.msra.mxu0 0.0
        %1836 = vmatprep.subr.mxu0 0.0
        %1837 = vmatpush2.msra.mxu0 0.0
        %1838 = vmatprep.subr.mxu0 0.0
        %1839 = vmatpush2.msra.mxu0 0.0
        %1840 = vmatprep.subr.mxu0 0.0
        %1841 = vmatpush2.msra.mxu0 0.0
        %1842 = vmatprep.subr.mxu0 0.0
        %1843 = vmatpush2.msra.mxu0 0.0
        %1844 = vmatprep.subr.mxu0 0.0
        %1845 = vmatpush2.msra.mxu0 0.0
        %1846 = vmatprep.subr.mxu0 0.0
        %1847 = vmatpush2.msra.mxu0 0.0
        %1848 = vmatprep.subr.mxu0 0.0
        %1849 = vmatpush2.msra.mxu0 0.0
        %1850 = vmatprep.subr.mxu0 0.0
        %1851 = vmatpush2.msra.mxu0 0.0
        %1852 = vmatprep.subr.mxu0 0.0
        %1853 = vmatpush2.msra.mxu0 0.0
        %1854 = vmatprep.mubr.f32.mxu0 0.0
        %1855 = vmatmul.mubr.f32.gmra.mxu0 %v1788
        %v1856 = vpop.f32.mrf.mxu0
        %v1857 = vadd.f32 0.0, %v1856
        %v1858 = vpop.f32.mrf.mxu0
        %1859 = vdwg.mxu0
        %v1861 = vsel %vm974, %v1857, 0
        %1863 = vmatprep.subr.mxu0 0.0
        %1864 = vmatpush1.msra.mxu0 0.0
        %1865 = vmatprep.subr.mxu0 0.0
        %1866 = vmatpush1.msra.mxu0 0.0
        %1867 = vmatprep.subr.mxu0 0.0
        %1868 = vmatpush1.msra.mxu0 0.0
        %1869 = vmatprep.subr.mxu0 0.0
        %1870 = vmatpush1.msra.mxu0 0.0
        %1871 = vmatprep.subr.mxu0 0.0
        %1872 = vmatpush1.msra.mxu0 0.0
        %1873 = vmatprep.subr.mxu0 0.0
        %1874 = vmatpush1.msra.mxu0 0.0
        %1875 = vmatprep.subr.mxu0 0.0
        %1876 = vmatpush1.msra.mxu0 0.0
        %1877 = vmatprep.subr.mxu0 0.0
        %1878 = vmatpush1.msra.mxu0 0.0
        %1879 = vmatprep.subr.mxu0 0.0
        %1880 = vmatpush1.msra.mxu0 0.0
        %1881 = vmatprep.subr.mxu0 0.0
        %1882 = vmatpush1.msra.mxu0 0.0
        %1883 = vmatprep.subr.mxu0 0.0
        %1884 = vmatpush1.msra.mxu0 0.0
        %1885 = vmatprep.subr.mxu0 0.0
        %1886 = vmatpush1.msra.mxu0 0.0
        %1887 = vmatprep.subr.mxu0 0.0
        %1888 = vmatpush1.msra.mxu0 0.0
        %1889 = vmatprep.subr.mxu0 0.0
        %1890 = vmatpush1.msra.mxu0 0.0
        %1891 = vmatprep.subr.mxu0 0.0
        %1892 = vmatpush1.msra.mxu0 0.0
        %1893 = vmatprep.subr.mxu0 0.0
        %1894 = vmatpush1.msra.mxu0 %v969
        %1895 = vmatprep.subr.mxu0 0.0
        %1896 = vmatpush2.msra.mxu0 0.0
        %1897 = vmatprep.subr.mxu0 0.0
        %1898 = vmatpush2.msra.mxu0 0.0
        %1899 = vmatprep.subr.mxu0 0.0
        %1900 = vmatpush2.msra.mxu0 0.0
        %1901 = vmatprep.subr.mxu0 0.0
        %1902 = vmatpush2.msra.mxu0 0.0
        %1903 = vmatprep.subr.mxu0 0.0
        %1904 = vmatpush2.msra.mxu0 0.0
        %1905 = vmatprep.subr.mxu0 0.0
        %1906 = vmatpush2.msra.mxu0 0.0
        %1907 = vmatprep.subr.mxu0 0.0
        %1908 = vmatpush2.msra.mxu0 0.0
        %1909 = vmatprep.subr.mxu0 0.0
        %1910 = vmatpush2.msra.mxu0 0.0
        %1911 = vmatprep.subr.mxu0 0.0
        %1912 = vmatpush2.msra.mxu0 0.0
        %1913 = vmatprep.subr.mxu0 0.0
        %1914 = vmatpush2.msra.mxu0 0.0
        %1915 = vmatprep.subr.mxu0 0.0
        %1916 = vmatpush2.msra.mxu0 0.0
        %1917 = vmatprep.subr.mxu0 0.0
        %1918 = vmatpush2.msra.mxu0 0.0
        %1919 = vmatprep.subr.mxu0 0.0
        %1920 = vmatpush2.msra.mxu0 0.0
        %1921 = vmatprep.subr.mxu0 0.0
        %1922 = vmatpush2.msra.mxu0 0.0
        %1923 = vmatprep.subr.mxu0 0.0
        %1924 = vmatpush2.msra.mxu0 0.0
        %1925 = vmatprep.subr.mxu0 0.0
        %1926 = vmatpush2.msra.mxu0 0.0
        %1927 = vmatprep.mubr.f32.mxu0 0.0
        %1928 = vmatmul.mubr.f32.gmra.mxu0 %v1861
        %v1929 = vpop.f32.mrf.mxu0
        %v1930 = vadd.f32 0.0, %v1929
        %v1931 = vpop.f32.mrf.mxu0
        %1932 = vdwg.mxu0
        %v1933 = vadd.f32 %v1692, %v1930
        %v1935 = vlaneseq
        %v1936 = vshrl.u32 %v1935, 7
        %v1937 = vsub.s32 0, %v1936
        %v1938 = vrot.slane %v970, %v1937
        %v1940 = vadd.f32 %v1933, %v1938
        %v1941 = vadd.f32 %v845, %v1940
        %v1942 = vld [vmem:[%s9] sm:$0x3]
        %v1943 = vsel %vm850, %v1941, 0.0
        %1944 = vadd.xlane.f32.xlu0 %v1943
        %v1945 = vpop.xlane.xlu0 %1944
        %v1946 = vmul.f32 %v1945, %v854
        %v1947 = vsub.f32 %v1941, %v1946
        %v1948 = vmul.f32 %v1947, %v1947
        %v1949 = vsel %vm850, %v1948, 0.0
        %1950 = vadd.xlane.f32.xlu0 %v1949
        %v1951 = vpop.xlane.xlu0 %1950
        %v1952 = vmul.f32 %v1951, 0.032258064
        %v1953 = vrsqrt.pop %v1952
        %v1954 = vmul.f32 %v1952, %v1953
        %vm1955 = vcmp.eq.f32.partialorder %v1952, inf
        %v1956 = vsel %vm1955, %v1952, %v1954
        %vm1957 = vcmp.eq.f32.partialorder %v1952, 0.0
        %v1958 = vand.u32 %v1952, 2147483648
        %v1959 = vsel %vm1957, %v1958, %v1956
        %v1960 = vadd.f32 %v1959, 1e-06
        %v1961 = vrcp.pop %v1960
        %v1962 = vmul.f32 %v1947, %v1961
        %v1963 = vlaneseq
        %v1964 = vshrl.u32 %v1963, 7
        %v1965 = vsub.s32 0, %v1964
        %v1966 = vrot.slane %v1942, %v1965
        %v1967 = vmul.f32 %v1966, %v1962
        %v1968 = vlaneseq
        %v1969 = vshrl.u32 %v1968, 7
        %v1970 = vsub.s32 1, %v1969
        %v1971 = vrot.slane %v1942, %v1970
        %v1972 = vadd.f32 %v1967, %v1971
        %v1973 = vld [vmem:[%s10] sm:$0xff]
        %v1974 = vld [vmem:[%s10 + $0x8] sm:$0xff]
        %v1975 = vld [vmem:[%s10 + $0x10] sm:$0xff]
        %v1976 = vld [vmem:[%s10 + $0x18] sm:$0xff]
        %v1977 = vld [vmem:[#allocation10] sm:$0x1]
        %v1979 = vlaneseq
        %v1980 = vshrl.u32 %v1979, 7
        %v1981 = vsub.s32 0, %v1980
        %v1982 = vrot.slane %v1977, %v1981
        %v1985 = vsel %vm850, %v1972, 0
        %1987 = vmatprep.subr.mxu0 0.0
        %1988 = vmatpush1.msra.mxu0 0.0
        %1989 = vmatprep.subr.mxu0 0.0
        %1990 = vmatpush1.msra.mxu0 0.0
        %1991 = vmatprep.subr.mxu0 0.0
        %1992 = vmatpush1.msra.mxu0 0.0
        %1993 = vmatprep.subr.mxu0 0.0
        %1994 = vmatpush1.msra.mxu0 0.0
        %1995 = vmatprep.subr.mxu0 0.0
        %1996 = vmatpush1.msra.mxu0 0.0
        %1997 = vmatprep.subr.mxu0 0.0
        %1998 = vmatpush1.msra.mxu0 0.0
        %1999 = vmatprep.subr.mxu0 0.0
        %2000 = vmatpush1.msra.mxu0 0.0
        %2001 = vmatprep.subr.mxu0 0.0
        %2002 = vmatpush1.msra.mxu0 0.0
        %2003 = vmatprep.subr.mxu0 0.0
        %2004 = vmatpush1.msra.mxu0 0.0
        %2005 = vmatprep.subr.mxu0 0.0
        %2006 = vmatpush1.msra.mxu0 0.0
        %2007 = vmatprep.subr.mxu0 0.0
        %2008 = vmatpush1.msra.mxu0 0.0
        %2009 = vmatprep.subr.mxu0 0.0
        %2010 = vmatpush1.msra.mxu0 0.0
        %2011 = vmatprep.subr.mxu0 0.0
        %2012 = vmatpush1.msra.mxu0 %v1976
        %2013 = vmatprep.subr.mxu0 0.0
        %2014 = vmatpush1.msra.mxu0 %v1975
        %2015 = vmatprep.subr.mxu0 0.0
        %2016 = vmatpush1.msra.mxu0 %v1974
        %2017 = vmatprep.subr.mxu0 0.0
        %2018 = vmatpush1.msra.mxu0 %v1973
        %2019 = vmatprep.subr.mxu0 0.0
        %2020 = vmatpush2.msra.mxu0 0.0
        %2021 = vmatprep.subr.mxu0 0.0
        %2022 = vmatpush2.msra.mxu0 0.0
        %2023 = vmatprep.subr.mxu0 0.0
        %2024 = vmatpush2.msra.mxu0 0.0
        %2025 = vmatprep.subr.mxu0 0.0
        %2026 = vmatpush2.msra.mxu0 0.0
        %2027 = vmatprep.subr.mxu0 0.0
        %2028 = vmatpush2.msra.mxu0 0.0
        %2029 = vmatprep.subr.mxu0 0.0
        %2030 = vmatpush2.msra.mxu0 0.0
        %2031 = vmatprep.subr.mxu0 0.0
        %2032 = vmatpush2.msra.mxu0 0.0
        %2033 = vmatprep.subr.mxu0 0.0
        %2034 = vmatpush2.msra.mxu0 0.0
        %2035 = vmatprep.subr.mxu0 0.0
        %2036 = vmatpush2.msra.mxu0 0.0
        %2037 = vmatprep.subr.mxu0 0.0
        %2038 = vmatpush2.msra.mxu0 0.0
        %2039 = vmatprep.subr.mxu0 0.0
        %2040 = vmatpush2.msra.mxu0 0.0
        %2041 = vmatprep.subr.mxu0 0.0
        %2042 = vmatpush2.msra.mxu0 0.0
        %2043 = vmatprep.subr.mxu0 0.0
        %2044 = vmatpush2.msra.mxu0 0.0
        %2045 = vmatprep.subr.mxu0 0.0
        %2046 = vmatpush2.msra.mxu0 0.0
        %2047 = vmatprep.subr.mxu0 0.0
        %2048 = vmatpush2.msra.mxu0 0.0
        %2049 = vmatprep.subr.mxu0 0.0
        %2050 = vmatpush2.msra.mxu0 0.0
        %2051 = vmatprep.mubr.f32.mxu0 0.0
        %2052 = vmatmul.mubr.f32.gmra.mxu0 %v1985
        %v2053 = vpop.f32.mrf.mxu0
        %v2054 = vadd.f32 %v1982, %v2053
        %v2055 = vpop.f32.mrf.mxu0
        %2056 = vdwg.mxu0
        %v2057 = vld [vmem:[%s12] sm:$0xff]
        %v2058 = vld [vmem:[%s12 + $0x8] sm:$0xff]
        %v2059 = vld [vmem:[%s12 + $0x10] sm:$0xff]
        %v2060 = vld [vmem:[%s12 + $0x18] sm:$0xff]
        %v2061 = vld [vmem:[#allocation11] sm:$0x1]
        %v2063 = vlaneseq
        %v2064 = vshrl.u32 %v2063, 7
        %v2065 = vsub.s32 0, %v2064
        %v2066 = vrot.slane %v2061, %v2065
        %v2069 = vsel %vm850, %v846, 0
        %2071 = vmatprep.subr.mxu0 0.0
        %2072 = vmatpush1.msra.mxu0 0.0
        %2073 = vmatprep.subr.mxu0 0.0
        %2074 = vmatpush1.msra.mxu0 0.0
        %2075 = vmatprep.subr.mxu0 0.0
        %2076 = vmatpush1.msra.mxu0 0.0
        %2077 = vmatprep.subr.mxu0 0.0
        %2078 = vmatpush1.msra.mxu0 0.0
        %2079 = vmatprep.subr.mxu0 0.0
        %2080 = vmatpush1.msra.mxu0 0.0
        %2081 = vmatprep.subr.mxu0 0.0
        %2082 = vmatpush1.msra.mxu0 0.0
        %2083 = vmatprep.subr.mxu0 0.0
        %2084 = vmatpush1.msra.mxu0 0.0
        %2085 = vmatprep.subr.mxu0 0.0
        %2086 = vmatpush1.msra.mxu0 0.0
        %2087 = vmatprep.subr.mxu0 0.0
        %2088 = vmatpush1.msra.mxu0 0.0
        %2089 = vmatprep.subr.mxu0 0.0
        %2090 = vmatpush1.msra.mxu0 0.0
        %2091 = vmatprep.subr.mxu0 0.0
        %2092 = vmatpush1.msra.mxu0 0.0
        %2093 = vmatprep.subr.mxu0 0.0
        %2094 = vmatpush1.msra.mxu0 0.0
        %2095 = vmatprep.subr.mxu0 0.0
        %2096 = vmatpush1.msra.mxu0 %v2060
        %2097 = vmatprep.subr.mxu0 0.0
        %2098 = vmatpush1.msra.mxu0 %v2059
        %2099 = vmatprep.subr.mxu0 0.0
        %2100 = vmatpush1.msra.mxu0 %v2058
        %2101 = vmatprep.subr.mxu0 0.0
        %2102 = vmatpush1.msra.mxu0 %v2057
        %2103 = vmatprep.subr.mxu0 0.0
        %2104 = vmatpush2.msra.mxu0 0.0
        %2105 = vmatprep.subr.mxu0 0.0
        %2106 = vmatpush2.msra.mxu0 0.0
        %2107 = vmatprep.subr.mxu0 0.0
        %2108 = vmatpush2.msra.mxu0 0.0
        %2109 = vmatprep.subr.mxu0 0.0
        %2110 = vmatpush2.msra.mxu0 0.0
        %2111 = vmatprep.subr.mxu0 0.0
        %2112 = vmatpush2.msra.mxu0 0.0
        %2113 = vmatprep.subr.mxu0 0.0
        %2114 = vmatpush2.msra.mxu0 0.0
        %2115 = vmatprep.subr.mxu0 0.0
        %2116 = vmatpush2.msra.mxu0 0.0
        %2117 = vmatprep.subr.mxu0 0.0
        %2118 = vmatpush2.msra.mxu0 0.0
        %2119 = vmatprep.subr.mxu0 0.0
        %2120 = vmatpush2.msra.mxu0 0.0
        %2121 = vmatprep.subr.mxu0 0.0
        %2122 = vmatpush2.msra.mxu0 0.0
        %2123 = vmatprep.subr.mxu0 0.0
        %2124 = vmatpush2.msra.mxu0 0.0
        %2125 = vmatprep.subr.mxu0 0.0
        %2126 = vmatpush2.msra.mxu0 0.0
        %2127 = vmatprep.subr.mxu0 0.0
        %2128 = vmatpush2.msra.mxu0 0.0
        %2129 = vmatprep.subr.mxu0 0.0
        %2130 = vmatpush2.msra.mxu0 0.0
        %2131 = vmatprep.subr.mxu0 0.0
        %2132 = vmatpush2.msra.mxu0 0.0
        %2133 = vmatprep.subr.mxu0 0.0
        %2134 = vmatpush2.msra.mxu0 0.0
        %2135 = vmatprep.mubr.f32.mxu0 0.0
        %2136 = vmatmul.mubr.f32.gmra.mxu0 %v2069
        %v2137 = vpop.f32.mrf.mxu0
        %v2138 = vadd.f32 %v2066, %v2137
        %v2139 = vpop.f32.mrf.mxu0
        %2140 = vdwg.mxu0
        %v2141 = vld [vmem:[%s14] sm:$0xff]
        %v2142 = vld [vmem:[%s14 + $0x8] sm:$0xff]
        %v2143 = vld [vmem:[%s14 + $0x10] sm:$0xff]
        %v2144 = vld [vmem:[%s14 + $0x18] sm:$0xff]
        %v2145 = vld [vmem:[#allocation13] sm:$0x1]
        %v2147 = vsel %vm974, %v2054, 0
        %v2150 = vsel %vm974, %v2138, 0
        %2152 = vmatprep.subr.mxu0 0.0
        %2153 = vmatpush1.xpose.msra.mxu0 0.0
        %2154 = vmatprep.subr.mxu0 0.0
        %2155 = vmatpush1.xpose.msra.mxu0 0.0
        %2156 = vmatprep.subr.mxu0 0.0
        %2157 = vmatpush1.xpose.msra.mxu0 0.0
        %2158 = vmatprep.subr.mxu0 0.0
        %2159 = vmatpush1.xpose.msra.mxu0 0.0
        %2160 = vmatprep.subr.mxu0 0.0
        %2161 = vmatpush1.xpose.msra.mxu0 0.0
        %2162 = vmatprep.subr.mxu0 0.0
        %2163 = vmatpush1.xpose.msra.mxu0 0.0
        %2164 = vmatprep.subr.mxu0 0.0
        %2165 = vmatpush1.xpose.msra.mxu0 0.0
        %2166 = vmatprep.subr.mxu0 0.0
        %2167 = vmatpush1.xpose.msra.mxu0 0.0
        %2168 = vmatprep.subr.mxu0 0.0
        %2169 = vmatpush1.xpose.msra.mxu0 0.0
        %2170 = vmatprep.subr.mxu0 0.0
        %2171 = vmatpush1.xpose.msra.mxu0 0.0
        %2172 = vmatprep.subr.mxu0 0.0
        %2173 = vmatpush1.xpose.msra.mxu0 0.0
        %2174 = vmatprep.subr.mxu0 0.0
        %2175 = vmatpush1.xpose.msra.mxu0 0.0
        %2176 = vmatprep.subr.mxu0 0.0
        %2177 = vmatpush1.xpose.msra.mxu0 0.0
        %2178 = vmatprep.subr.mxu0 0.0
        %2179 = vmatpush1.xpose.msra.mxu0 0.0
        %2180 = vmatprep.subr.mxu0 0.0
        %2181 = vmatpush1.xpose.msra.mxu0 0.0
        %2182 = vmatprep.subr.mxu0 0.0
        %2183 = vmatpush1.xpose.msra.mxu0 %v2150
        %2184 = vmatprep.subr.mxu0 0.0
        %2185 = vmatpush2.xpose.msra.mxu0 0.0
        %2186 = vmatprep.subr.mxu0 0.0
        %2187 = vmatpush2.xpose.msra.mxu0 0.0
        %2188 = vmatprep.subr.mxu0 0.0
        %2189 = vmatpush2.xpose.msra.mxu0 0.0
        %2190 = vmatprep.subr.mxu0 0.0
        %2191 = vmatpush2.xpose.msra.mxu0 0.0
        %2192 = vmatprep.subr.mxu0 0.0
        %2193 = vmatpush2.xpose.msra.mxu0 0.0
        %2194 = vmatprep.subr.mxu0 0.0
        %2195 = vmatpush2.xpose.msra.mxu0 0.0
        %2196 = vmatprep.subr.mxu0 0.0
        %2197 = vmatpush2.xpose.msra.mxu0 0.0
        %2198 = vmatprep.subr.mxu0 0.0
        %2199 = vmatpush2.xpose.msra.mxu0 0.0
        %2200 = vmatprep.subr.mxu0 0.0
        %2201 = vmatpush2.xpose.msra.mxu0 0.0
        %2202 = vmatprep.subr.mxu0 0.0
        %2203 = vmatpush2.xpose.msra.mxu0 0.0
        %2204 = vmatprep.subr.mxu0 0.0
        %2205 = vmatpush2.xpose.msra.mxu0 0.0
        %2206 = vmatprep.subr.mxu0 0.0
        %2207 = vmatpush2.xpose.msra.mxu0 0.0
        %2208 = vmatprep.subr.mxu0 0.0
        %2209 = vmatpush2.xpose.msra.mxu0 0.0
        %2210 = vmatprep.subr.mxu0 0.0
        %2211 = vmatpush2.xpose.msra.mxu0 0.0
        %2212 = vmatprep.subr.mxu0 0.0
        %2213 = vmatpush2.xpose.msra.mxu0 0.0
        %2214 = vmatprep.subr.mxu0 0.0
        %2215 = vmatpush2.xpose.msra.mxu0 0.0
        %2216 = vmatprep.mubr.f32.mxu0 0.0
        %2217 = vmatmul.mubr.f32.gmra.mxu0 %v2147
        %v2218 = vpop.f32.mrf.mxu0
        %v2219 = vadd.f32 0.0, %v2218
        %v2220 = vpop.f32.mrf.mxu0
        %2221 = vdwg.mxu0
        %v2222 = vmul.f32 %v2219, 0.35355338
        %vm2223 = vcmp.eq.f32.partialorder %v848, 0.0
        %v2224 = vsel %vm2223, -1e+09, %v2222
        %v2225 = vsel %vm974, %v2224, -inf
        %2226 = vmax.xlane.f32.xlu0 %v2225
        %v2227 = vpop.xlane.xlu0 %2226
        %v2228 = vsub.f32 %v2224, %v2227
        %v2229 = vmul.f32 %v2228, 1.442695
        %v2230 = vpow.pop %v2229
        %v2231 = vsel %vm974, %v2230, 0.0
        %2232 = vadd.xlane.f32.xlu0 %v2231
        %v2233 = vpop.xlane.xlu0 %2232
        %v2234 = vrcp.pop %v2233
        %v2235 = vmul.f32 %v2230, %v2234
        %2236 = vrot.lane.b32.xlu0 %v2138, 96
        %v2237 = vpop.permute.xlu0 %2236
        %v2240 = vsel %vm974, %v2235, 0
        %2242 = vmatprep.subr.mxu0 0.0
        %2243 = vmatpush1.msra.mxu0 0.0
        %2244 = vmatprep.subr.mxu0 0.0
        %2245 = vmatpush1.msra.mxu0 0.0
        %2246 = vmatprep.subr.mxu0 0.0
        %2247 = vmatpush1.msra.mxu0 0.0
        %2248 = vmatprep.subr.mxu0 0.0
        %2249 = vmatpush1.msra.mxu0 0.0
        %2250 = vmatprep.subr.mxu0 0.0
        %2251 = vmatpush1.msra.mxu0 0.0
        %2252 = vmatprep.subr.mxu0 0.0
        %2253 = vmatpush1.msra.mxu0 0.0
        %2254 = vmatprep.subr.mxu0 0.0
        %2255 = vmatpush1.msra.mxu0 0.0
        %2256 = vmatprep.subr.mxu0 0.0
        %2257 = vmatpush1.msra.mxu0 0.0
        %2258 = vmatprep.subr.mxu0 0.0
        %2259 = vmatpush1.msra.mxu0 0.0
        %2260 = vmatprep.subr.mxu0 0.0
        %2261 = vmatpush1.msra.mxu0 0.0
        %2262 = vmatprep.subr.mxu0 0.0
        %2263 = vmatpush1.msra.mxu0 0.0
        %2264 = vmatprep.subr.mxu0 0.0
        %2265 = vmatpush1.msra.mxu0 0.0
        %2266 = vmatprep.subr.mxu0 0.0
        %2267 = vmatpush1.msra.mxu0 0.0
        %2268 = vmatprep.subr.mxu0 0.0
        %2269 = vmatpush1.msra.mxu0 0.0
        %2270 = vmatprep.subr.mxu0 0.0
        %2271 = vmatpush1.msra.mxu0 0.0
        %2272 = vmatprep.subr.mxu0 0.0
        %2273 = vmatpush1.msra.mxu0 %v2237
        %2274 = vmatprep.subr.mxu0 0.0
        %2275 = vmatpush2.msra.mxu0 0.0
        %2276 = vmatprep.subr.mxu0 0.0
        %2277 = vmatpush2.msra.mxu0 0.0
        %2278 = vmatprep.subr.mxu0 0.0
        %2279 = vmatpush2.msra.mxu0 0.0
        %2280 = vmatprep.subr.mxu0 0.0
        %2281 = vmatpush2.msra.mxu0 0.0
        %2282 = vmatprep.subr.mxu0 0.0
        %2283 = vmatpush2.msra.mxu0 0.0
        %2284 = vmatprep.subr.mxu0 0.0
        %2285 = vmatpush2.msra.mxu0 0.0
        %2286 = vmatprep.subr.mxu0 0.0
        %2287 = vmatpush2.msra.mxu0 0.0
        %2288 = vmatprep.subr.mxu0 0.0
        %2289 = vmatpush2.msra.mxu0 0.0
        %2290 = vmatprep.subr.mxu0 0.0
        %2291 = vmatpush2.msra.mxu0 0.0
        %2292 = vmatprep.subr.mxu0 0.0
        %2293 = vmatpush2.msra.mxu0 0.0
        %2294 = vmatprep.subr.mxu0 0.0
        %2295 = vmatpush2.msra.mxu0 0.0
        %2296 = vmatprep.subr.mxu0 0.0
        %2297 = vmatpush2.msra.mxu0 0.0
        %2298 = vmatprep.subr.mxu0 0.0
        %2299 = vmatpush2.msra.mxu0 0.0
        %2300 = vmatprep.subr.mxu0 0.0
        %2301 = vmatpush2.msra.mxu0 0.0
        %2302 = vmatprep.subr.mxu0 0.0
        %2303 = vmatpush2.msra.mxu0 0.0
        %2304 = vmatprep.subr.mxu0 0.0
        %2305 = vmatpush2.msra.mxu0 0.0
        %2306 = vmatprep.mubr.f32.mxu0 0.0
        %2307 = vmatmul.mubr.f32.gmra.mxu0 %v2240
        %v2308 = vpop.f32.mrf.mxu0
        %v2309 = vadd.f32 0.0, %v2308
        %v2310 = vpop.f32.mrf.mxu0
        %2311 = vdwg.mxu0
        %2312 = vrot.lane.b32.xlu0 %v2054, 120
        %v2313 = vpop.permute.xlu0 %2312
        %2314 = vrot.lane.b32.xlu0 %v2138, 120
        %v2315 = vpop.permute.xlu0 %2314
        %v2316 = vsel %vm974, %v2313, 0
        %v2318 = vsel %vm974, %v2315, 0
        %2320 = vmatprep.subr.mxu0 0.0
        %2321 = vmatpush1.xpose.msra.mxu0 0.0
        %2322 = vmatprep.subr.mxu0 0.0
        %2323 = vmatpush1.xpose.msra.mxu0 0.0
        %2324 = vmatprep.subr.mxu0 0.0
        %2325 = vmatpush1.xpose.msra.mxu0 0.0
        %2326 = vmatprep.subr.mxu0 0.0
        %2327 = vmatpush1.xpose.msra.mxu0 0.0
        %2328 = vmatprep.subr.mxu0 0.0
        %2329 = vmatpush1.xpose.msra.mxu0 0.0
        %2330 = vmatprep.subr.mxu0 0.0
        %2331 = vmatpush1.xpose.msra.mxu0 0.0
        %2332 = vmatprep.subr.mxu0 0.0
        %2333 = vmatpush1.xpose.msra.mxu0 0.0
        %2334 = vmatprep.subr.mxu0 0.0
        %2335 = vmatpush1.xpose.msra.mxu0 0.0
        %2336 = vmatprep.subr.mxu0 0.0
        %2337 = vmatpush1.xpose.msra.mxu0 0.0
        %2338 = vmatprep.subr.mxu0 0.0
        %2339 = vmatpush1.xpose.msra.mxu0 0.0
        %2340 = vmatprep.subr.mxu0 0.0
        %2341 = vmatpush1.xpose.msra.mxu0 0.0
        %2342 = vmatprep.subr.mxu0 0.0
        %2343 = vmatpush1.xpose.msra.mxu0 0.0
        %2344 = vmatprep.subr.mxu0 0.0
        %2345 = vmatpush1.xpose.msra.mxu0 0.0
        %2346 = vmatprep.subr.mxu0 0.0
        %2347 = vmatpush1.xpose.msra.mxu0 0.0
        %2348 = vmatprep.subr.mxu0 0.0
        %2349 = vmatpush1.xpose.msra.mxu0 0.0
        %2350 = vmatprep.subr.mxu0 0.0
        %2351 = vmatpush1.xpose.msra.mxu0 %v2318
        %2352 = vmatprep.subr.mxu0 0.0
        %2353 = vmatpush2.xpose.msra.mxu0 0.0
        %2354 = vmatprep.subr.mxu0 0.0
        %2355 = vmatpush2.xpose.msra.mxu0 0.0
        %2356 = vmatprep.subr.mxu0 0.0
        %2357 = vmatpush2.xpose.msra.mxu0 0.0
        %2358 = vmatprep.subr.mxu0 0.0
        %2359 = vmatpush2.xpose.msra.mxu0 0.0
        %2360 = vmatprep.subr.mxu0 0.0
        %2361 = vmatpush2.xpose.msra.mxu0 0.0
        %2362 = vmatprep.subr.mxu0 0.0
        %2363 = vmatpush2.xpose.msra.mxu0 0.0
        %2364 = vmatprep.subr.mxu0 0.0
        %2365 = vmatpush2.xpose.msra.mxu0 0.0
        %2366 = vmatprep.subr.mxu0 0.0
        %2367 = vmatpush2.xpose.msra.mxu0 0.0
        %2368 = vmatprep.subr.mxu0 0.0
        %2369 = vmatpush2.xpose.msra.mxu0 0.0
        %2370 = vmatprep.subr.mxu0 0.0
        %2371 = vmatpush2.xpose.msra.mxu0 0.0
        %2372 = vmatprep.subr.mxu0 0.0
        %2373 = vmatpush2.xpose.msra.mxu0 0.0
        %2374 = vmatprep.subr.mxu0 0.0
        %2375 = vmatpush2.xpose.msra.mxu0 0.0
        %2376 = vmatprep.subr.mxu0 0.0
        %2377 = vmatpush2.xpose.msra.mxu0 0.0
        %2378 = vmatprep.subr.mxu0 0.0
        %2379 = vmatpush2.xpose.msra.mxu0 0.0
        %2380 = vmatprep.subr.mxu0 0.0
        %2381 = vmatpush2.xpose.msra.mxu0 0.0
        %2382 = vmatprep.subr.mxu0 0.0
        %2383 = vmatpush2.xpose.msra.mxu0 0.0
        %2384 = vmatprep.mubr.f32.mxu0 0.0
        %2385 = vmatmul.mubr.f32.gmra.mxu0 %v2316
        %v2386 = vpop.f32.mrf.mxu0
        %v2387 = vadd.f32 0.0, %v2386
        %v2388 = vpop.f32.mrf.mxu0
        %2389 = vdwg.mxu0
        %v2390 = vmul.f32 %v2387, 0.35355338
        %v2391 = vsel %vm2223, -1e+09, %v2390
        %v2392 = vsel %vm974, %v2391, -inf
        %2393 = vmax.xlane.f32.xlu0 %v2392
        %v2394 = vpop.xlane.xlu0 %2393
        %v2395 = vsub.f32 %v2391, %v2394
        %v2396 = vmul.f32 %v2395, 1.442695
        %v2397 = vpow.pop %v2396
        %v2398 = vsel %vm974, %v2397, 0.0
        %2399 = vadd.xlane.f32.xlu0 %v2398
        %v2400 = vpop.xlane.xlu0 %2399
        %v2401 = vrcp.pop %v2400
        %v2402 = vmul.f32 %v2397, %v2401
        %2403 = vrot.lane.b32.xlu0 %v2138, 88
        %v2404 = vpop.permute.xlu0 %2403
        %v2407 = vsel %vm974, %v2402, 0
        %2409 = vmatprep.subr.mxu0 0.0
        %2410 = vmatpush1.msra.mxu0 0.0
        %2411 = vmatprep.subr.mxu0 0.0
        %2412 = vmatpush1.msra.mxu0 0.0
        %2413 = vmatprep.subr.mxu0 0.0
        %2414 = vmatpush1.msra.mxu0 0.0
        %2415 = vmatprep.subr.mxu0 0.0
        %2416 = vmatpush1.msra.mxu0 0.0
        %2417 = vmatprep.subr.mxu0 0.0
        %2418 = vmatpush1.msra.mxu0 0.0
        %2419 = vmatprep.subr.mxu0 0.0
        %2420 = vmatpush1.msra.mxu0 0.0
        %2421 = vmatprep.subr.mxu0 0.0
        %2422 = vmatpush1.msra.mxu0 0.0
        %2423 = vmatprep.subr.mxu0 0.0
        %2424 = vmatpush1.msra.mxu0 0.0
        %2425 = vmatprep.subr.mxu0 0.0
        %2426 = vmatpush1.msra.mxu0 0.0
        %2427 = vmatprep.subr.mxu0 0.0
        %2428 = vmatpush1.msra.mxu0 0.0
        %2429 = vmatprep.subr.mxu0 0.0
        %2430 = vmatpush1.msra.mxu0 0.0
        %2431 = vmatprep.subr.mxu0 0.0
        %2432 = vmatpush1.msra.mxu0 0.0
        %2433 = vmatprep.subr.mxu0 0.0
        %2434 = vmatpush1.msra.mxu0 0.0
        %2435 = vmatprep.subr.mxu0 0.0
        %2436 = vmatpush1.msra.mxu0 0.0
        %2437 = vmatprep.subr.mxu0 0.0
        %2438 = vmatpush1.msra.mxu0 0.0
        %2439 = vmatprep.subr.mxu0 0.0
        %2440 = vmatpush1.msra.mxu0 %v2404
        %2441 = vmatprep.subr.mxu0 0.0
        %2442 = vmatpush2.msra.mxu0 0.0
        %2443 = vmatprep.subr.mxu0 0.0
        %2444 = vmatpush2.msra.mxu0 0.0
        %2445 = vmatprep.subr.mxu0 0.0
        %2446 = vmatpush2.msra.mxu0 0.0
        %2447 = vmatprep.subr.mxu0 0.0
        %2448 = vmatpush2.msra.mxu0 0.0
        %2449 = vmatprep.subr.mxu0 0.0
        %2450 = vmatpush2.msra.mxu0 0.0
        %2451 = vmatprep.subr.mxu0 0.0
        %2452 = vmatpush2.msra.mxu0 0.0
        %2453 = vmatprep.subr.mxu0 0.0
        %2454 = vmatpush2.msra.mxu0 0.0
        %2455 = vmatprep.subr.mxu0 0.0
        %2456 = vmatpush2.msra.mxu0 0.0
        %2457 = vmatprep.subr.mxu0 0.0
        %2458 = vmatpush2.msra.mxu0 0.0
        %2459 = vmatprep.subr.mxu0 0.0
        %2460 = vmatpush2.msra.mxu0 0.0
        %2461 = vmatprep.subr.mxu0 0.0
        %2462 = vmatpush2.msra.mxu0 0.0
        %2463 = vmatprep.subr.mxu0 0.0
        %2464 = vmatpush2.msra.mxu0 0.0
        %2465 = vmatprep.subr.mxu0 0.0
        %2466 = vmatpush2.msra.mxu0 0.0
        %2467 = vmatprep.subr.mxu0 0.0
        %2468 = vmatpush2.msra.mxu0 0.0
        %2469 = vmatprep.subr.mxu0 0.0
        %2470 = vmatpush2.msra.mxu0 0.0
        %2471 = vmatprep.subr.mxu0 0.0
        %2472 = vmatpush2.msra.mxu0 0.0
        %2473 = vmatprep.mubr.f32.mxu0 0.0
        %2474 = vmatmul.mubr.f32.gmra.mxu0 %v2407
        %v2475 = vpop.f32.mrf.mxu0
        %v2476 = vadd.f32 0.0, %v2475
        %v2477 = vpop.f32.mrf.mxu0
        %2478 = vdwg.mxu0
        %v2480 = vsel %vm974, %v2476, 0
        %2482 = vmatprep.subr.mxu0 0.0
        %2483 = vmatpush1.msra.mxu0 0.0
        %2484 = vmatprep.subr.mxu0 0.0
        %2485 = vmatpush1.msra.mxu0 0.0
        %2486 = vmatprep.subr.mxu0 0.0
        %2487 = vmatpush1.msra.mxu0 0.0
        %2488 = vmatprep.subr.mxu0 0.0
        %2489 = vmatpush1.msra.mxu0 0.0
        %2490 = vmatprep.subr.mxu0 0.0
        %2491 = vmatpush1.msra.mxu0 0.0
        %2492 = vmatprep.subr.mxu0 0.0
        %2493 = vmatpush1.msra.mxu0 0.0
        %2494 = vmatprep.subr.mxu0 0.0
        %2495 = vmatpush1.msra.mxu0 0.0
        %2496 = vmatprep.subr.mxu0 0.0
        %2497 = vmatpush1.msra.mxu0 0.0
        %2498 = vmatprep.subr.mxu0 0.0
        %2499 = vmatpush1.msra.mxu0 0.0
        %2500 = vmatprep.subr.mxu0 0.0
        %2501 = vmatpush1.msra.mxu0 0.0
        %2502 = vmatprep.subr.mxu0 0.0
        %2503 = vmatpush1.msra.mxu0 0.0
        %2504 = vmatprep.subr.mxu0 0.0
        %2505 = vmatpush1.msra.mxu0 0.0
        %2506 = vmatprep.subr.mxu0 0.0
        %2507 = vmatpush1.msra.mxu0 0.0
        %2508 = vmatprep.subr.mxu0 0.0
        %2509 = vmatpush1.msra.mxu0 0.0
        %2510 = vmatprep.subr.mxu0 0.0
        %2511 = vmatpush1.msra.mxu0 0.0
        %2512 = vmatprep.subr.mxu0 0.0
        %2513 = vmatpush1.msra.mxu0 %v2142
        %2514 = vmatprep.subr.mxu0 0.0
        %2515 = vmatpush2.msra.mxu0 0.0
        %2516 = vmatprep.subr.mxu0 0.0
        %2517 = vmatpush2.msra.mxu0 0.0
        %2518 = vmatprep.subr.mxu0 0.0
        %2519 = vmatpush2.msra.mxu0 0.0
        %2520 = vmatprep.subr.mxu0 0.0
        %2521 = vmatpush2.msra.mxu0 0.0
        %2522 = vmatprep.subr.mxu0 0.0
        %2523 = vmatpush2.msra.mxu0 0.0
        %2524 = vmatprep.subr.mxu0 0.0
        %2525 = vmatpush2.msra.mxu0 0.0
        %2526 = vmatprep.subr.mxu0 0.0
        %2527 = vmatpush2.msra.mxu0 0.0
        %2528 = vmatprep.subr.mxu0 0.0
        %2529 = vmatpush2.msra.mxu0 0.0
        %2530 = vmatprep.subr.mxu0 0.0
        %2531 = vmatpush2.msra.mxu0 0.0
        %2532 = vmatprep.subr.mxu0 0.0
        %2533 = vmatpush2.msra.mxu0 0.0
        %2534 = vmatprep.subr.mxu0 0.0
        %2535 = vmatpush2.msra.mxu0 0.0
        %2536 = vmatprep.subr.mxu0 0.0
        %2537 = vmatpush2.msra.mxu0 0.0
        %2538 = vmatprep.subr.mxu0 0.0
        %2539 = vmatpush2.msra.mxu0 0.0
        %2540 = vmatprep.subr.mxu0 0.0
        %2541 = vmatpush2.msra.mxu0 0.0
        %2542 = vmatprep.subr.mxu0 0.0
        %2543 = vmatpush2.msra.mxu0 0.0
        %2544 = vmatprep.subr.mxu0 0.0
        %2545 = vmatpush2.msra.mxu0 0.0
        %2546 = vmatprep.mubr.f32.mxu0 0.0
        %2547 = vmatmul.mubr.f32.gmra.mxu0 %v2480
        %v2548 = vpop.f32.mrf.mxu0
        %v2549 = vadd.f32 0.0, %v2548
        %v2550 = vpop.f32.mrf.mxu0
        %2551 = vdwg.mxu0
        %v2553 = vsel %vm974, %v2309, 0
        %2555 = vmatprep.subr.mxu0 0.0
        %2556 = vmatpush1.msra.mxu0 0.0
        %2557 = vmatprep.subr.mxu0 0.0
        %2558 = vmatpush1.msra.mxu0 0.0
        %2559 = vmatprep.subr.mxu0 0.0
        %2560 = vmatpush1.msra.mxu0 0.0
        %2561 = vmatprep.subr.mxu0 0.0
        %2562 = vmatpush1.msra.mxu0 0.0
        %2563 = vmatprep.subr.mxu0 0.0
        %2564 = vmatpush1.msra.mxu0 0.0
        %2565 = vmatprep.subr.mxu0 0.0
        %2566 = vmatpush1.msra.mxu0 0.0
        %2567 = vmatprep.subr.mxu0 0.0
        %2568 = vmatpush1.msra.mxu0 0.0
        %2569 = vmatprep.subr.mxu0 0.0
        %2570 = vmatpush1.msra.mxu0 0.0
        %2571 = vmatprep.subr.mxu0 0.0
        %2572 = vmatpush1.msra.mxu0 0.0
        %2573 = vmatprep.subr.mxu0 0.0
        %2574 = vmatpush1.msra.mxu0 0.0
        %2575 = vmatprep.subr.mxu0 0.0
        %2576 = vmatpush1.msra.mxu0 0.0
        %2577 = vmatprep.subr.mxu0 0.0
        %2578 = vmatpush1.msra.mxu0 0.0
        %2579 = vmatprep.subr.mxu0 0.0
        %2580 = vmatpush1.msra.mxu0 0.0
        %2581 = vmatprep.subr.mxu0 0.0
        %2582 = vmatpush1.msra.mxu0 0.0
        %2583 = vmatprep.subr.mxu0 0.0
        %2584 = vmatpush1.msra.mxu0 0.0
        %2585 = vmatprep.subr.mxu0 0.0
        %2586 = vmatpush1.msra.mxu0 %v2141
        %2587 = vmatprep.subr.mxu0 0.0
        %2588 = vmatpush2.msra.mxu0 0.0
        %2589 = vmatprep.subr.mxu0 0.0
        %2590 = vmatpush2.msra.mxu0 0.0
        %2591 = vmatprep.subr.mxu0 0.0
        %2592 = vmatpush2.msra.mxu0 0.0
        %2593 = vmatprep.subr.mxu0 0.0
        %2594 = vmatpush2.msra.mxu0 0.0
        %2595 = vmatprep.subr.mxu0 0.0
        %2596 = vmatpush2.msra.mxu0 0.0
        %2597 = vmatprep.subr.mxu0 0.0
        %2598 = vmatpush2.msra.mxu0 0.0
        %2599 = vmatprep.subr.mxu0 0.0
        %2600 = vmatpush2.msra.mxu0 0.0
        %2601 = vmatprep.subr.mxu0 0.0
        %2602 = vmatpush2.msra.mxu0 0.0
        %2603 = vmatprep.subr.mxu0 0.0
        %2604 = vmatpush2.msra.mxu0 0.0
        %2605 = vmatprep.subr.mxu0 0.0
        %2606 = vmatpush2.msra.mxu0 0.0
        %2607 = vmatprep.subr.mxu0 0.0
        %2608 = vmatpush2.msra.mxu0 0.0
        %2609 = vmatprep.subr.mxu0 0.0
        %2610 = vmatpush2.msra.mxu0 0.0
        %2611 = vmatprep.subr.mxu0 0.0
        %2612 = vmatpush2.msra.mxu0 0.0
        %2613 = vmatprep.subr.mxu0 0.0
        %2614 = vmatpush2.msra.mxu0 0.0
        %2615 = vmatprep.subr.mxu0 0.0
        %2616 = vmatpush2.msra.mxu0 0.0
        %2617 = vmatprep.subr.mxu0 0.0
        %2618 = vmatpush2.msra.mxu0 0.0
        %2619 = vmatprep.mubr.f32.mxu0 0.0
        %2620 = vmatmul.mubr.f32.gmra.mxu0 %v2553
        %v2621 = vpop.f32.mrf.mxu0
        %v2622 = vadd.f32 %v2549, %v2621
        %v2623 = vpop.f32.mrf.mxu0
        %2624 = vdwg.mxu0
        %2625 = vrot.lane.b32.xlu0 %v2054, 112
        %v2626 = vpop.permute.xlu0 %2625
        %2627 = vrot.lane.b32.xlu0 %v2138, 112
        %v2628 = vpop.permute.xlu0 %2627
        %v2629 = vsel %vm974, %v2626, 0
        %v2631 = vsel %vm974, %v2628, 0
        %2633 = vmatprep.subr.mxu0 0.0
        %2634 = vmatpush1.xpose.msra.mxu0 0.0
        %2635 = vmatprep.subr.mxu0 0.0
        %2636 = vmatpush1.xpose.msra.mxu0 0.0
        %2637 = vmatprep.subr.mxu0 0.0
        %2638 = vmatpush1.xpose.msra.mxu0 0.0
        %2639 = vmatprep.subr.mxu0 0.0
        %2640 = vmatpush1.xpose.msra.mxu0 0.0
        %2641 = vmatprep.subr.mxu0 0.0
        %2642 = vmatpush1.xpose.msra.mxu0 0.0
        %2643 = vmatprep.subr.mxu0 0.0
        %2644 = vmatpush1.xpose.msra.mxu0 0.0
        %2645 = vmatprep.subr.mxu0 0.0
        %2646 = vmatpush1.xpose.msra.mxu0 0.0
        %2647 = vmatprep.subr.mxu0 0.0
        %2648 = vmatpush1.xpose.msra.mxu0 0.0
        %2649 = vmatprep.subr.mxu0 0.0
        %2650 = vmatpush1.xpose.msra.mxu0 0.0
        %2651 = vmatprep.subr.mxu0 0.0
        %2652 = vmatpush1.xpose.msra.mxu0 0.0
        %2653 = vmatprep.subr.mxu0 0.0
        %2654 = vmatpush1.xpose.msra.mxu0 0.0
        %2655 = vmatprep.subr.mxu0 0.0
        %2656 = vmatpush1.xpose.msra.mxu0 0.0
        %2657 = vmatprep.subr.mxu0 0.0
        %2658 = vmatpush1.xpose.msra.mxu0 0.0
        %2659 = vmatprep.subr.mxu0 0.0
        %2660 = vmatpush1.xpose.msra.mxu0 0.0
        %2661 = vmatprep.subr.mxu0 0.0
        %2662 = vmatpush1.xpose.msra.mxu0 0.0
        %2663 = vmatprep.subr.mxu0 0.0
        %2664 = vmatpush1.xpose.msra.mxu0 %v2631
        %2665 = vmatprep.subr.mxu0 0.0
        %2666 = vmatpush2.xpose.msra.mxu0 0.0
        %2667 = vmatprep.subr.mxu0 0.0
        %2668 = vmatpush2.xpose.msra.mxu0 0.0
        %2669 = vmatprep.subr.mxu0 0.0
        %2670 = vmatpush2.xpose.msra.mxu0 0.0
        %2671 = vmatprep.subr.mxu0 0.0
        %2672 = vmatpush2.xpose.msra.mxu0 0.0
        %2673 = vmatprep.subr.mxu0 0.0
        %2674 = vmatpush2.xpose.msra.mxu0 0.0
        %2675 = vmatprep.subr.mxu0 0.0
        %2676 = vmatpush2.xpose.msra.mxu0 0.0
        %2677 = vmatprep.subr.mxu0 0.0
        %2678 = vmatpush2.xpose.msra.mxu0 0.0
        %2679 = vmatprep.subr.mxu0 0.0
        %2680 = vmatpush2.xpose.msra.mxu0 0.0
        %2681 = vmatprep.subr.mxu0 0.0
        %2682 = vmatpush2.xpose.msra.mxu0 0.0
        %2683 = vmatprep.subr.mxu0 0.0
        %2684 = vmatpush2.xpose.msra.mxu0 0.0
        %2685 = vmatprep.subr.mxu0 0.0
        %2686 = vmatpush2.xpose.msra.mxu0 0.0
        %2687 = vmatprep.subr.mxu0 0.0
        %2688 = vmatpush2.xpose.msra.mxu0 0.0
        %2689 = vmatprep.subr.mxu0 0.0
        %2690 = vmatpush2.xpose.msra.mxu0 0.0
        %2691 = vmatprep.subr.mxu0 0.0
        %2692 = vmatpush2.xpose.msra.mxu0 0.0
        %2693 = vmatprep.subr.mxu0 0.0
        %2694 = vmatpush2.xpose.msra.mxu0 0.0
        %2695 = vmatprep.subr.mxu0 0.0
        %2696 = vmatpush2.xpose.msra.mxu0 0.0
        %2697 = vmatprep.mubr.f32.mxu0 0.0
        %2698 = vmatmul.mubr.f32.gmra.mxu0 %v2629
        %v2699 = vpop.f32.mrf.mxu0
        %v2700 = vadd.f32 0.0, %v2699
        %v2701 = vpop.f32.mrf.mxu0
        %2702 = vdwg.mxu0
        %v2703 = vmul.f32 %v2700, 0.35355338
        %v2704 = vsel %vm2223, -1e+09, %v2703
        %v2705 = vsel %vm974, %v2704, -inf
        %2706 = vmax.xlane.f32.xlu0 %v2705
        %v2707 = vpop.xlane.xlu0 %2706
        %v2708 = vsub.f32 %v2704, %v2707
        %v2709 = vmul.f32 %v2708, 1.442695
        %v2710 = vpow.pop %v2709
        %v2711 = vsel %vm974, %v2710, 0.0
        %2712 = vadd.xlane.f32.xlu0 %v2711
        %v2713 = vpop.xlane.xlu0 %2712
        %v2714 = vrcp.pop %v2713
        %v2715 = vmul.f32 %v2710, %v2714
        %2716 = vrot.lane.b32.xlu0 %v2138, 80
        %v2717 = vpop.permute.xlu0 %2716
        %v2720 = vsel %vm974, %v2715, 0
        %2722 = vmatprep.subr.mxu0 0.0
        %2723 = vmatpush1.msra.mxu0 0.0
        %2724 = vmatprep.subr.mxu0 0.0
        %2725 = vmatpush1.msra.mxu0 0.0
        %2726 = vmatprep.subr.mxu0 0.0
        %2727 = vmatpush1.msra.mxu0 0.0
        %2728 = vmatprep.subr.mxu0 0.0
        %2729 = vmatpush1.msra.mxu0 0.0
        %2730 = vmatprep.subr.mxu0 0.0
        %2731 = vmatpush1.msra.mxu0 0.0
        %2732 = vmatprep.subr.mxu0 0.0
        %2733 = vmatpush1.msra.mxu0 0.0
        %2734 = vmatprep.subr.mxu0 0.0
        %2735 = vmatpush1.msra.mxu0 0.0
        %2736 = vmatprep.subr.mxu0 0.0
        %2737 = vmatpush1.msra.mxu0 0.0
        %2738 = vmatprep.subr.mxu0 0.0
        %2739 = vmatpush1.msra.mxu0 0.0
        %2740 = vmatprep.subr.mxu0 0.0
        %2741 = vmatpush1.msra.mxu0 0.0
        %2742 = vmatprep.subr.mxu0 0.0
        %2743 = vmatpush1.msra.mxu0 0.0
        %2744 = vmatprep.subr.mxu0 0.0
        %2745 = vmatpush1.msra.mxu0 0.0
        %2746 = vmatprep.subr.mxu0 0.0
        %2747 = vmatpush1.msra.mxu0 0.0
        %2748 = vmatprep.subr.mxu0 0.0
        %2749 = vmatpush1.msra.mxu0 0.0
        %2750 = vmatprep.subr.mxu0 0.0
        %2751 = vmatpush1.msra.mxu0 0.0
        %2752 = vmatprep.subr.mxu0 0.0
        %2753 = vmatpush1.msra.mxu0 %v2717
        %2754 = vmatprep.subr.mxu0 0.0
        %2755 = vmatpush2.msra.mxu0 0.0
        %2756 = vmatprep.subr.mxu0 0.0
        %2757 = vmatpush2.msra.mxu0 0.0
        %2758 = vmatprep.subr.mxu0 0.0
        %2759 = vmatpush2.msra.mxu0 0.0
        %2760 = vmatprep.subr.mxu0 0.0
        %2761 = vmatpush2.msra.mxu0 0.0
        %2762 = vmatprep.subr.mxu0 0.0
        %2763 = vmatpush2.msra.mxu0 0.0
        %2764 = vmatprep.subr.mxu0 0.0
        %2765 = vmatpush2.msra.mxu0 0.0
        %2766 = vmatprep.subr.mxu0 0.0
        %2767 = vmatpush2.msra.mxu0 0.0
        %2768 = vmatprep.subr.mxu0 0.0
        %2769 = vmatpush2.msra.mxu0 0.0
        %2770 = vmatprep.subr.mxu0 0.0
        %2771 = vmatpush2.msra.mxu0 0.0
        %2772 = vmatprep.subr.mxu0 0.0
        %2773 = vmatpush2.msra.mxu0 0.0
        %2774 = vmatprep.subr.mxu0 0.0
        %2775 = vmatpush2.msra.mxu0 0.0
        %2776 = vmatprep.subr.mxu0 0.0
        %2777 = vmatpush2.msra.mxu0 0.0
        %2778 = vmatprep.subr.mxu0 0.0
        %2779 = vmatpush2.msra.mxu0 0.0
        %2780 = vmatprep.subr.mxu0 0.0
        %2781 = vmatpush2.msra.mxu0 0.0
        %2782 = vmatprep.subr.mxu0 0.0
        %2783 = vmatpush2.msra.mxu0 0.0
        %2784 = vmatprep.subr.mxu0 0.0
        %2785 = vmatpush2.msra.mxu0 0.0
        %2786 = vmatprep.mubr.f32.mxu0 0.0
        %2787 = vmatmul.mubr.f32.gmra.mxu0 %v2720
        %v2788 = vpop.f32.mrf.mxu0
        %v2789 = vadd.f32 0.0, %v2788
        %v2790 = vpop.f32.mrf.mxu0
        %2791 = vdwg.mxu0
        %v2793 = vsel %vm974, %v2789, 0
        %2795 = vmatprep.subr.mxu0 0.0
        %2796 = vmatpush1.msra.mxu0 0.0
        %2797 = vmatprep.subr.mxu0 0.0
        %2798 = vmatpush1.msra.mxu0 0.0
        %2799 = vmatprep.subr.mxu0 0.0
        %2800 = vmatpush1.msra.mxu0 0.0
        %2801 = vmatprep.subr.mxu0 0.0
        %2802 = vmatpush1.msra.mxu0 0.0
        %2803 = vmatprep.subr.mxu0 0.0
        %2804 = vmatpush1.msra.mxu0 0.0
        %2805 = vmatprep.subr.mxu0 0.0
        %2806 = vmatpush1.msra.mxu0 0.0
        %2807 = vmatprep.subr.mxu0 0.0
        %2808 = vmatpush1.msra.mxu0 0.0
        %2809 = vmatprep.subr.mxu0 0.0
        %2810 = vmatpush1.msra.mxu0 0.0
        %2811 = vmatprep.subr.mxu0 0.0
        %2812 = vmatpush1.msra.mxu0 0.0
        %2813 = vmatprep.subr.mxu0 0.0
        %2814 = vmatpush1.msra.mxu0 0.0
        %2815 = vmatprep.subr.mxu0 0.0
        %2816 = vmatpush1.msra.mxu0 0.0
        %2817 = vmatprep.subr.mxu0 0.0
        %2818 = vmatpush1.msra.mxu0 0.0
        %2819 = vmatprep.subr.mxu0 0.0
        %2820 = vmatpush1.msra.mxu0 0.0
        %2821 = vmatprep.subr.mxu0 0.0
        %2822 = vmatpush1.msra.mxu0 0.0
        %2823 = vmatprep.subr.mxu0 0.0
        %2824 = vmatpush1.msra.mxu0 0.0
        %2825 = vmatprep.subr.mxu0 0.0
        %2826 = vmatpush1.msra.mxu0 %v2143
        %2827 = vmatprep.subr.mxu0 0.0
        %2828 = vmatpush2.msra.mxu0 0.0
        %2829 = vmatprep.subr.mxu0 0.0
        %2830 = vmatpush2.msra.mxu0 0.0
        %2831 = vmatprep.subr.mxu0 0.0
        %2832 = vmatpush2.msra.mxu0 0.0
        %2833 = vmatprep.subr.mxu0 0.0
        %2834 = vmatpush2.msra.mxu0 0.0
        %2835 = vmatprep.subr.mxu0 0.0
        %2836 = vmatpush2.msra.mxu0 0.0
        %2837 = vmatprep.subr.mxu0 0.0
        %2838 = vmatpush2.msra.mxu0 0.0
        %2839 = vmatprep.subr.mxu0 0.0
        %2840 = vmatpush2.msra.mxu0 0.0
        %2841 = vmatprep.subr.mxu0 0.0
        %2842 = vmatpush2.msra.mxu0 0.0
        %2843 = vmatprep.subr.mxu0 0.0
        %2844 = vmatpush2.msra.mxu0 0.0
        %2845 = vmatprep.subr.mxu0 0.0
        %2846 = vmatpush2.msra.mxu0 0.0
        %2847 = vmatprep.subr.mxu0 0.0
        %2848 = vmatpush2.msra.mxu0 0.0
        %2849 = vmatprep.subr.mxu0 0.0
        %2850 = vmatpush2.msra.mxu0 0.0
        %2851 = vmatprep.subr.mxu0 0.0
        %2852 = vmatpush2.msra.mxu0 0.0
        %2853 = vmatprep.subr.mxu0 0.0
        %2854 = vmatpush2.msra.mxu0 0.0
        %2855 = vmatprep.subr.mxu0 0.0
        %2856 = vmatpush2.msra.mxu0 0.0
        %2857 = vmatprep.subr.mxu0 0.0
        %2858 = vmatpush2.msra.mxu0 0.0
        %2859 = vmatprep.mubr.f32.mxu0 0.0
        %2860 = vmatmul.mubr.f32.gmra.mxu0 %v2793
        %v2861 = vpop.f32.mrf.mxu0
        %v2862 = vadd.f32 0.0, %v2861
        %v2863 = vpop.f32.mrf.mxu0
        %2864 = vdwg.mxu0
        %v2865 = vadd.f32 %v2622, %v2862
        %2866 = vrot.lane.b32.xlu0 %v2054, 104
        %v2867 = vpop.permute.xlu0 %2866
        %2868 = vrot.lane.b32.xlu0 %v2138, 104
        %v2869 = vpop.permute.xlu0 %2868
        %v2870 = vsel %vm974, %v2867, 0
        %v2872 = vsel %vm974, %v2869, 0
        %2874 = vmatprep.subr.mxu0 0.0
        %2875 = vmatpush1.xpose.msra.mxu0 0.0
        %2876 = vmatprep.subr.mxu0 0.0
        %2877 = vmatpush1.xpose.msra.mxu0 0.0
        %2878 = vmatprep.subr.mxu0 0.0
        %2879 = vmatpush1.xpose.msra.mxu0 0.0
        %2880 = vmatprep.subr.mxu0 0.0
        %2881 = vmatpush1.xpose.msra.mxu0 0.0
        %2882 = vmatprep.subr.mxu0 0.0
        %2883 = vmatpush1.xpose.msra.mxu0 0.0
        %2884 = vmatprep.subr.mxu0 0.0
        %2885 = vmatpush1.xpose.msra.mxu0 0.0
        %2886 = vmatprep.subr.mxu0 0.0
        %2887 = vmatpush1.xpose.msra.mxu0 0.0
        %2888 = vmatprep.subr.mxu0 0.0
        %2889 = vmatpush1.xpose.msra.mxu0 0.0
        %2890 = vmatprep.subr.mxu0 0.0
        %2891 = vmatpush1.xpose.msra.mxu0 0.0
        %2892 = vmatprep.subr.mxu0 0.0
        %2893 = vmatpush1.xpose.msra.mxu0 0.0
        %2894 = vmatprep.subr.mxu0 0.0
        %2895 = vmatpush1.xpose.msra.mxu0 0.0
        %2896 = vmatprep.subr.mxu0 0.0
        %2897 = vmatpush1.xpose.msra.mxu0 0.0
        %2898 = vmatprep.subr.mxu0 0.0
        %2899 = vmatpush1.xpose.msra.mxu0 0.0
        %2900 = vmatprep.subr.mxu0 0.0
        %2901 = vmatpush1.xpose.msra.mxu0 0.0
        %2902 = vmatprep.subr.mxu0 0.0
        %2903 = vmatpush1.xpose.msra.mxu0 0.0
        %2904 = vmatprep.subr.mxu0 0.0
        %2905 = vmatpush1.xpose.msra.mxu0 %v2872
        %2906 = vmatprep.subr.mxu0 0.0
        %2907 = vmatpush2.xpose.msra.mxu0 0.0
        %2908 = vmatprep.subr.mxu0 0.0
        %2909 = vmatpush2.xpose.msra.mxu0 0.0
        %2910 = vmatprep.subr.mxu0 0.0
        %2911 = vmatpush2.xpose.msra.mxu0 0.0
        %2912 = vmatprep.subr.mxu0 0.0
        %2913 = vmatpush2.xpose.msra.mxu0 0.0
        %2914 = vmatprep.subr.mxu0 0.0
        %2915 = vmatpush2.xpose.msra.mxu0 0.0
        %2916 = vmatprep.subr.mxu0 0.0
        %2917 = vmatpush2.xpose.msra.mxu0 0.0
        %2918 = vmatprep.subr.mxu0 0.0
        %2919 = vmatpush2.xpose.msra.mxu0 0.0
        %2920 = vmatprep.subr.mxu0 0.0
        %2921 = vmatpush2.xpose.msra.mxu0 0.0
        %2922 = vmatprep.subr.mxu0 0.0
        %2923 = vmatpush2.xpose.msra.mxu0 0.0
        %2924 = vmatprep.subr.mxu0 0.0
        %2925 = vmatpush2.xpose.msra.mxu0 0.0
        %2926 = vmatprep.subr.mxu0 0.0
        %2927 = vmatpush2.xpose.msra.mxu0 0.0
        %2928 = vmatprep.subr.mxu0 0.0
        %2929 = vmatpush2.xpose.msra.mxu0 0.0
        %2930 = vmatprep.subr.mxu0 0.0
        %2931 = vmatpush2.xpose.msra.mxu0 0.0
        %2932 = vmatprep.subr.mxu0 0.0
        %2933 = vmatpush2.xpose.msra.mxu0 0.0
        %2934 = vmatprep.subr.mxu0 0.0
        %2935 = vmatpush2.xpose.msra.mxu0 0.0
        %2936 = vmatprep.subr.mxu0 0.0
        %2937 = vmatpush2.xpose.msra.mxu0 0.0
        %2938 = vmatprep.mubr.f32.mxu0 0.0
        %2939 = vmatmul.mubr.f32.gmra.mxu0 %v2870
        %v2940 = vpop.f32.mrf.mxu0
        %v2941 = vadd.f32 0.0, %v2940
        %v2942 = vpop.f32.mrf.mxu0
        %2943 = vdwg.mxu0
        %v2944 = vmul.f32 %v2941, 0.35355338
        %v2945 = vsel %vm2223, -1e+09, %v2944
        %v2946 = vsel %vm974, %v2945, -inf
        %2947 = vmax.xlane.f32.xlu0 %v2946
        %v2948 = vpop.xlane.xlu0 %2947
        %v2949 = vsub.f32 %v2945, %v2948
        %v2950 = vmul.f32 %v2949, 1.442695
        %v2951 = vpow.pop %v2950
        %v2952 = vsel %vm974, %v2951, 0.0
        %2953 = vadd.xlane.f32.xlu0 %v2952
        %v2954 = vpop.xlane.xlu0 %2953
        %v2955 = vrcp.pop %v2954
        %v2956 = vmul.f32 %v2951, %v2955
        %2957 = vrot.lane.b32.xlu0 %v2138, 72
        %v2958 = vpop.permute.xlu0 %2957
        %v2961 = vsel %vm974, %v2956, 0
        %2963 = vmatprep.subr.mxu0 0.0
        %2964 = vmatpush1.msra.mxu0 0.0
        %2965 = vmatprep.subr.mxu0 0.0
        %2966 = vmatpush1.msra.mxu0 0.0
        %2967 = vmatprep.subr.mxu0 0.0
        %2968 = vmatpush1.msra.mxu0 0.0
        %2969 = vmatprep.subr.mxu0 0.0
        %2970 = vmatpush1.msra.mxu0 0.0
        %2971 = vmatprep.subr.mxu0 0.0
        %2972 = vmatpush1.msra.mxu0 0.0
        %2973 = vmatprep.subr.mxu0 0.0
        %2974 = vmatpush1.msra.mxu0 0.0
        %2975 = vmatprep.subr.mxu0 0.0
        %2976 = vmatpush1.msra.mxu0 0.0
        %2977 = vmatprep.subr.mxu0 0.0
        %2978 = vmatpush1.msra.mxu0 0.0
        %2979 = vmatprep.subr.mxu0 0.0
        %2980 = vmatpush1.msra.mxu0 0.0
        %2981 = vmatprep.subr.mxu0 0.0
        %2982 = vmatpush1.msra.mxu0 0.0
        %2983 = vmatprep.subr.mxu0 0.0
        %2984 = vmatpush1.msra.mxu0 0.0
        %2985 = vmatprep.subr.mxu0 0.0
        %2986 = vmatpush1.msra.mxu0 0.0
        %2987 = vmatprep.subr.mxu0 0.0
        %2988 = vmatpush1.msra.mxu0 0.0
        %2989 = vmatprep.subr.mxu0 0.0
        %2990 = vmatpush1.msra.mxu0 0.0
        %2991 = vmatprep.subr.mxu0 0.0
        %2992 = vmatpush1.msra.mxu0 0.0
        %2993 = vmatprep.subr.mxu0 0.0
        %2994 = vmatpush1.msra.mxu0 %v2958
        %2995 = vmatprep.subr.mxu0 0.0
        %2996 = vmatpush2.msra.mxu0 0.0
        %2997 = vmatprep.subr.mxu0 0.0
        %2998 = vmatpush2.msra.mxu0 0.0
        %2999 = vmatprep.subr.mxu0 0.0
        %3000 = vmatpush2.msra.mxu0 0.0
        %3001 = vmatprep.subr.mxu0 0.0
        %3002 = vmatpush2.msra.mxu0 0.0
        %3003 = vmatprep.subr.mxu0 0.0
        %3004 = vmatpush2.msra.mxu0 0.0
        %3005 = vmatprep.subr.mxu0 0.0
        %3006 = vmatpush2.msra.mxu0 0.0
        %3007 = vmatprep.subr.mxu0 0.0
        %3008 = vmatpush2.msra.mxu0 0.0
        %3009 = vmatprep.subr.mxu0 0.0
        %3010 = vmatpush2.msra.mxu0 0.0
        %3011 = vmatprep.subr.mxu0 0.0
        %3012 = vmatpush2.msra.mxu0 0.0
        %3013 = vmatprep.subr.mxu0 0.0
        %3014 = vmatpush2.msra.mxu0 0.0
        %3015 = vmatprep.subr.mxu0 0.0
        %3016 = vmatpush2.msra.mxu0 0.0
        %3017 = vmatprep.subr.mxu0 0.0
        %3018 = vmatpush2.msra.mxu0 0.0
        %3019 = vmatprep.subr.mxu0 0.0
        %3020 = vmatpush2.msra.mxu0 0.0
        %3021 = vmatprep.subr.mxu0 0.0
        %3022 = vmatpush2.msra.mxu0 0.0
        %3023 = vmatprep.subr.mxu0 0.0
        %3024 = vmatpush2.msra.mxu0 0.0
        %3025 = vmatprep.subr.mxu0 0.0
        %3026 = vmatpush2.msra.mxu0 0.0
        %3027 = vmatprep.mubr.f32.mxu0 0.0
        %3028 = vmatmul.mubr.f32.gmra.mxu0 %v2961
        %v3029 = vpop.f32.mrf.mxu0
        %v3030 = vadd.f32 0.0, %v3029
        %v3031 = vpop.f32.mrf.mxu0
        %3032 = vdwg.mxu0
        %v3034 = vsel %vm974, %v3030, 0
        %3036 = vmatprep.subr.mxu0 0.0
        %3037 = vmatpush1.msra.mxu0 0.0
        %3038 = vmatprep.subr.mxu0 0.0
        %3039 = vmatpush1.msra.mxu0 0.0
        %3040 = vmatprep.subr.mxu0 0.0
        %3041 = vmatpush1.msra.mxu0 0.0
        %3042 = vmatprep.subr.mxu0 0.0
        %3043 = vmatpush1.msra.mxu0 0.0
        %3044 = vmatprep.subr.mxu0 0.0
        %3045 = vmatpush1.msra.mxu0 0.0
        %3046 = vmatprep.subr.mxu0 0.0
        %3047 = vmatpush1.msra.mxu0 0.0
        %3048 = vmatprep.subr.mxu0 0.0
        %3049 = vmatpush1.msra.mxu0 0.0
        %3050 = vmatprep.subr.mxu0 0.0
        %3051 = vmatpush1.msra.mxu0 0.0
        %3052 = vmatprep.subr.mxu0 0.0
        %3053 = vmatpush1.msra.mxu0 0.0
        %3054 = vmatprep.subr.mxu0 0.0
        %3055 = vmatpush1.msra.mxu0 0.0
        %3056 = vmatprep.subr.mxu0 0.0
        %3057 = vmatpush1.msra.mxu0 0.0
        %3058 = vmatprep.subr.mxu0 0.0
        %3059 = vmatpush1.msra.mxu0 0.0
        %3060 = vmatprep.subr.mxu0 0.0
        %3061 = vmatpush1.msra.mxu0 0.0
        %3062 = vmatprep.subr.mxu0 0.0
        %3063 = vmatpush1.msra.mxu0 0.0
        %3064 = vmatprep.subr.mxu0 0.0
        %3065 = vmatpush1.msra.mxu0 0.0
        %3066 = vmatprep.subr.mxu0 0.0
        %3067 = vmatpush1.msra.mxu0 %v2144
        %3068 = vmatprep.subr.mxu0 0.0
        %3069 = vmatpush2.msra.mxu0 0.0
        %3070 = vmatprep.subr.mxu0 0.0
        %3071 = vmatpush2.msra.mxu0 0.0
        %3072 = vmatprep.subr.mxu0 0.0
        %3073 = vmatpush2.msra.mxu0 0.0
        %3074 = vmatprep.subr.mxu0 0.0
        %3075 = vmatpush2.msra.mxu0 0.0
        %3076 = vmatprep.subr.mxu0 0.0
        %3077 = vmatpush2.msra.mxu0 0.0
        %3078 = vmatprep.subr.mxu0 0.0
        %3079 = vmatpush2.msra.mxu0 0.0
        %3080 = vmatprep.subr.mxu0 0.0
        %3081 = vmatpush2.msra.mxu0 0.0
        %3082 = vmatprep.subr.mxu0 0.0
        %3083 = vmatpush2.msra.mxu0 0.0
        %3084 = vmatprep.subr.mxu0 0.0
        %3085 = vmatpush2.msra.mxu0 0.0
        %3086 = vmatprep.subr.mxu0 0.0
        %3087 = vmatpush2.msra.mxu0 0.0
        %3088 = vmatprep.subr.mxu0 0.0
        %3089 = vmatpush2.msra.mxu0 0.0
        %3090 = vmatprep.subr.mxu0 0.0
        %3091 = vmatpush2.msra.mxu0 0.0
        %3092 = vmatprep.subr.mxu0 0.0
        %3093 = vmatpush2.msra.mxu0 0.0
        %3094 = vmatprep.subr.mxu0 0.0
        %3095 = vmatpush2.msra.mxu0 0.0
        %3096 = vmatprep.subr.mxu0 0.0
        %3097 = vmatpush2.msra.mxu0 0.0
        %3098 = vmatprep.subr.mxu0 0.0
        %3099 = vmatpush2.msra.mxu0 0.0
        %3100 = vmatprep.mubr.f32.mxu0 0.0
        %3101 = vmatmul.mubr.f32.gmra.mxu0 %v3034
        %v3102 = vpop.f32.mrf.mxu0
        %v3103 = vadd.f32 0.0, %v3102
        %v3104 = vpop.f32.mrf.mxu0
        %3105 = vdwg.mxu0
        %v3106 = vadd.f32 %v2865, %v3103
        %v3108 = vlaneseq
        %v3109 = vshrl.u32 %v3108, 7
        %v3110 = vsub.s32 0, %v3109
        %v3111 = vrot.slane %v2145, %v3110
        %v3113 = vadd.f32 %v3106, %v3111
        %v3114 = vadd.f32 %v1941, %v3113
        %v3115 = vld [vmem:[%s16] sm:$0x3]
        %v3116 = vsel %vm850, %v3114, 0.0
        %3117 = vadd.xlane.f32.xlu0 %v3116
        %v3118 = vpop.xlane.xlu0 %3117
        %v3119 = vmul.f32 %v3118, %v854
        %v3120 = vsub.f32 %v3114, %v3119
        %v3121 = vmul.f32 %v3120, %v3120
        %v3122 = vsel %vm850, %v3121, 0.0
        %3123 = vadd.xlane.f32.xlu0 %v3122
        %v3124 = vpop.xlane.xlu0 %3123
        %v3125 = vmul.f32 %v3124, 0.032258064
        %v3126 = vrsqrt.pop %v3125
        %v3127 = vmul.f32 %v3125, %v3126
        %vm3128 = vcmp.eq.f32.partialorder %v3125, inf
        %v3129 = vsel %vm3128, %v3125, %v3127
        %vm3130 = vcmp.eq.f32.partialorder %v3125, 0.0
        %v3131 = vand.u32 %v3125, 2147483648
        %v3132 = vsel %vm3130, %v3131, %v3129
        %v3133 = vadd.f32 %v3132, 1e-06
        %v3134 = vrcp.pop %v3133
        %v3135 = vmul.f32 %v3120, %v3134
        %v3136 = vlaneseq
        %v3137 = vshrl.u32 %v3136, 7
        %v3138 = vsub.s32 0, %v3137
        %v3139 = vrot.slane %v3115, %v3138
        %v3140 = vmul.f32 %v3139, %v3135
        %v3141 = vlaneseq
        %v3142 = vshrl.u32 %v3141, 7
        %v3143 = vsub.s32 1, %v3142
        %v3144 = vrot.slane %v3115, %v3143
        %v3145 = vadd.f32 %v3140, %v3144
        %v3146 = vld [vmem:[#allocation14] sm:$0xff]
        %v3147 = vld [vmem:[#allocation14 + $0x8] sm:$0xff]
        %v3148 = vld [vmem:[#allocation14 + $0x10] sm:$0xff]
        %v3149 = vld [vmem:[#allocation14 + $0x18] sm:$0xff]
        %v3150 = vld [vmem:[#allocation16] sm:$0x1]
        %v3152 = vlaneseq
        %v3153 = vshrl.u32 %v3152, 7
        %v3154 = vsub.s32 0, %v3153
        %v3155 = vrot.slane %v3150, %v3154
        %v3158 = vsel %vm850, %v3145, 0
        %3160 = vmatprep.subr.mxu0 0.0
        %3161 = vmatpush1.msra.mxu0 0.0
        %3162 = vmatprep.subr.mxu0 0.0
        %3163 = vmatpush1.msra.mxu0 0.0
        %3164 = vmatprep.subr.mxu0 0.0
        %3165 = vmatpush1.msra.mxu0 0.0
        %3166 = vmatprep.subr.mxu0 0.0
        %3167 = vmatpush1.msra.mxu0 0.0
        %3168 = vmatprep.subr.mxu0 0.0
        %3169 = vmatpush1.msra.mxu0 0.0
        %3170 = vmatprep.subr.mxu0 0.0
        %3171 = vmatpush1.msra.mxu0 0.0
        %3172 = vmatprep.subr.mxu0 0.0
        %3173 = vmatpush1.msra.mxu0 0.0
        %3174 = vmatprep.subr.mxu0 0.0
        %3175 = vmatpush1.msra.mxu0 0.0
        %3176 = vmatprep.subr.mxu0 0.0
        %3177 = vmatpush1.msra.mxu0 0.0
        %3178 = vmatprep.subr.mxu0 0.0
        %3179 = vmatpush1.msra.mxu0 0.0
        %3180 = vmatprep.subr.mxu0 0.0
        %3181 = vmatpush1.msra.mxu0 0.0
        %3182 = vmatprep.subr.mxu0 0.0
        %3183 = vmatpush1.msra.mxu0 0.0
        %3184 = vmatprep.subr.mxu0 0.0
        %3185 = vmatpush1.msra.mxu0 %v3149
        %3186 = vmatprep.subr.mxu0 0.0
        %3187 = vmatpush1.msra.mxu0 %v3148
        %3188 = vmatprep.subr.mxu0 0.0
        %3189 = vmatpush1.msra.mxu0 %v3147
        %3190 = vmatprep.subr.mxu0 0.0
        %3191 = vmatpush1.msra.mxu0 %v3146
        %3192 = vmatprep.subr.mxu0 0.0
        %3193 = vmatpush2.msra.mxu0 0.0
        %3194 = vmatprep.subr.mxu0 0.0
        %3195 = vmatpush2.msra.mxu0 0.0
        %3196 = vmatprep.subr.mxu0 0.0
        %3197 = vmatpush2.msra.mxu0 0.0
        %3198 = vmatprep.subr.mxu0 0.0
        %3199 = vmatpush2.msra.mxu0 0.0
        %3200 = vmatprep.subr.mxu0 0.0
        %3201 = vmatpush2.msra.mxu0 0.0
        %3202 = vmatprep.subr.mxu0 0.0
        %3203 = vmatpush2.msra.mxu0 0.0
        %3204 = vmatprep.subr.mxu0 0.0
        %3205 = vmatpush2.msra.mxu0 0.0
        %3206 = vmatprep.subr.mxu0 0.0
        %3207 = vmatpush2.msra.mxu0 0.0
        %3208 = vmatprep.subr.mxu0 0.0
        %3209 = vmatpush2.msra.mxu0 0.0
        %3210 = vmatprep.subr.mxu0 0.0
        %3211 = vmatpush2.msra.mxu0 0.0
        %3212 = vmatprep.subr.mxu0 0.0
        %3213 = vmatpush2.msra.mxu0 0.0
        %3214 = vmatprep.subr.mxu0 0.0
        %3215 = vmatpush2.msra.mxu0 0.0
        %3216 = vmatprep.subr.mxu0 0.0
        %3217 = vmatpush2.msra.mxu0 0.0
        %3218 = vmatprep.subr.mxu0 0.0
        %3219 = vmatpush2.msra.mxu0 0.0
        %3220 = vmatprep.subr.mxu0 0.0
        %3221 = vmatpush2.msra.mxu0 0.0
        %3222 = vmatprep.subr.mxu0 0.0
        %3223 = vmatpush2.msra.mxu0 0.0
        %3224 = vmatprep.mubr.f32.mxu0 0.0
        %3225 = vmatmul.mubr.f32.gmra.mxu0 %v3158
        %v3226 = vpop.f32.mrf.mxu0
        %v3227 = vadd.f32 %v3155, %v3226
        %v3228 = vpop.f32.mrf.mxu0
        %3229 = vdwg.mxu0
        %v3230 = vmax.f32 %v3227, 0.0
        %v3231 = vld [vmem:[%s19] sm:$0xff]
        %v3232 = vld [vmem:[%s19 + $0x8] sm:$0xff]
        %v3233 = vld [vmem:[%s19 + $0x10] sm:$0xff]
        %v3234 = vld [vmem:[%s19 + $0x18] sm:$0xff]
        %v3235 = vld [vmem:[%s19 + $0x20] sm:$0xff]
        %v3236 = vld [vmem:[%s19 + $0x28] sm:$0xff]
        %v3237 = vld [vmem:[%s19 + $0x30] sm:$0xff]
        %v3238 = vld [vmem:[%s19 + $0x38] sm:$0xff]
        %v3239 = vld [vmem:[#allocation17] sm:$0x1]
        %v3241 = vlaneseq
        %v3242 = vshrl.u32 %v3241, 7
        %v3243 = vsub.s32 0, %v3242
        %v3244 = vrot.slane %v3239, %v3243
        %vm3246 = vcmask 523264
        %v3248 = vsel %vm3246, %v3230, 0
        %3250 = vmatprep.subr.mxu0 0.0
        %3251 = vmatpush1.msra.mxu0 0.0
        %3252 = vmatprep.subr.mxu0 0.0
        %3253 = vmatpush1.msra.mxu0 0.0
        %3254 = vmatprep.subr.mxu0 0.0
        %3255 = vmatpush1.msra.mxu0 0.0
        %3256 = vmatprep.subr.mxu0 0.0
        %3257 = vmatpush1.msra.mxu0 0.0
        %3258 = vmatprep.subr.mxu0 0.0
        %3259 = vmatpush1.msra.mxu0 0.0
        %3260 = vmatprep.subr.mxu0 0.0
        %3261 = vmatpush1.msra.mxu0 0.0
        %3262 = vmatprep.subr.mxu0 0.0
        %3263 = vmatpush1.msra.mxu0 0.0
        %3264 = vmatprep.subr.mxu0 0.0
        %3265 = vmatpush1.msra.mxu0 0.0
        %3266 = vmatprep.subr.mxu0 0.0
        %3267 = vmatpush1.msra.mxu0 %v3238
        %3268 = vmatprep.subr.mxu0 0.0
        %3269 = vmatpush1.msra.mxu0 %v3237
        %3270 = vmatprep.subr.mxu0 0.0
        %3271 = vmatpush1.msra.mxu0 %v3236
        %3272 = vmatprep.subr.mxu0 0.0
        %3273 = vmatpush1.msra.mxu0 %v3235
        %3274 = vmatprep.subr.mxu0 0.0
        %3275 = vmatpush1.msra.mxu0 %v3234
        %3276 = vmatprep.subr.mxu0 0.0
        %3277 = vmatpush1.msra.mxu0 %v3233
        %3278 = vmatprep.subr.mxu0 0.0
        %3279 = vmatpush1.msra.mxu0 %v3232
        %3280 = vmatprep.subr.mxu0 0.0
        %3281 = vmatpush1.msra.mxu0 %v3231
        %3282 = vmatprep.subr.mxu0 0.0
        %3283 = vmatpush2.msra.mxu0 0.0
        %3284 = vmatprep.subr.mxu0 0.0
        %3285 = vmatpush2.msra.mxu0 0.0
        %3286 = vmatprep.subr.mxu0 0.0
        %3287 = vmatpush2.msra.mxu0 0.0
        %3288 = vmatprep.subr.mxu0 0.0
        %3289 = vmatpush2.msra.mxu0 0.0
        %3290 = vmatprep.subr.mxu0 0.0
        %3291 = vmatpush2.msra.mxu0 0.0
        %3292 = vmatprep.subr.mxu0 0.0
        %3293 = vmatpush2.msra.mxu0 0.0
        %3294 = vmatprep.subr.mxu0 0.0
        %3295 = vmatpush2.msra.mxu0 0.0
        %3296 = vmatprep.subr.mxu0 0.0
        %3297 = vmatpush2.msra.mxu0 0.0
        %3298 = vmatprep.subr.mxu0 0.0
        %3299 = vmatpush2.msra.mxu0 0.0
        %3300 = vmatprep.subr.mxu0 0.0
        %3301 = vmatpush2.msra.mxu0 0.0
        %3302 = vmatprep.subr.mxu0 0.0
        %3303 = vmatpush2.msra.mxu0 0.0
        %3304 = vmatprep.subr.mxu0 0.0
        %3305 = vmatpush2.msra.mxu0 0.0
        %3306 = vmatprep.subr.mxu0 0.0
        %3307 = vmatpush2.msra.mxu0 0.0
        %3308 = vmatprep.subr.mxu0 0.0
        %3309 = vmatpush2.msra.mxu0 0.0
        %3310 = vmatprep.subr.mxu0 0.0
        %3311 = vmatpush2.msra.mxu0 0.0
        %3312 = vmatprep.subr.mxu0 0.0
        %3313 = vmatpush2.msra.mxu0 0.0
        %3314 = vmatprep.mubr.f32.mxu0 0.0
        %3315 = vmatmul.mubr.f32.gmra.mxu0 %v3248
        %v3316 = vpop.f32.mrf.mxu0
        %v3317 = vadd.f32 %v3244, %v3316
        %v3318 = vpop.f32.mrf.mxu0
        %3319 = vdwg.mxu0
        %v3320 = vadd.f32 %v3114, %v3317
        %3321 = vst.msk [vmem:[%s836] sm:$0xff] %vm850, %v3320
        %s3322 = sand.u32 %s514, 1
        %s3323 = scalar_lea.sflag [#allocation4], %s3322
        %s3324 = sand.u32 %s514, 1
        %s3325 = smul.addr %s3324, 8
        %s3326 = scalar_lea.vmem [#allocation19], %s3325
        // Predicated region
        $region145: #{decoder_block.1} parent=103 // pred_check
          %p3327 = pneg %p524
        $region146: #{decoder_block.1} parent=103 // pred_check_branch
          %3329 = sbr.rel (%p3327) target = $region148
        $region147: #{decoder_block.1} parent=103 // pred_region
          %s3331 = ssub.s32 128, 128
          %3332 = vsyncadd %s3323, %s3331
          %s3333 = smul.addr %s45, 128
          %s3334 = scalar_lea.hbm %s21, %s3333
          %s3336 = sshll.u32 %s3326, 4
          %s3337 = int_to_ptr.vmem [resolvable:$true] %s3336
          %3339 = dma.vmem_to_hbm [thread:$0]  %s3337, 128, %s3334, %s3323
        $region148: #{decoder_block.1} parent=103 // pred_fallthru
          _
      $region104: #{decoder_block.1} parent=5 // pred_fallthru
        _
      %p3340 = scmp.le.s32.totalorder 2, %s40
      // Predicated region
      $region149: #{decoder_block.1} parent=5 // pred_check
        %p3341 = pneg %p3340
      $region150: #{decoder_block.1} parent=5 // pred_check_branch
        %3343 = sbr.rel (%p3341) target = $region152
      $region151: #{decoder_block.1} parent=5 // pred_region
        %s3344 = ssub.s32 %s40, 2
        // Predicated region
        $region153: #{decoder_block.1} parent=151 // pred_check
          %p3345 = pneg %p530
        $region154: #{decoder_block.1} parent=151 // pred_check_branch
          %3347 = sbr.rel (%p3345) target = $region156
        $region155: #{decoder_block.1} parent=151 // pred_region
          %s3348 = sand.u32 %s515, 1
          %s3349 = scalar_lea.sflag [#allocation4], %s3348
          %s3350 = sand.u32 %s515, 1
          %s3351 = smul.addr %s3350, 8
          %s3352 = scalar_lea.vmem [#allocation19], %s3351
          %3353 = dma.done %s3349, 128
        $region156: #{decoder_block.1} parent=151 // pred_fallthru
          _
      $region152: #{decoder_block.1} parent=5 // pred_fallthru
        _
    $region6: #{decoder_block.1} parent=1 // loop_footer
      %s44 = sadd.s32 1, %s40
    $region7: #{decoder_block.1} parent=1 // loop_footer_branch
      %39 = sbr.rel target = $region3
    $region8: #{decoder_block.1} parent=1 // loop_exit
      _
    %3354 = vsyncpa [#allocation3], 1
    %s3355 = scalar_lea.sflag [#allocation3], 1
    %3356 = vsyncpa %s3355, 1
    %3357 = vsyncpa [#allocation6], 1
    %s3358 = scalar_lea.sflag [#allocation6], 1
    %3359 = vsyncpa %s3358, 1
    %3360 = vsyncpa [#allocation9], 1
    %3361 = vsyncpa [#allocation12], 1
    %3362 = vsyncpa [#allocation15], 1
    %3363 = vsyncpa [#allocation18], 1
    %3364 = vsyncpa [#allocation4], 1
    %s3365 = scalar_lea.sflag [#allocation4], 1
    %3366 = vsyncpa %s3365, 1

</llo_original>
